<compile_context>
chip_gen: v5e
topology: v5e:2x2
jax: 0.10.0
libtpu: 0.0.40
codegen_flags: <defaults>
</compile_context>

<pallas_src>
import functools
import math

import jax
import jax.numpy as jnp
from jax.experimental import pallas as pl
from jax.experimental.pallas import tpu as pltpu


def _round_up(x, m):
    return ((x + m - 1) // m) * m


def _cdiv(a, b):
    return -(-a // b)


def _cross_attn_kernel(tgt_ref, qpos_ref, mem_ref, kpos_ref,
                       wq_ref, wk_ref, wv_ref, wo_ref,
                       bq_ref, bk_ref, bv_ref, bo_ref,
                       gamma_ref, beta_ref,
                       out_ref,
                       q_scr, m_scr, l_scr, acc_scr,
                       *, nhead, head_dim_p, d_model, lk_valid,
                       mask_keys, eps, compute_dtype):
    ki = pl.program_id(2)
    nk = pl.num_programs(2)
    tq = tgt_ref.shape[1]
    tk = mem_ref.shape[1]
    Ep = nhead * head_dim_p

    # ---- init per (batch, q-tile): project Q once, reset online-softmax state.
    @pl.when(ki == 0)
    def _init():
        q_in = (tgt_ref[0] + qpos_ref[0]).astype(compute_dtype)          # (tq, Ep)
        # 1/sqrt(head_dim) is folded into wq/bq by the wrapper.
        q = jnp.dot(q_in, wq_ref[...],
                    preferred_element_type=jnp.float32) + bq_ref[...]    # (tq, Ep) f32
        q3 = jnp.swapaxes(q.reshape(tq, nhead, head_dim_p), 0, 1)        # (H, tq, hdp)
        q_scr[...] = q3.astype(compute_dtype)
        m_scr[...] = jnp.full(m_scr.shape, -jnp.inf, dtype=m_scr.dtype)
        l_scr[...] = jnp.zeros(l_scr.shape, dtype=l_scr.dtype)
        acc_scr[...] = jnp.zeros(acc_scr.shape, dtype=acc_scr.dtype)

    # ---- K/V projections for this key tile (all heads in one matmul each).
    mem = mem_ref[0]                                                     # (tk, Ep) bf16
    k_in = mem + kpos_ref[0]
    k = jnp.dot(k_in, wk_ref[...],
                preferred_element_type=jnp.float32) + bk_ref[...]
    v = jnp.dot(mem, wv_ref[...],
                preferred_element_type=jnp.float32) + bv_ref[...]
    k3 = jnp.swapaxes(k.reshape(tk, nhead, head_dim_p), 0, 1).astype(compute_dtype)
    v3 = jnp.swapaxes(v.reshape(tk, nhead, head_dim_p), 0, 1).astype(compute_dtype)

    # ---- scores for all heads in one batched matmul: (H, tq, tk), f32 accumulation.
    s = jnp.einsum("hqd,hkd->hqk", q_scr[...], k3,
                   preferred_element_type=jnp.float32)

    if mask_keys:
        # Lk was zero-padded up to a tile multiple in the wrapper: mask padded keys.
        kidx = ki * tk + jax.lax.broadcasted_iota(jnp.int32, s.shape, 2)
        s = jnp.where(kidx < lk_valid, s, -1e30)

    # ---- online-softmax update (flash-attention style).
    m_prev = m_scr[...]                                                  # (H, tq, 1)
    m_new = jnp.maximum(m_prev, jnp.max(s, axis=-1, keepdims=True))
    alpha = jnp.exp(m_prev - m_new)
    p = jnp.exp(s - m_new)
    l_scr[...] = alpha * l_scr[...] + jnp.sum(p, axis=-1, keepdims=True)
    acc_scr[...] = alpha * acc_scr[...] + jnp.einsum(
        "hqk,hkd->hqd", p.astype(compute_dtype), v3,
        preferred_element_type=jnp.float32)
    m_scr[...] = m_new

    # ---- finalize on last key tile: normalize, out-proj, residual, LayerNorm.
    @pl.when(ki == nk - 1)
    def _fin():
        attn = acc_scr[...] / l_scr[...]          # exact divide; runs once per q-tile
        attn2 = jnp.swapaxes(attn, 0, 1).reshape(tq, Ep)                 # (tq, Ep)
        o = jnp.dot(attn2.astype(compute_dtype), wo_ref[...],
                    preferred_element_type=jnp.float32) + bo_ref[...]
        x = tgt_ref[0] + o                                               # residual, f32
        # LayerNorm over the TRUE d_model (padded feature lanes are exactly zero).
        s1 = jnp.sum(x, axis=-1, keepdims=True)
        s2 = jnp.sum(x * x, axis=-1, keepdims=True)
        mu = s1 / d_model
        var = jnp.maximum(s2 / d_model - mu * mu, 0.0)
        y = (x - mu) * jax.lax.rsqrt(var + eps)
        out_ref[0] = (y * gamma_ref[...] + beta_ref[...]).astype(out_ref.dtype)


def _vmem_limit_bytes(tq, tk, Ep, nhead, hd_p, compute_dtype):
    """Generation-aware VMEM budget sized from the chosen tiles."""
    cb = jnp.dtype(compute_dtype).itemsize
    act = 2 * 2 * (tq * Ep * 4 + tk * Ep * cb)        # double-buffered activation tiles
    wgt = 2 * (4 * Ep * Ep * cb + 6 * Ep * 4)         # weights + bias/LN vectors
    out = 2 * tq * Ep * 4
    scr = nhead * tq * (hd_p * cb + hd_p * 4 + 2 * 128 * 4)
    est = act + wgt + out + scr
    try:
        cap = int(pltpu.get_tpu_info().vmem_capacity_bytes)
    except Exception:
        cap = 128 << 20
    if cap <= (64 << 20):
        # v7x-class (64 MiB/TC): leave headroom for compiler scratch / semaphores.
        ceiling = min(56 << 20, cap - (8 << 20))
    else:
        # v5e/v6e (128 MiB): allow >64 MiB so larger tk / deeper buffering can be used.
        ceiling = min(100 << 20, cap - (16 << 20))
    return int(min(ceiling, max(32 << 20, 2 * est)))


def cross_attention_layer(tgt, memory, query_pos, pos, params, *, nhead,
                          tq=None, tk=None, compute_dtype=jnp.bfloat16, eps=1e-5):
    """tgt/query_pos: (Lq, B, E); memory/pos: (Lk, B, E). Returns (Lq, B, E) float32."""
    Lq, B, E = tgt.shape
    Lk = memory.shape[0]
    assert E % nhead == 0
    head_dim = E // nhead

    # --- lane-dense per-head padding: Ep = nhead * hd_p multiple of 128 when cheap.
    hd_p = head_dim
    while (nhead * hd_p) % 128 != 0:
        hd_p += 1
    if nhead * hd_p > max(4 * E, 512):   # padding blow-up too large -> keep native E
        hd_p = head_dim
    Ep = nhead * hd_p

    # --- tiles: multiples of 8; q-tile covers Lq (single tile) up to 256.
    if tq is None:
        tq = _round_up(_cdiv(Lq, _cdiv(Lq, 256)), 8)
    else:
        tq = _round_up(tq, 8)
    if tk is None:
        tk = _round_up(_cdiv(Lk, _cdiv(Lk, 1024)), 8)
    else:
        tk = _round_up(tk, 8)
    Lq_p = _round_up(Lq, tq)
    Lk_p = _round_up(Lk, tk)
    mask_keys = (Lk_p != Lk)

    # --- activations: cast + zero-pad (seq & feature) + batch-first, all fused by XLA.
    def _prep(x, L_p, dtype):
        L = x.shape[0]
        x = x.astype(dtype)
        x = jnp.pad(x, ((0, L_p - L), (0, 0), (0, Ep - E)))
        return jnp.transpose(x, (1, 0, 2))

    tgt_b = _prep(tgt, Lq_p, jnp.float32)          # residual path stays f32
    qpos_b = _prep(query_pos, Lq_p, jnp.float32)
    mem_b = _prep(memory, Lk_p, compute_dtype)      # large streamed tensors -> bf16
    kpos_b = _prep(pos, Lk_p, compute_dtype)

    # --- weights: fold attention scale into Wq/bq; per-head pad head_dim -> hd_p.
    scale = 1.0 / math.sqrt(head_dim)

    def _pad_qkv_w(w_t):   # (E, E) -> (Ep, Ep); output cols per-head padded
        w3 = w_t.reshape(E, nhead, head_dim)
        w3 = jnp.pad(w3, ((0, Ep - E), (0, 0), (0, hd_p - head_dim)))
        return w3.reshape(Ep, Ep)

    def _pad_qkv_b(b):     # (1, E) -> (1, Ep); per-head padded
        b3 = b.reshape(nhead, head_dim)
        b3 = jnp.pad(b3, ((0, 0), (0, hd_p - head_dim)))
        return b3.reshape(1, Ep)

    def _pad_vec(b):       # (1, E) -> (1, Ep)
        return jnp.pad(b.reshape(1, E), ((0, 0), (0, Ep - E)))

    wq_t = _pad_qkv_w(params["wq_t"] * scale).astype(compute_dtype)
    wk_t = _pad_qkv_w(params["wk_t"]).astype(compute_dtype)
    wv_t = _pad_qkv_w(params["wv_t"]).astype(compute_dtype)
    wo3 = params["wo_t"].reshape(nhead, head_dim, E)     # rows are head-ordered features
    wo3 = jnp.pad(wo3, ((0, 0), (0, hd_p - head_dim), (0, Ep - E)))
    wo_t = wo3.reshape(Ep, Ep).astype(compute_dtype)

    bq = _pad_qkv_b(params["bq"] * scale).astype(jnp.float32)
    bk = _pad_qkv_b(params["bk"]).astype(jnp.float32)
    bv = _pad_qkv_b(params["bv"]).astype(jnp.float32)
    bo = _pad_vec(params["bo"]).astype(jnp.float32)
    gamma = _pad_vec(params["gamma"]).astype(jnp.float32)
    beta = _pad_vec(params["beta"]).astype(jnp.float32)

    grid = (B, Lq_p // tq, Lk_p // tk)

    q_block = pl.BlockSpec((1, tq, Ep), lambda b, qi, ki: (b, qi, 0))
    k_block = pl.BlockSpec((1, tk, Ep), lambda b, qi, ki: (b, ki, 0))
    w_block = pl.BlockSpec((Ep, Ep), lambda b, qi, ki: (0, 0))
    v_block = pl.BlockSpec((1, Ep), lambda b, qi, ki: (0, 0))

    kernel = functools.partial(
        _cross_attn_kernel, nhead=nhead, head_dim_p=hd_p, d_model=float(E),
        lk_valid=Lk, mask_keys=mask_keys, eps=eps, compute_dtype=compute_dtype)

    out_b = pl.pallas_call(
        kernel,
        out_shape=jax.ShapeDtypeStruct((B, Lq_p, Ep), jnp.float32),
        grid=grid,
        in_specs=[q_block, q_block, k_block, k_block,
                  w_block, w_block, w_block, w_block,
                  v_block, v_block, v_block, v_block,
                  v_block, v_block],
        out_specs=q_block,
        scratch_shapes=[
            pltpu.VMEM((nhead, tq, hd_p), compute_dtype),  # head-major Q
            pltpu.VMEM((nhead, tq, 1), jnp.float32),       # running max
            pltpu.VMEM((nhead, tq, 1), jnp.float32),       # running sum
            pltpu.VMEM((nhead, tq, hd_p), jnp.float32),    # output accumulator
        ],
        compiler_params=pltpu.CompilerParams(
            dimension_semantics=("parallel", "parallel", "arbitrary"),
            vmem_limit_bytes=_vmem_limit_bytes(tq, tk, Ep, nhead, hd_p, compute_dtype),
        ),
    )(tgt_b, qpos_b, mem_b, kpos_b,
      wq_t, wk_t, wv_t, wo_t,
      bq, bk, bv, bo,
      gamma, beta)

    out = out_b[:, :Lq, :E]                      # drop seq / feature padding
    return jnp.transpose(out, (1, 0, 2))         # back to (Lq, B, E)


def _xavier_uniform(key, fan_in, fan_out, shape):
    limit = math.sqrt(6.0 / (fan_in + fan_out))
    return jax.random.uniform(key, shape, jnp.float32, -limit, limit)


def init_params(key, d_model, nhead):
    E = d_model
    k = jax.random.split(key, 4)
    # torch MHA: in_proj_weight (3E,E) xavier_uniform, in_proj_bias zeros,
    # out_proj.weight xavier_uniform, out_proj.bias zeros, LayerNorm gamma=1 beta=0.
    # Weights stored pre-transposed so the kernel computes y = x @ W_t + b.
    wq = _xavier_uniform(k[0], E, 3 * E, (E, E))
    wk = _xavier_uniform(k[1], E, 3 * E, (E, E))
    wv = _xavier_uniform(k[2], E, 3 * E, (E, E))
    wo = _xavier_uniform(k[3], E, E, (E, E))
    return {
        "wq_t": wq.T, "wk_t": wk.T, "wv_t": wv.T, "wo_t": wo.T,
        "bq": jnp.zeros((1, E), jnp.float32),
        "bk": jnp.zeros((1, E), jnp.float32),
        "bv": jnp.zeros((1, E), jnp.float32),
        "bo": jnp.zeros((1, E), jnp.float32),
        "gamma": jnp.ones((1, E), jnp.float32),
        "beta": jnp.zeros((1, E), jnp.float32),
    }


def _reference(tgt, memory, query_pos, pos, params, *, nhead):
    """Pure-JAX f32 reference of forward_post (dropout=0)."""
    Lq, B, E = tgt.shape
    Lk = memory.shape[0]
    hd = E // nhead
    q_in = jnp.transpose(tgt + query_pos, (1, 0, 2))   # (B,Lq,E)
    k_in = jnp.transpose(memory + pos, (1, 0, 2))      # (B,Lk,E)
    v_in = jnp.transpose(memory, (1, 0, 2))
    q = q_in @ params["wq_t"] + params["bq"]
    k = k_in @ params["wk_t"] + params["bk"]
    v = v_in @ params["wv_t"] + params["bv"]
    q = q.reshape(B, Lq, nhead, hd).transpose(0, 2, 1, 3) / math.sqrt(hd)
    k = k.reshape(B, Lk, nhead, hd).transpose(0, 2, 1, 3)
    v = v.reshape(B, Lk, nhead, hd).transpose(0, 2, 1, 3)
    s = jnp.einsum("bhqd,bhkd->bhqk", q, k)
    p = jax.nn.softmax(s, axis=-1)
    o = jnp.einsum("bhqk,bhkd->bhqd", p, v)
    o = o.transpose(0, 2, 1, 3).reshape(B, Lq, E)
    o = o @ params["wo_t"] + params["bo"]
    x = jnp.transpose(tgt, (1, 0, 2)) + o
    mu = jnp.mean(x, -1, keepdims=True)
    var = jnp.mean((x - mu) ** 2, -1, keepdims=True)
    y = (x - mu) / jnp.sqrt(var + 1e-5) * params["gamma"] + params["beta"]
    return jnp.transpose(y, (1, 0, 2))


if __name__ == "__main__":
    D_MODEL, NHEAD = 32, 4
    B, LQ, LK = 2, 10, 60   # non-multiples: exercises seq padding + key masking

    key = jax.random.PRNGKey(0)
    kp, k1, k2, k3, k4 = jax.random.split(key, 5)
    params = init_params(kp, D_MODEL, NHEAD)

    tgt = jax.random.normal(k1, (LQ, B, D_MODEL), jnp.float32)
    memory = jax.random.normal(k2, (LK, B, D_MODEL), jnp.float32)
    query_pos = jax.random.normal(k3, (LQ, B, D_MODEL), jnp.float32)
    pos = jax.random.normal(k4, (LK, B, D_MODEL), jnp.float32)

    ref = _reference(tgt, memory, query_pos, pos, params, nhead=NHEAD)

    # 1) tk=16 -> 4 key tiles, exercising the online-softmax (flash) accumulation
    #    path and the padded-key mask (60 -> 64).
    out = cross_attention_layer(tgt, memory, query_pos, pos, params,
                                nhead=NHEAD, tk=16)
    out = jax.block_until_ready(out)
    assert out.shape == (LQ, B, D_MODEL)
    # bf16 MXU inputs (f32 accumulation) -> loosened tolerance vs the f32 reference.
    assert jnp.allclose(out, ref, atol=5e-2, rtol=5e-2), "mismatch vs reference (tiled)"

    # 2) default tiles -> single key tile (still masked: 60 -> 64).
    out2 = cross_attention_layer(tgt, memory, query_pos, pos, params, nhead=NHEAD)
    out2 = jax.block_until_ready(out2)
    assert jnp.allclose(out2, ref, atol=5e-2, rtol=5e-2), "mismatch vs reference (default)"

    print("KERNEL_OK")
</pallas_src>

<mosaic_0001>
module attributes {stable_mosaic.version = 11 : i64} {
  func.func @_cross_attn_kernel(%arg0: i32, %arg1: i32, %arg2: i32, %arg3: memref<1x16x128xf32, #tpu.memory_space<vmem>>, %arg4: memref<1x16x128xf32, #tpu.memory_space<vmem>>, %arg5: memref<1x16x128xbf16, #tpu.memory_space<vmem>>, %arg6: memref<1x16x128xbf16, #tpu.memory_space<vmem>>, %arg7: memref<128x128xbf16, #tpu.memory_space<vmem>>, %arg8: memref<128x128xbf16, #tpu.memory_space<vmem>>, %arg9: memref<128x128xbf16, #tpu.memory_space<vmem>>, %arg10: memref<128x128xbf16, #tpu.memory_space<vmem>>, %arg11: memref<1x128xf32, #tpu.memory_space<vmem>>, %arg12: memref<1x128xf32, #tpu.memory_space<vmem>>, %arg13: memref<1x128xf32, #tpu.memory_space<vmem>>, %arg14: memref<1x128xf32, #tpu.memory_space<vmem>>, %arg15: memref<1x128xf32, #tpu.memory_space<vmem>>, %arg16: memref<1x128xf32, #tpu.memory_space<vmem>>, %arg17: memref<1x16x128xf32, #tpu.memory_space<vmem>>, %arg18: memref<4x16x32xbf16, #tpu.memory_space<vmem>>, %arg19: memref<4x16x1xf32, #tpu.memory_space<vmem>>, %arg20: memref<4x16x1xf32, #tpu.memory_space<vmem>>, %arg21: memref<4x16x32xf32, #tpu.memory_space<vmem>>) attributes {dimension_semantics = [#tpu.dimension_semantics<parallel>, #tpu.dimension_semantics<parallel>, #tpu.dimension_semantics<arbitrary>], iteration_bounds = array<i64: 2, 1, 4>, scalar_prefetch = 0 : i64, scratch_operands = 4 : i64, tpu.core_type = #tpu.core_type<tc>, window_params = [{transform_indices = @transform_0, window_bounds = array<i64: 1, 16, 128>}, {transform_indices = @transform_1, window_bounds = array<i64: 1, 16, 128>}, {transform_indices = @transform_2, window_bounds = array<i64: 1, 16, 128>}, {transform_indices = @transform_3, window_bounds = array<i64: 1, 16, 128>}, {pipeline_mode = #tpu.pipeline_mode<synchronous>, transform_indices = @transform_4, window_bounds = array<i64: 128, 128>}, {pipeline_mode = #tpu.pipeline_mode<synchronous>, transform_indices = @transform_5, window_bounds = array<i64: 128, 128>}, {pipeline_mode = #tpu.pipeline_mode<synchronous>, transform_indices = @transform_6, window_bounds = array<i64: 128, 128>}, {pipeline_mode = #tpu.pipeline_mode<synchronous>, transform_indices = @transform_7, window_bounds = array<i64: 128, 128>}, {pipeline_mode = #tpu.pipeline_mode<synchronous>, transform_indices = @transform_8, window_bounds = array<i64: 1, 128>}, {pipeline_mode = #tpu.pipeline_mode<synchronous>, transform_indices = @transform_9, window_bounds = array<i64: 1, 128>}, {pipeline_mode = #tpu.pipeline_mode<synchronous>, transform_indices = @transform_10, window_bounds = array<i64: 1, 128>}, {pipeline_mode = #tpu.pipeline_mode<synchronous>, transform_indices = @transform_11, window_bounds = array<i64: 1, 128>}, {pipeline_mode = #tpu.pipeline_mode<synchronous>, transform_indices = @transform_12, window_bounds = array<i64: 1, 128>}, {pipeline_mode = #tpu.pipeline_mode<synchronous>, transform_indices = @transform_13, window_bounds = array<i64: 1, 128>}, {transform_indices = @transform_14, window_bounds = array<i64: 1, 16, 128>}]} {
    %c0_i32 = arith.constant 0 : i32
    %0 = arith.cmpi eq, %arg2, %c0_i32 : i32
    %1 = arith.extui %0 : i1 to i32
    %c0_i32_0 = arith.constant 0 : i32
    %2 = arith.cmpi ne, %1, %c0_i32_0 : i32
    scf.if %2 {
      %c0_42 = arith.constant 0 : index
      %c0_43 = arith.constant 0 : index
      %c0_44 = arith.constant 0 : index
      %60 = vector.load %arg3[%c0_42, %c0_43, %c0_44] : memref<1x16x128xf32, #tpu.memory_space<vmem>>, vector<1x16x128xf32>
      %61 = vector.shape_cast %60 : vector<1x16x128xf32> to vector<16x128xf32>
      %c0_45 = arith.constant 0 : index
      %c0_46 = arith.constant 0 : index
      %c0_47 = arith.constant 0 : index
      %62 = vector.load %arg4[%c0_45, %c0_46, %c0_47] : memref<1x16x128xf32, #tpu.memory_space<vmem>>, vector<1x16x128xf32>
      %63 = vector.shape_cast %62 : vector<1x16x128xf32> to vector<16x128xf32>
      %64 = arith.addf %61, %63 : vector<16x128xf32>
      %65 = arith.truncf %64 : vector<16x128xf32> to vector<16x128xbf16>
      %c0_48 = arith.constant 0 : index
      %c0_49 = arith.constant 0 : index
      %66 = vector.load %arg7[%c0_48, %c0_49] : memref<128x128xbf16, #tpu.memory_space<vmem>>, vector<128x128xbf16>
      %cst_50 = arith.constant dense<0.000000e+00> : vector<16x128xf32>
      %67 = tpu.matmul %65, %66, %cst_50 {dimension_numbers = #tpu.dot_dimension_numbers<[1], [0], [0], [1], [0, 0, 1, 1], [], []>} : vector<16x128xbf16>, vector<128x128xbf16>, vector<16x128xf32> -> vector<16x128xf32>
      %c0_51 = arith.constant 0 : index
      %c0_52 = arith.constant 0 : index
      %68 = vector.load %arg11[%c0_51, %c0_52] : memref<1x128xf32, #tpu.memory_space<vmem>>, vector<1x128xf32>
      %69 = vector.broadcast %68 : vector<1x128xf32> to vector<16x128xf32>
      %70 = arith.addf %67, %69 : vector<16x128xf32>
      %71 = vector.shape_cast %70 : vector<16x128xf32> to vector<16x4x32xf32>
      %72 = tpu.transpose %71, [1, 0, 2] : vector<16x4x32xf32> -> vector<4x16x32xf32>
      %73 = arith.truncf %72 : vector<4x16x32xf32> to vector<4x16x32xbf16>
      %c0_53 = arith.constant 0 : index
      %c0_54 = arith.constant 0 : index
      %c0_55 = arith.constant 0 : index
      %74 = vector.load %arg18[%c0_53, %c0_54, %c0_55] : memref<4x16x32xbf16, #tpu.memory_space<vmem>>, vector<4x16x32xbf16>
      tpu.vector_store %arg18[%c0_53, %c0_54, %c0_55], %73 {strides = array<i32>} : memref<4x16x32xbf16, #tpu.memory_space<vmem>>, vector<4x16x32xbf16>,
      %cst_56 = arith.constant 0xFF800000 : f32
      %75 = vector.broadcast %cst_56 : f32 to vector<4x16x1xf32>
      %c0_57 = arith.constant 0 : index
      %c0_58 = arith.constant 0 : index
      %c0_59 = arith.constant 0 : index
      %76 = vector.load %arg19[%c0_57, %c0_58, %c0_59] : memref<4x16x1xf32, #tpu.memory_space<vmem>>, vector<4x16x1xf32>
      tpu.vector_store %arg19[%c0_57, %c0_58, %c0_59], %75 {strides = array<i32>} : memref<4x16x1xf32, #tpu.memory_space<vmem>>, vector<4x16x1xf32>,
      %cst_60 = arith.constant 0.000000e+00 : f32
      %77 = vector.broadcast %cst_60 : f32 to vector<4x16x1xf32>
      %c0_61 = arith.constant 0 : index
      %c0_62 = arith.constant 0 : index
      %c0_63 = arith.constant 0 : index
      %78 = vector.load %arg20[%c0_61, %c0_62, %c0_63] : memref<4x16x1xf32, #tpu.memory_space<vmem>>, vector<4x16x1xf32>
      tpu.vector_store %arg20[%c0_61, %c0_62, %c0_63], %77 {strides = array<i32>} : memref<4x16x1xf32, #tpu.memory_space<vmem>>, vector<4x16x1xf32>,
      %cst_64 = arith.constant 0.000000e+00 : f32
      %79 = vector.broadcast %cst_64 : f32 to vector<4x16x32xf32>
      %c0_65 = arith.constant 0 : index
      %c0_66 = arith.constant 0 : index
      %c0_67 = arith.constant 0 : index
      %80 = vector.load %arg21[%c0_65, %c0_66, %c0_67] : memref<4x16x32xf32, #tpu.memory_space<vmem>>, vector<4x16x32xf32>
      tpu.vector_store %arg21[%c0_65, %c0_66, %c0_67], %79 {strides = array<i32>} : memref<4x16x32xf32, #tpu.memory_space<vmem>>, vector<4x16x32xf32>,
    } else {
    }
    %c0 = arith.constant 0 : index
    %c0_1 = arith.constant 0 : index
    %c0_2 = arith.constant 0 : index
    %3 = vector.load %arg5[%c0, %c0_1, %c0_2] : memref<1x16x128xbf16, #tpu.memory_space<vmem>>, vector<1x16x128xbf16>
    %4 = vector.shape_cast %3 : vector<1x16x128xbf16> to vector<16x128xbf16>
    %c0_3 = arith.constant 0 : index
    %c0_4 = arith.constant 0 : index
    %c0_5 = arith.constant 0 : index
    %5 = vector.load %arg6[%c0_3, %c0_4, %c0_5] : memref<1x16x128xbf16, #tpu.memory_space<vmem>>, vector<1x16x128xbf16>
    %6 = vector.shape_cast %5 : vector<1x16x128xbf16> to vector<16x128xbf16>
    %7 = arith.addf %4, %6 : vector<16x128xbf16>
    %c0_6 = arith.constant 0 : index
    %c0_7 = arith.constant 0 : index
    %8 = vector.load %arg8[%c0_6, %c0_7] : memref<128x128xbf16, #tpu.memory_space<vmem>>, vector<128x128xbf16>
    %cst = arith.constant dense<0.000000e+00> : vector<16x128xf32>
    %9 = tpu.matmul %7, %8, %cst {dimension_numbers = #tpu.dot_dimension_numbers<[1], [0], [0], [1], [0, 0, 1, 1], [], []>} : vector<16x128xbf16>, vector<128x128xbf16>, vector<16x128xf32> -> vector<16x128xf32>
    %c0_8 = arith.constant 0 : index
    %c0_9 = arith.constant 0 : index
    %10 = vector.load %arg12[%c0_8, %c0_9] : memref<1x128xf32, #tpu.memory_space<vmem>>, vector<1x128xf32>
    %11 = vector.broadcast %10 : vector<1x128xf32> to vector<16x128xf32>
    %12 = arith.addf %9, %11 : vector<16x128xf32>
    %c0_10 = arith.constant 0 : index
    %c0_11 = arith.constant 0 : index
    %13 = vector.load %arg9[%c0_10, %c0_11] : memref<128x128xbf16, #tpu.memory_space<vmem>>, vector<128x128xbf16>
    %cst_12 = arith.constant dense<0.000000e+00> : vector<16x128xf32>
    %14 = tpu.matmul %4, %13, %cst_12 {dimension_numbers = #tpu.dot_dimension_numbers<[1], [0], [0], [1], [0, 0, 1, 1], [], []>} : vector<16x128xbf16>, vector<128x128xbf16>, vector<16x128xf32> -> vector<16x128xf32>
    %c0_13 = arith.constant 0 : index
    %c0_14 = arith.constant 0 : index
    %15 = vector.load %arg13[%c0_13, %c0_14] : memref<1x128xf32, #tpu.memory_space<vmem>>, vector<1x128xf32>
    %16 = vector.broadcast %15 : vector<1x128xf32> to vector<16x128xf32>
    %17 = arith.addf %14, %16 : vector<16x128xf32>
    %18 = vector.shape_cast %12 : vector<16x128xf32> to vector<16x4x32xf32>
    %19 = tpu.transpose %18, [1, 0, 2] : vector<16x4x32xf32> -> vector<4x16x32xf32>
    %20 = arith.truncf %19 : vector<4x16x32xf32> to vector<4x16x32xbf16>
    %21 = vector.shape_cast %17 : vector<16x128xf32> to vector<16x4x32xf32>
    %22 = tpu.transpose %21, [1, 0, 2] : vector<16x4x32xf32> -> vector<4x16x32xf32>
    %23 = arith.truncf %22 : vector<4x16x32xf32> to vector<4x16x32xbf16>
    %c0_15 = arith.constant 0 : index
    %c0_16 = arith.constant 0 : index
    %c0_17 = arith.constant 0 : index
    %24 = vector.load %arg18[%c0_15, %c0_16, %c0_17] : memref<4x16x32xbf16, #tpu.memory_space<vmem>>, vector<4x16x32xbf16>
    "tpu.trace_start"() <{level = 10 : i32, message = "hqd,hkd->hqk"}> : () -> ()
    %cst_18 = arith.constant dense<0.000000e+00> : vector<4x16x16xf32>
    %25 = tpu.matmul %24, %20, %cst_18 {dimension_numbers = #tpu.dot_dimension_numbers<[2], [2], [1], [1], [0, 0, 0, 1, 1, 1], [0], [0]>} : vector<4x16x32xbf16>, vector<4x16x32xbf16>, vector<4x16x16xf32> -> vector<4x16x16xf32>
    "tpu.trace_stop"() : () -> ()
    %c16_i32 = arith.constant 16 : i32
    %26 = arith.muli %arg2, %c16_i32 : i32
    %27 = tpu.iota {dimensions = array<i32: 2>} : vector<4x16x16xi32>
    %28 = vector.broadcast %26 : i32 to vector<4x16x16xi32>
    %29 = arith.addi %28, %27 : vector<4x16x16xi32>
    %c60_i32 = arith.constant 60 : i32
    %30 = vector.broadcast %c60_i32 : i32 to vector<4x16x16xi32>
    %31 = arith.cmpi slt, %29, %30 : vector<4x16x16xi32>
    %cst_19 = arith.constant -1.000000e+30 : f32
    %32 = vector.broadcast %cst_19 : f32 to vector<4x16x16xf32>
    %33 = arith.select %31, %25, %32 : vector<4x16x16xi1>, vector<4x16x16xf32>
    %c0_20 = arith.constant 0 : index
    %c0_21 = arith.constant 0 : index
    %c0_22 = arith.constant 0 : index
    %34 = vector.load %arg19[%c0_20, %c0_21, %c0_22] : memref<4x16x1xf32, #tpu.memory_space<vmem>>, vector<4x16x1xf32>
    %cst_23 = arith.constant dense<0xFF800000> : vector<4x16xf32>
    %35 = vector.multi_reduction <maximumf>, %33, %cst_23 [2] : vector<4x16x16xf32> to vector<4x16xf32>
    %36 = vector.shape_cast %35 : vector<4x16xf32> to vector<4x16x1xf32>
    %37 = arith.maximumf %34, %36 : vector<4x16x1xf32>
    %38 = arith.subf %34, %37 : vector<4x16x1xf32>
    %39 = math.exp %38 : vector<4x16x1xf32>
    %40 = vector.broadcast %37 : vector<4x16x1xf32> to vector<4x16x16xf32>
    %41 = arith.subf %33, %40 : vector<4x16x16xf32>
    %42 = math.exp %41 : vector<4x16x16xf32>
    %c0_24 = arith.constant 0 : index
    %c0_25 = arith.constant 0 : index
    %c0_26 = arith.constant 0 : index
    %43 = vector.load %arg20[%c0_24, %c0_25, %c0_26] : memref<4x16x1xf32, #tpu.memory_space<vmem>>, vector<4x16x1xf32>
    %44 = arith.mulf %39, %43 : vector<4x16x1xf32>
    %cst_27 = arith.constant dense<0.000000e+00> : vector<4x16xf32>
    %45 = vector.multi_reduction <add>, %42, %cst_27 [2] : vector<4x16x16xf32> to vector<4x16xf32>
    %46 = vector.shape_cast %45 : vector<4x16xf32> to vector<4x16x1xf32>
    %47 = arith.addf %44, %46 : vector<4x16x1xf32>
    %c0_28 = arith.constant 0 : index
    %c0_29 = arith.constant 0 : index
    %c0_30 = arith.constant 0 : index
    %48 = vector.load %arg20[%c0_28, %c0_29, %c0_30] : memref<4x16x1xf32, #tpu.memory_space<vmem>>, vector<4x16x1xf32>
    tpu.vector_store %arg20[%c0_28, %c0_29, %c0_30], %47 {strides = array<i32>} : memref<4x16x1xf32, #tpu.memory_space<vmem>>, vector<4x16x1xf32>,
    %c0_31 = arith.constant 0 : index
    %c0_32 = arith.constant 0 : index
    %c0_33 = arith.constant 0 : index
    %49 = vector.load %arg21[%c0_31, %c0_32, %c0_33] : memref<4x16x32xf32, #tpu.memory_space<vmem>>, vector<4x16x32xf32>
    %50 = vector.broadcast %39 : vector<4x16x1xf32> to vector<4x16x32xf32>
    %51 = arith.mulf %50, %49 : vector<4x16x32xf32>
    %52 = arith.truncf %42 : vector<4x16x16xf32> to vector<4x16x16xbf16>
    "tpu.trace_start"() <{level = 10 : i32, message = "hqk,hkd->hqd"}> : () -> ()
    %cst_34 = arith.constant dense<0.000000e+00> : vector<4x16x32xf32>
    %53 = tpu.matmul %52, %23, %cst_34 {dimension_numbers = #tpu.dot_dimension_numbers<[2], [1], [1], [2], [0, 0, 0, 1, 1, 2], [0], [0]>} : vector<4x16x16xbf16>, vector<4x16x32xbf16>, vector<4x16x32xf32> -> vector<4x16x32xf32>
    "tpu.trace_stop"() : () -> ()
    %54 = arith.addf %51, %53 : vector<4x16x32xf32>
    %c0_35 = arith.constant 0 : index
    %c0_36 = arith.constant 0 : index
    %c0_37 = arith.constant 0 : index
    %55 = vector.load %arg21[%c0_35, %c0_36, %c0_37] : memref<4x16x32xf32, #tpu.memory_space<vmem>>, vector<4x16x32xf32>
    tpu.vector_store %arg21[%c0_35, %c0_36, %c0_37], %54 {strides = array<i32>} : memref<4x16x32xf32, #tpu.memory_space<vmem>>, vector<4x16x32xf32>,
    %c0_38 = arith.constant 0 : index
    %c0_39 = arith.constant 0 : index
    %c0_40 = arith.constant 0 : index
    %56 = vector.load %arg19[%c0_38, %c0_39, %c0_40] : memref<4x16x1xf32, #tpu.memory_space<vmem>>, vector<4x16x1xf32>
    tpu.vector_store %arg19[%c0_38, %c0_39, %c0_40], %37 {strides = array<i32>} : memref<4x16x1xf32, #tpu.memory_space<vmem>>, vector<4x16x1xf32>,
    %c3_i32 = arith.constant 3 : i32
    %57 = arith.cmpi eq, %arg2, %c3_i32 : i32
    %58 = arith.extui %57 : i1 to i32
    %c0_i32_41 = arith.constant 0 : i32
    %59 = arith.cmpi ne, %58, %c0_i32_41 : i32
    scf.if %59 {
      %c0_42 = arith.constant 0 : index
      %c0_43 = arith.constant 0 : index
      %c0_44 = arith.constant 0 : index
      %60 = vector.load %arg21[%c0_42, %c0_43, %c0_44] : memref<4x16x32xf32, #tpu.memory_space<vmem>>, vector<4x16x32xf32>
      %c0_45 = arith.constant 0 : index
      %c0_46 = arith.constant 0 : index
      %c0_47 = arith.constant 0 : index
      %61 = vector.load %arg20[%c0_45, %c0_46, %c0_47] : memref<4x16x1xf32, #tpu.memory_space<vmem>>, vector<4x16x1xf32>
      %62 = vector.broadcast %61 : vector<4x16x1xf32> to vector<4x16x32xf32>
      %63 = arith.divf %60, %62 : vector<4x16x32xf32>
      %64 = tpu.transpose %63, [1, 0, 2] : vector<4x16x32xf32> -> vector<16x4x32xf32>
      %65 = vector.shape_cast %64 : vector<16x4x32xf32> to vector<16x128xf32>
      %66 = arith.truncf %65 : vector<16x128xf32> to vector<16x128xbf16>
      %c0_48 = arith.constant 0 : index
      %c0_49 = arith.constant 0 : index
      %67 = vector.load %arg10[%c0_48, %c0_49] : memref<128x128xbf16, #tpu.memory_space<vmem>>, vector<128x128xbf16>
      %cst_50 = arith.constant dense<0.000000e+00> : vector<16x128xf32>
      %68 = tpu.matmul %66, %67, %cst_50 {dimension_numbers = #tpu.dot_dimension_numbers<[1], [0], [0], [1], [0, 0, 1, 1], [], []>} : vector<16x128xbf16>, vector<128x128xbf16>, vector<16x128xf32> -> vector<16x128xf32>
      %c0_51 = arith.constant 0 : index
      %c0_52 = arith.constant 0 : index
      %69 = vector.load %arg14[%c0_51, %c0_52] : memref<1x128xf32, #tpu.memory_space<vmem>>, vector<1x128xf32>
      %70 = vector.broadcast %69 : vector<1x128xf32> to vector<16x128xf32>
      %71 = arith.addf %68, %70 : vector<16x128xf32>
      %c0_53 = arith.constant 0 : index
      %c0_54 = arith.constant 0 : index
      %c0_55 = arith.constant 0 : index
      %72 = vector.load %arg3[%c0_53, %c0_54, %c0_55] : memref<1x16x128xf32, #tpu.memory_space<vmem>>, vector<1x16x128xf32>
      %73 = vector.shape_cast %72 : vector<1x16x128xf32> to vector<16x128xf32>
      %74 = arith.addf %73, %71 : vector<16x128xf32>
      %cst_56 = arith.constant dense<0.000000e+00> : vector<16xf32>
      %75 = vector.multi_reduction <add>, %74, %cst_56 [1] : vector<16x128xf32> to vector<16xf32>
      %76 = vector.shape_cast %75 : vector<16xf32> to vector<16x1xf32>
      %77 = arith.mulf %74, %74 : vector<16x128xf32>
      %cst_57 = arith.constant dense<0.000000e+00> : vector<16xf32>
      %78 = vector.multi_reduction <add>, %77, %cst_57 [1] : vector<16x128xf32> to vector<16xf32>
      %79 = vector.shape_cast %78 : vector<16xf32> to vector<16x1xf32>
      %cst_58 = arith.constant 3.200000e+01 : f32
      %80 = vector.broadcast %cst_58 : f32 to vector<16x1xf32>
      %81 = arith.divf %76, %80 : vector<16x1xf32>
      %cst_59 = arith.constant 3.200000e+01 : f32
      %82 = vector.broadcast %cst_59 : f32 to vector<16x1xf32>
      %83 = arith.divf %79, %82 : vector<16x1xf32>
      %84 = arith.mulf %81, %81 : vector<16x1xf32>
      %85 = arith.subf %83, %84 : vector<16x1xf32>
      %cst_60 = arith.constant 0.000000e+00 : f32
      %86 = vector.broadcast %cst_60 : f32 to vector<16x1xf32>
      %87 = arith.maximumf %85, %86 : vector<16x1xf32>
      %88 = vector.broadcast %81 : vector<16x1xf32> to vector<16x128xf32>
      %89 = arith.subf %74, %88 : vector<16x128xf32>
      %cst_61 = arith.constant 9.99999974E-6 : f32
      %90 = vector.broadcast %cst_61 : f32 to vector<16x1xf32>
      %91 = arith.addf %87, %90 : vector<16x1xf32>
      %92 = math.rsqrt %91 : vector<16x1xf32>
      %93 = vector.broadcast %92 : vector<16x1xf32> to vector<16x128xf32>
      %94 = arith.mulf %89, %93 : vector<16x128xf32>
      %c0_62 = arith.constant 0 : index
      %c0_63 = arith.constant 0 : index
      %95 = vector.load %arg15[%c0_62, %c0_63] : memref<1x128xf32, #tpu.memory_space<vmem>>, vector<1x128xf32>
      %96 = vector.broadcast %95 : vector<1x128xf32> to vector<16x128xf32>
      %97 = arith.mulf %94, %96 : vector<16x128xf32>
      %c0_64 = arith.constant 0 : index
      %c0_65 = arith.constant 0 : index
      %98 = vector.load %arg16[%c0_64, %c0_65] : memref<1x128xf32, #tpu.memory_space<vmem>>, vector<1x128xf32>
      %99 = vector.broadcast %98 : vector<1x128xf32> to vector<16x128xf32>
      %100 = arith.addf %97, %99 : vector<16x128xf32>
      %c0_66 = arith.constant 0 : index
      %c0_67 = arith.constant 0 : index
      %c0_68 = arith.constant 0 : index
      %101 = vector.load %arg17[%c0_66, %c0_67, %c0_68] : memref<1x16x128xf32, #tpu.memory_space<vmem>>, vector<1x16x128xf32>
      %102 = vector.shape_cast %101 : vector<1x16x128xf32> to vector<16x128xf32>
      %103 = vector.shape_cast %100 : vector<16x128xf32> to vector<1x16x128xf32>
      tpu.vector_store %arg17[%c0_66, %c0_67, %c0_68], %103 {strides = array<i32>} : memref<1x16x128xf32, #tpu.memory_space<vmem>>, vector<1x16x128xf32>,
    } else {
    }
    return
  }
  func.func @transform_0(%arg0: i32, %arg1: i32, %arg2: i32) -> (i32, i32, i32) {
    %c0_i32 = arith.constant 0 : i32
    %c0_i32_0 = arith.constant 0 : i32
    return %arg0, %arg1, %c0_i32 : i32, i32, i32
  }
  func.func @transform_1(%arg0: i32, %arg1: i32, %arg2: i32) -> (i32, i32, i32) {
    %c0_i32 = arith.constant 0 : i32
    %c0_i32_0 = arith.constant 0 : i32
    return %arg0, %arg1, %c0_i32 : i32, i32, i32
  }
  func.func @transform_2(%arg0: i32, %arg1: i32, %arg2: i32) -> (i32, i32, i32) {
    %c0_i32 = arith.constant 0 : i32
    %c0_i32_0 = arith.constant 0 : i32
    return %arg0, %arg2, %c0_i32 : i32, i32, i32
  }
  func.func @transform_3(%arg0: i32, %arg1: i32, %arg2: i32) -> (i32, i32, i32) {
    %c0_i32 = arith.constant 0 : i32
    %c0_i32_0 = arith.constant 0 : i32
    return %arg0, %arg2, %c0_i32 : i32, i32, i32
  }
  func.func @transform_4(%arg0: i32, %arg1: i32, %arg2: i32) -> (i32, i32) {
    %c0_i32 = arith.constant 0 : i32
    %c0_i32_0 = arith.constant 0 : i32
    %c0_i32_1 = arith.constant 0 : i32
    return %c0_i32, %c0_i32_0 : i32, i32
  }
  func.func @transform_5(%arg0: i32, %arg1: i32, %arg2: i32) -> (i32, i32) {
    %c0_i32 = arith.constant 0 : i32
    %c0_i32_0 = arith.constant 0 : i32
    %c0_i32_1 = arith.constant 0 : i32
    return %c0_i32, %c0_i32_0 : i32, i32
  }
  func.func @transform_6(%arg0: i32, %arg1: i32, %arg2: i32) -> (i32, i32) {
    %c0_i32 = arith.constant 0 : i32
    %c0_i32_0 = arith.constant 0 : i32
    %c0_i32_1 = arith.constant 0 : i32
    return %c0_i32, %c0_i32_0 : i32, i32
  }
  func.func @transform_7(%arg0: i32, %arg1: i32, %arg2: i32) -> (i32, i32) {
    %c0_i32 = arith.constant 0 : i32
    %c0_i32_0 = arith.constant 0 : i32
    %c0_i32_1 = arith.constant 0 : i32
    return %c0_i32, %c0_i32_0 : i32, i32
  }
  func.func @transform_8(%arg0: i32, %arg1: i32, %arg2: i32) -> (i32, i32) {
    %c0_i32 = arith.constant 0 : i32
    %c0_i32_0 = arith.constant 0 : i32
    %c0_i32_1 = arith.constant 0 : i32
    return %c0_i32, %c0_i32_0 : i32, i32
  }
  func.func @transform_9(%arg0: i32, %arg1: i32, %arg2: i32) -> (i32, i32) {
    %c0_i32 = arith.constant 0 : i32
    %c0_i32_0 = arith.constant 0 : i32
    %c0_i32_1 = arith.constant 0 : i32
    return %c0_i32, %c0_i32_0 : i32, i32
  }
  func.func @transform_10(%arg0: i32, %arg1: i32, %arg2: i32) -> (i32, i32) {
    %c0_i32 = arith.constant 0 : i32
    %c0_i32_0 = arith.constant 0 : i32
    %c0_i32_1 = arith.constant 0 : i32
    return %c0_i32, %c0_i32_0 : i32, i32
  }
  func.func @transform_11(%arg0: i32, %arg1: i32, %arg2: i32) -> (i32, i32) {
    %c0_i32 = arith.constant 0 : i32
    %c0_i32_0 = arith.constant 0 : i32
    %c0_i32_1 = arith.constant 0 : i32
    return %c0_i32, %c0_i32_0 : i32, i32
  }
  func.func @transform_12(%arg0: i32, %arg1: i32, %arg2: i32) -> (i32, i32) {
    %c0_i32 = arith.constant 0 : i32
    %c0_i32_0 = arith.constant 0 : i32
    %c0_i32_1 = arith.constant 0 : i32
    return %c0_i32, %c0_i32_0 : i32, i32
  }
  func.func @transform_13(%arg0: i32, %arg1: i32, %arg2: i32) -> (i32, i32) {
    %c0_i32 = arith.constant 0 : i32
    %c0_i32_0 = arith.constant 0 : i32
    %c0_i32_1 = arith.constant 0 : i32
    return %c0_i32, %c0_i32_0 : i32, i32
  }
  func.func @transform_14(%arg0: i32, %arg1: i32, %arg2: i32) -> (i32, i32, i32) {
    %c0_i32 = arith.constant 0 : i32
    %c0_i32_0 = arith.constant 0 : i32
    return %arg0, %arg1, %c0_i32 : i32, i32, i32
  }
}

</mosaic_0001>

<llo_original>
// kernel: tpu_custom_call.1
$region0: #{tpu_custom_call.1}
  #allocation0 [shape = 'u32[]', space=smem, size = 0x4, offset = 0x4, fixed_abs, tag = 'smem constant byte address 0x4 - core index']
  #allocation1 [shape = 'u32[72,128]{1,0:T(1,128)}', space=vmem, size = 0x9000, scoped, tag = 'internal scratch']
  #allocation2 [shape = 'bf16[4,16,32]{2,1,0:T(8,128)(2,1)}', space=vmem, size = 0x4000, scoped, tag = 'scratch operand']
  #allocation3 [shape = 'f32[4,16,1]{2,1,0:T(8,128)}', space=vmem, size = 0x8000, scoped, tag = 'scratch operand']
  #allocation4 [shape = 'f32[4,16,1]{2,1,0:T(8,128)}', space=vmem, size = 0x8000, scoped, tag = 'scratch operand']
  #allocation5 [shape = 'f32[4,16,32]{2,1,0:T(8,128)}', space=vmem, size = 0x8000, scoped, tag = 'scratch operand']
  %s0 = inlined_call_operand.hbm [shape: f32[2,16,128], index: 0, kind: input, shape index: {}]
  %s1 = inlined_call_operand.hbm [shape: f32[2,16,128], index: 1, kind: input, shape index: {}]
  %s2 = inlined_call_operand.hbm [shape: bf16[2,64,128], index: 2, kind: input, shape index: {}]
  %s3 = inlined_call_operand.hbm [shape: bf16[2,64,128], index: 3, kind: input, shape index: {}]
  %s4 = inlined_call_operand.hbm [shape: bf16[128,128], index: 4, kind: input, shape index: {}]
  %s5 = inlined_call_operand.hbm [shape: bf16[128,128], index: 5, kind: input, shape index: {}]
  %s6 = inlined_call_operand.hbm [shape: bf16[128,128], index: 6, kind: input, shape index: {}]
  %s7 = inlined_call_operand.hbm [shape: bf16[128,128], index: 7, kind: input, shape index: {}]
  %s8 = inlined_call_operand.vmem [shape: f32[1,128], index: 8, kind: input, shape index: {}]
  %s9 = inlined_call_operand.vmem [shape: f32[1,128], index: 9, kind: input, shape index: {}]
  %s10 = inlined_call_operand.vmem [shape: f32[1,128], index: 10, kind: input, shape index: {}]
  %s11 = inlined_call_operand.vmem [shape: f32[1,128], index: 11, kind: input, shape index: {}]
  %s12 = inlined_call_operand.vmem [shape: f32[1,128], index: 12, kind: input, shape index: {}]
  %s13 = inlined_call_operand.vmem [shape: f32[1,128], index: 13, kind: input, shape index: {}]
  %s14 = inlined_call_operand.hbm [shape: f32[2,16,128], index: 14, kind: output, shape index: {}]
  %s15 = sld [smem:[#allocation0]]
  $region129: #{tpu_custom_call.1} parent=0
    _
  %s17 = ssub.s32 1, %s15
  %s18 = scalar_select 0, %s17, %s15
  $region1: #{tpu_custom_call.1} parent=0
    #allocation6 [shape = 'u8[16384]{0}', space=vmem, size = 0x4000, scoped, tag = 'input window, operand 0']
    #allocation7 [shape = 's32[2]{0}', space=sflag, size = 0x8, scoped, tag = 'scoped memory for tpu_custom_call.1']
    #allocation8 [shape = 's32[2]{0}', space=sflag, size = 0x8, scoped, tag = 'scoped memory for tpu_custom_call.1']
    #allocation9 [shape = 'u8[16384]{0}', space=vmem, size = 0x4000, scoped, tag = 'input window, operand 1']
    #allocation10 [shape = 's32[2]{0}', space=sflag, size = 0x8, scoped, tag = 'scoped memory for tpu_custom_call.1']
    #allocation11 [shape = 'u8[8192]{0}', space=vmem, size = 0x2000, scoped, tag = 'input window, operand 2']
    #allocation12 [shape = 'u8[8192]{0}', space=vmem, size = 0x2000, scoped, tag = 'input window, operand 3']
    #allocation13 [shape = 's32[2]{0}', space=sflag, size = 0x8, scoped, tag = 'scoped memory for tpu_custom_call.1']
    #allocation14 [shape = 'u8[32768]{0}', space=vmem, size = 0x8000, scoped, tag = 'input window, operand 4, single buffered']
    #allocation15 [shape = 'u8[32768]{0}', space=vmem, size = 0x8000, scoped, tag = 'input window, operand 5, single buffered']
    #allocation16 [shape = 's32[1]{0}', space=sflag, size = 0x4, scoped, tag = 'scoped memory for tpu_custom_call.1']
    #allocation17 [shape = 'u8[32768]{0}', space=vmem, size = 0x8000, scoped, tag = 'input window, operand 6, single buffered']
    #allocation18 [shape = 'u8[32768]{0}', space=vmem, size = 0x8000, scoped, tag = 'input window, operand 7, single buffered']
    #allocation19 [shape = 's32[1]{0}', space=sflag, size = 0x4, scoped, tag = 'scoped memory for tpu_custom_call.1']
    #allocation20 [shape = 'u8[16384]{0}', space=vmem, size = 0x4000, scoped, tag = 'output window, operand 0']
    %19 = vsyncpa [#allocation7], 0
    %s20 = scalar_lea.sflag [#allocation7], 1
    %21 = vsyncpa %s20, 0
    %22 = vsyncpa [#allocation10], 0
    %s23 = scalar_lea.sflag [#allocation10], 1
    %24 = vsyncpa %s23, 0
    %25 = vsyncpa [#allocation13], 0
    %s26 = scalar_lea.sflag [#allocation13], 1
    %27 = vsyncpa %s26, 0
    %28 = vsyncpa [#allocation16], 0
    %29 = vsyncpa [#allocation19], 0
    %30 = vsyncpa [#allocation8], 0
    %s31 = scalar_lea.sflag [#allocation8], 1
    %32 = vsyncpa %s31, 0
    loop: start=0, step=1, limit=10
    $region2: #{tpu_custom_call.1} parent=1 // loop_pre_header
      _
    $region3: #{tpu_custom_call.1} parent=1 // loop_header
      %s34 = sphi 0, %s38
      %p35 = scmp.ge.s32.totalorder %s34, 10
      %s41 = sphi 0, %s60
      %s42 = sphi 0, %s56
      %s43 = sphi 0, %s52
      %s44 = sphi 0, %s41
      %s45 = sphi 0, %s42
      %s46 = sphi 0, %s43
      %s47 = sphi 0, %s44
      %s48 = sphi 0, %s45
      %s49 = sphi 0, %s46
      %s65 = sphi 0, %s67
      %s68 = sphi 0, %s65
      %s69 = sphi 0, %s68
      %s85 = sphi 0, %s69
      %s93 = sphi 0, %s95
      %s96 = sphi 0, %s93
      %s97 = sphi 0, %s96
      %s113 = sphi 0, %s97
      %s121 = sphi 0, %s123
      %s124 = sphi 0, %s121
      %s125 = sphi 0, %s124
      %s141 = sphi 0, %s125
      %s149 = sphi 0, %s151
      %s152 = sphi 0, %s149
      %s153 = sphi 0, %s152
      %s169 = sphi 0, %s153
      %s173 = sphi 0, %s173
      %s175 = sphi 0, %s173
      %s176 = sphi 0, %s175
      %s190 = sphi 0, %s176
      %s194 = sphi 0, %s194
      %s196 = sphi 0, %s194
      %s197 = sphi 0, %s196
      %s211 = sphi 0, %s197
      %s215 = sphi 0, %s215
      %s217 = sphi 0, %s215
      %s218 = sphi 0, %s217
      %s232 = sphi 0, %s218
      %s236 = sphi 0, %s236
      %s238 = sphi 0, %s236
      %s239 = sphi 0, %s238
      %s253 = sphi 0, %s239
      %s257 = sphi 0, %s257
      %s259 = sphi 0, %s257
      %s260 = sphi 0, %s259
      %s274 = sphi 0, %s260
      %s278 = sphi 0, %s278
      %s280 = sphi 0, %s278
      %s281 = sphi 0, %s280
      %s295 = sphi 0, %s281
      %s299 = sphi 0, %s299
      %s301 = sphi 0, %s299
      %s302 = sphi 0, %s301
      %s316 = sphi 0, %s302
      %s320 = sphi 0, %s320
      %s322 = sphi 0, %s320
      %s323 = sphi 0, %s322
      %s337 = sphi 0, %s323
      %s341 = sphi 0, %s341
      %s343 = sphi 0, %s341
      %s344 = sphi 0, %s343
      %s358 = sphi 0, %s344
      %s362 = sphi 0, %s362
      %s364 = sphi 0, %s362
      %s365 = sphi 0, %s364
      %s379 = sphi 0, %s365
      %s387 = sphi 0, %s389
      %s390 = sphi 0, %s387
      %s391 = sphi 0, %s390
      %s407 = sphi 0, %s391
    $region4: #{tpu_custom_call.1} parent=1 // loop_header_branch
      %37 = sbr.rel (%p35) target = $region8
    $region5: #{tpu_custom_call.1} parent=1 // loop_body
      %s39 = ssub.s32 %s34, 1
      %s40 = ssub.s32 %s34, 2
      %s50 = sadd.s32 1, %s43
      %p51 = scmp.ge.s32.totalorder %s50, 4
      %s52 = scalar_select %p51, 0, %s50
      %s53 = sadd.s32 1, %s42
      %s54 = scalar_select %p51, %s53, %s42
      %p55 = scmp.ge.s32.totalorder %s54, 1
      %s56 = scalar_select %p55, 0, %s54
      %s57 = sadd.s32 1, %s41
      %s58 = scalar_select %p55, %s57, %s41
      %p59 = scmp.ge.s32.totalorder %s58, 2
      %s60 = scalar_select %p59, 0, %s58
      %s61 = ssub.s32 %s41, %s60
      %s62 = ssub.s32 %s42, %s56
      %s63 = sor.u32 %s61, %s62
      %p64 = scmp.eq.s32.totalorder %s63, 0
      %s66 = sadd.s32 %s65, 1
      %s67 = scalar_select %p64, %s65, %s66
      %p70 = pneg %p64
      %p71 = scmp.eq.s32.totalorder %s34, 7
      %p72 = por %p70, %p71
      %p73 = scmp.ne.s32.totalorder %s65, %s68
      %p74 = scmp.eq.s32.totalorder %s34, 0
      %p75 = por %p73, %p74
      %p76 = scmp.ne.s32.totalorder %s65, %s68
      %p77 = scmp.eq.s32.totalorder %s39, 7
      %p78 = por %p76, %p77
      %p79 = scmp.ne.s32.totalorder %s68, %s69
      %p80 = scmp.eq.s32.totalorder %s39, 0
      %p81 = por %p79, %p80
      %p82 = scmp.ne.s32.totalorder %s68, %s69
      %p83 = scmp.eq.s32.totalorder %s40, 7
      %p84 = por %p82, %p83
      %p86 = scmp.ne.s32.totalorder %s69, %s85
      %p87 = scmp.eq.s32.totalorder %s40, 0
      %p88 = por %p86, %p87
      %s89 = ssub.s32 %s41, %s60
      %s90 = ssub.s32 %s42, %s56
      %s91 = sor.u32 %s89, %s90
      %p92 = scmp.eq.s32.totalorder %s91, 0
      %s94 = sadd.s32 %s93, 1
      %s95 = scalar_select %p92, %s93, %s94
      %p98 = pneg %p92
      %p99 = scmp.eq.s32.totalorder %s34, 7
      %p100 = por %p98, %p99
      %p101 = scmp.ne.s32.totalorder %s93, %s96
      %p102 = scmp.eq.s32.totalorder %s34, 0
      %p103 = por %p101, %p102
      %p104 = scmp.ne.s32.totalorder %s93, %s96
      %p105 = scmp.eq.s32.totalorder %s39, 7
      %p106 = por %p104, %p105
      %p107 = scmp.ne.s32.totalorder %s96, %s97
      %p108 = scmp.eq.s32.totalorder %s39, 0
      %p109 = por %p107, %p108
      %p110 = scmp.ne.s32.totalorder %s96, %s97
      %p111 = scmp.eq.s32.totalorder %s40, 7
      %p112 = por %p110, %p111
      %p114 = scmp.ne.s32.totalorder %s97, %s113
      %p115 = scmp.eq.s32.totalorder %s40, 0
      %p116 = por %p114, %p115
      %s117 = ssub.s32 %s41, %s60
      %s118 = ssub.s32 %s43, %s52
      %s119 = sor.u32 %s117, %s118
      %p120 = scmp.eq.s32.totalorder %s119, 0
      %s122 = sadd.s32 %s121, 1
      %s123 = scalar_select %p120, %s121, %s122
      %p126 = pneg %p120
      %p127 = scmp.eq.s32.totalorder %s34, 7
      %p128 = por %p126, %p127
      %p129 = scmp.ne.s32.totalorder %s121, %s124
      %p130 = scmp.eq.s32.totalorder %s34, 0
      %p131 = por %p129, %p130
      %p132 = scmp.ne.s32.totalorder %s121, %s124
      %p133 = scmp.eq.s32.totalorder %s39, 7
      %p134 = por %p132, %p133
      %p135 = scmp.ne.s32.totalorder %s124, %s125
      %p136 = scmp.eq.s32.totalorder %s39, 0
      %p137 = por %p135, %p136
      %p138 = scmp.ne.s32.totalorder %s124, %s125
      %p139 = scmp.eq.s32.totalorder %s40, 7
      %p140 = por %p138, %p139
      %p142 = scmp.ne.s32.totalorder %s125, %s141
      %p143 = scmp.eq.s32.totalorder %s40, 0
      %p144 = por %p142, %p143
      %s145 = ssub.s32 %s41, %s60
      %s146 = ssub.s32 %s43, %s52
      %s147 = sor.u32 %s145, %s146
      %p148 = scmp.eq.s32.totalorder %s147, 0
      %s150 = sadd.s32 %s149, 1
      %s151 = scalar_select %p148, %s149, %s150
      %p154 = pneg %p148
      %p155 = scmp.eq.s32.totalorder %s34, 7
      %p156 = por %p154, %p155
      %p157 = scmp.ne.s32.totalorder %s149, %s152
      %p158 = scmp.eq.s32.totalorder %s34, 0
      %p159 = por %p157, %p158
      %p160 = scmp.ne.s32.totalorder %s149, %s152
      %p161 = scmp.eq.s32.totalorder %s39, 7
      %p162 = por %p160, %p161
      %p163 = scmp.ne.s32.totalorder %s152, %s153
      %p164 = scmp.eq.s32.totalorder %s39, 0
      %p165 = por %p163, %p164
      %p166 = scmp.ne.s32.totalorder %s152, %s153
      %p167 = scmp.eq.s32.totalorder %s40, 7
      %p168 = por %p166, %p167
      %p170 = scmp.ne.s32.totalorder %s153, %s169
      %p171 = scmp.eq.s32.totalorder %s40, 0
      %p172 = por %p170, %p171
      %s174 = sadd.s32 %s173, 1
      %p177 = scmp.eq.s32.totalorder %s34, 7
      %p178 = scmp.ne.s32.totalorder %s173, %s175
      %p179 = scmp.eq.s32.totalorder %s34, 0
      %p180 = por %p178, %p179
      %p181 = scmp.ne.s32.totalorder %s173, %s175
      %p182 = scmp.eq.s32.totalorder %s39, 7
      %p183 = por %p181, %p182
      %p184 = scmp.ne.s32.totalorder %s175, %s176
      %p185 = scmp.eq.s32.totalorder %s39, 0
      %p186 = por %p184, %p185
      %p187 = scmp.ne.s32.totalorder %s175, %s176
      %p188 = scmp.eq.s32.totalorder %s40, 7
      %p189 = por %p187, %p188
      %p191 = scmp.ne.s32.totalorder %s176, %s190
      %p192 = scmp.eq.s32.totalorder %s40, 0
      %p193 = por %p191, %p192
      %s195 = sadd.s32 %s194, 1
      %p198 = scmp.eq.s32.totalorder %s34, 7
      %p199 = scmp.ne.s32.totalorder %s194, %s196
      %p200 = scmp.eq.s32.totalorder %s34, 0
      %p201 = por %p199, %p200
      %p202 = scmp.ne.s32.totalorder %s194, %s196
      %p203 = scmp.eq.s32.totalorder %s39, 7
      %p204 = por %p202, %p203
      %p205 = scmp.ne.s32.totalorder %s196, %s197
      %p206 = scmp.eq.s32.totalorder %s39, 0
      %p207 = por %p205, %p206
      %p208 = scmp.ne.s32.totalorder %s196, %s197
      %p209 = scmp.eq.s32.totalorder %s40, 7
      %p210 = por %p208, %p209
      %p212 = scmp.ne.s32.totalorder %s197, %s211
      %p213 = scmp.eq.s32.totalorder %s40, 0
      %p214 = por %p212, %p213
      %s216 = sadd.s32 %s215, 1
      %p219 = scmp.eq.s32.totalorder %s34, 7
      %p220 = scmp.ne.s32.totalorder %s215, %s217
      %p221 = scmp.eq.s32.totalorder %s34, 0
      %p222 = por %p220, %p221
      %p223 = scmp.ne.s32.totalorder %s215, %s217
      %p224 = scmp.eq.s32.totalorder %s39, 7
      %p225 = por %p223, %p224
      %p226 = scmp.ne.s32.totalorder %s217, %s218
      %p227 = scmp.eq.s32.totalorder %s39, 0
      %p228 = por %p226, %p227
      %p229 = scmp.ne.s32.totalorder %s217, %s218
      %p230 = scmp.eq.s32.totalorder %s40, 7
      %p231 = por %p229, %p230
      %p233 = scmp.ne.s32.totalorder %s218, %s232
      %p234 = scmp.eq.s32.totalorder %s40, 0
      %p235 = por %p233, %p234
      %s237 = sadd.s32 %s236, 1
      %p240 = scmp.eq.s32.totalorder %s34, 7
      %p241 = scmp.ne.s32.totalorder %s236, %s238
      %p242 = scmp.eq.s32.totalorder %s34, 0
      %p243 = por %p241, %p242
      %p244 = scmp.ne.s32.totalorder %s236, %s238
      %p245 = scmp.eq.s32.totalorder %s39, 7
      %p246 = por %p244, %p245
      %p247 = scmp.ne.s32.totalorder %s238, %s239
      %p248 = scmp.eq.s32.totalorder %s39, 0
      %p249 = por %p247, %p248
      %p250 = scmp.ne.s32.totalorder %s238, %s239
      %p251 = scmp.eq.s32.totalorder %s40, 7
      %p252 = por %p250, %p251
      %p254 = scmp.ne.s32.totalorder %s239, %s253
      %p255 = scmp.eq.s32.totalorder %s40, 0
      %p256 = por %p254, %p255
      %s258 = sadd.s32 %s257, 1
      %p261 = scmp.eq.s32.totalorder %s34, 7
      %p262 = scmp.ne.s32.totalorder %s257, %s259
      %p263 = scmp.eq.s32.totalorder %s34, 0
      %p264 = por %p262, %p263
      %p265 = scmp.ne.s32.totalorder %s257, %s259
      %p266 = scmp.eq.s32.totalorder %s39, 7
      %p267 = por %p265, %p266
      %p268 = scmp.ne.s32.totalorder %s259, %s260
      %p269 = scmp.eq.s32.totalorder %s39, 0
      %p270 = por %p268, %p269
      %p271 = scmp.ne.s32.totalorder %s259, %s260
      %p272 = scmp.eq.s32.totalorder %s40, 7
      %p273 = por %p271, %p272
      %p275 = scmp.ne.s32.totalorder %s260, %s274
      %p276 = scmp.eq.s32.totalorder %s40, 0
      %p277 = por %p275, %p276
      %s279 = sadd.s32 %s278, 1
      %p282 = scmp.eq.s32.totalorder %s34, 7
      %p283 = scmp.ne.s32.totalorder %s278, %s280
      %p284 = scmp.eq.s32.totalorder %s34, 0
      %p285 = por %p283, %p284
      %p286 = scmp.ne.s32.totalorder %s278, %s280
      %p287 = scmp.eq.s32.totalorder %s39, 7
      %p288 = por %p286, %p287
      %p289 = scmp.ne.s32.totalorder %s280, %s281
      %p290 = scmp.eq.s32.totalorder %s39, 0
      %p291 = por %p289, %p290
      %p292 = scmp.ne.s32.totalorder %s280, %s281
      %p293 = scmp.eq.s32.totalorder %s40, 7
      %p294 = por %p292, %p293
      %p296 = scmp.ne.s32.totalorder %s281, %s295
      %p297 = scmp.eq.s32.totalorder %s40, 0
      %p298 = por %p296, %p297
      %s300 = sadd.s32 %s299, 1
      %p303 = scmp.eq.s32.totalorder %s34, 7
      %p304 = scmp.ne.s32.totalorder %s299, %s301
      %p305 = scmp.eq.s32.totalorder %s34, 0
      %p306 = por %p304, %p305
      %p307 = scmp.ne.s32.totalorder %s299, %s301
      %p308 = scmp.eq.s32.totalorder %s39, 7
      %p309 = por %p307, %p308
      %p310 = scmp.ne.s32.totalorder %s301, %s302
      %p311 = scmp.eq.s32.totalorder %s39, 0
      %p312 = por %p310, %p311
      %p313 = scmp.ne.s32.totalorder %s301, %s302
      %p314 = scmp.eq.s32.totalorder %s40, 7
      %p315 = por %p313, %p314
      %p317 = scmp.ne.s32.totalorder %s302, %s316
      %p318 = scmp.eq.s32.totalorder %s40, 0
      %p319 = por %p317, %p318
      %s321 = sadd.s32 %s320, 1
      %p324 = scmp.eq.s32.totalorder %s34, 7
      %p325 = scmp.ne.s32.totalorder %s320, %s322
      %p326 = scmp.eq.s32.totalorder %s34, 0
      %p327 = por %p325, %p326
      %p328 = scmp.ne.s32.totalorder %s320, %s322
      %p329 = scmp.eq.s32.totalorder %s39, 7
      %p330 = por %p328, %p329
      %p331 = scmp.ne.s32.totalorder %s322, %s323
      %p332 = scmp.eq.s32.totalorder %s39, 0
      %p333 = por %p331, %p332
      %p334 = scmp.ne.s32.totalorder %s322, %s323
      %p335 = scmp.eq.s32.totalorder %s40, 7
      %p336 = por %p334, %p335
      %p338 = scmp.ne.s32.totalorder %s323, %s337
      %p339 = scmp.eq.s32.totalorder %s40, 0
      %p340 = por %p338, %p339
      %s342 = sadd.s32 %s341, 1
      %p345 = scmp.eq.s32.totalorder %s34, 7
      %p346 = scmp.ne.s32.totalorder %s341, %s343
      %p347 = scmp.eq.s32.totalorder %s34, 0
      %p348 = por %p346, %p347
      %p349 = scmp.ne.s32.totalorder %s341, %s343
      %p350 = scmp.eq.s32.totalorder %s39, 7
      %p351 = por %p349, %p350
      %p352 = scmp.ne.s32.totalorder %s343, %s344
      %p353 = scmp.eq.s32.totalorder %s39, 0
      %p354 = por %p352, %p353
      %p355 = scmp.ne.s32.totalorder %s343, %s344
      %p356 = scmp.eq.s32.totalorder %s40, 7
      %p357 = por %p355, %p356
      %p359 = scmp.ne.s32.totalorder %s344, %s358
      %p360 = scmp.eq.s32.totalorder %s40, 0
      %p361 = por %p359, %p360
      %s363 = sadd.s32 %s362, 1
      %p366 = scmp.eq.s32.totalorder %s34, 7
      %p367 = scmp.ne.s32.totalorder %s362, %s364
      %p368 = scmp.eq.s32.totalorder %s34, 0
      %p369 = por %p367, %p368
      %p370 = scmp.ne.s32.totalorder %s362, %s364
      %p371 = scmp.eq.s32.totalorder %s39, 7
      %p372 = por %p370, %p371
      %p373 = scmp.ne.s32.totalorder %s364, %s365
      %p374 = scmp.eq.s32.totalorder %s39, 0
      %p375 = por %p373, %p374
      %p376 = scmp.ne.s32.totalorder %s364, %s365
      %p377 = scmp.eq.s32.totalorder %s40, 7
      %p378 = por %p376, %p377
      %p380 = scmp.ne.s32.totalorder %s365, %s379
      %p381 = scmp.eq.s32.totalorder %s40, 0
      %p382 = por %p380, %p381
      %s383 = ssub.s32 %s41, %s60
      %s384 = ssub.s32 %s42, %s56
      %s385 = sor.u32 %s383, %s384
      %p386 = scmp.eq.s32.totalorder %s385, 0
      %s388 = sadd.s32 %s387, 1
      %s389 = scalar_select %p386, %s387, %s388
      %p392 = pneg %p386
      %p393 = scmp.eq.s32.totalorder %s34, 7
      %p394 = por %p392, %p393
      %p395 = scmp.ne.s32.totalorder %s387, %s390
      %p396 = scmp.eq.s32.totalorder %s34, 0
      %p397 = por %p395, %p396
      %p398 = scmp.ne.s32.totalorder %s387, %s390
      %p399 = scmp.eq.s32.totalorder %s39, 7
      %p400 = por %p398, %p399
      %p401 = scmp.ne.s32.totalorder %s390, %s391
      %p402 = scmp.eq.s32.totalorder %s39, 0
      %p403 = por %p401, %p402
      %p404 = scmp.ne.s32.totalorder %s390, %s391
      %p405 = scmp.eq.s32.totalorder %s40, 7
      %p406 = por %p404, %p405
      %p408 = scmp.ne.s32.totalorder %s391, %s407
      %p409 = scmp.eq.s32.totalorder %s40, 0
      %p410 = por %p408, %p409
      %p411 = scmp.le.s32.totalorder 1, %s34
      %p412 = scmp.lt.s32.totalorder %s34, 9
      %p413 = pnand %p411, %p412
      %p414 = pneg %p413
      // Predicated region
      $region9: #{tpu_custom_call.1} parent=5 // pred_check
        _
      $region10: #{tpu_custom_call.1} parent=5 // pred_check_branch
        %416 = sbr.rel (%p413) target = $region12
      $region11: #{tpu_custom_call.1} parent=5 // pred_region
        %s417 = ssub.s32 %s34, 1
        // Predicated region
        $region13: #{tpu_custom_call.1} parent=11 // pred_check
          %p418 = pneg %p186
        $region14: #{tpu_custom_call.1} parent=11 // pred_check_branch
          %420 = sbr.rel (%p418) target = $region16
        $region15: #{tpu_custom_call.1} parent=11 // pred_region
          %422 = vsyncadd [#allocation13], 0
          %s423 = sshll.u32 %s4, 4
          %s424 = int_to_ptr.hbm [resolvable:$true] %s423
          %s425 = sshll.u32 [#allocation14], 4
          %s426 = int_to_ptr.vmem [resolvable:$true] %s425
          %431 = dma.hbm_to_vmem [thread:$0]  %s424, 1024, %s426, [#allocation13], 64, 64, 4
        $region16: #{tpu_custom_call.1} parent=11 // pred_fallthru
          _
        // Predicated region
        $region17: #{tpu_custom_call.1} parent=11 // pred_check
          %p432 = pneg %p207
        $region18: #{tpu_custom_call.1} parent=11 // pred_check_branch
          %434 = sbr.rel (%p432) target = $region20
        $region19: #{tpu_custom_call.1} parent=11 // pred_region
          %436 = vsyncadd [#allocation16], 0
          %s437 = sshll.u32 %s5, 4
          %s438 = int_to_ptr.hbm [resolvable:$true] %s437
          %s439 = sshll.u32 [#allocation15], 4
          %s440 = int_to_ptr.vmem [resolvable:$true] %s439
          %445 = dma.hbm_to_vmem [thread:$0]  %s438, 1024, %s440, [#allocation16], 64, 64, 4
        $region20: #{tpu_custom_call.1} parent=11 // pred_fallthru
          _
        // Predicated region
        $region21: #{tpu_custom_call.1} parent=11 // pred_check
          %p446 = pneg %p228
        $region22: #{tpu_custom_call.1} parent=11 // pred_check_branch
          %448 = sbr.rel (%p446) target = $region24
        $region23: #{tpu_custom_call.1} parent=11 // pred_region
          %450 = vsyncadd [#allocation16], 0
          %s451 = sshll.u32 %s6, 4
          %s452 = int_to_ptr.hbm [resolvable:$true] %s451
          %s453 = sshll.u32 [#allocation17], 4
          %s454 = int_to_ptr.vmem [resolvable:$true] %s453
          %459 = dma.hbm_to_vmem [thread:$0]  %s452, 1024, %s454, [#allocation16], 64, 64, 4
        $region24: #{tpu_custom_call.1} parent=11 // pred_fallthru
          _
        // Predicated region
        $region25: #{tpu_custom_call.1} parent=11 // pred_check
          %p460 = pneg %p249
        $region26: #{tpu_custom_call.1} parent=11 // pred_check_branch
          %462 = sbr.rel (%p460) target = $region28
        $region27: #{tpu_custom_call.1} parent=11 // pred_region
          %464 = vsyncadd [#allocation19], 0
          %s465 = sshll.u32 %s7, 4
          %s466 = int_to_ptr.hbm [resolvable:$true] %s465
          %s467 = sshll.u32 [#allocation18], 4
          %s468 = int_to_ptr.vmem [resolvable:$true] %s467
          %473 = dma.hbm_to_vmem [thread:$0]  %s466, 1024, %s468, [#allocation19], 64, 64, 4
        $region28: #{tpu_custom_call.1} parent=11 // pred_fallthru
          _
        // Predicated region
        $region29: #{tpu_custom_call.1} parent=11 // pred_check
          %p474 = pneg %p270
        $region30: #{tpu_custom_call.1} parent=11 // pred_check_branch
          %476 = sbr.rel (%p474) target = $region32
        $region31: #{tpu_custom_call.1} parent=11 // pred_region
          _
        $region32: #{tpu_custom_call.1} parent=11 // pred_fallthru
          _
        // Predicated region
        $region33: #{tpu_custom_call.1} parent=11 // pred_check
          %p477 = pneg %p291
        $region34: #{tpu_custom_call.1} parent=11 // pred_check_branch
          %479 = sbr.rel (%p477) target = $region36
        $region35: #{tpu_custom_call.1} parent=11 // pred_region
          _
        $region36: #{tpu_custom_call.1} parent=11 // pred_fallthru
          _
        // Predicated region
        $region37: #{tpu_custom_call.1} parent=11 // pred_check
          %p480 = pneg %p312
        $region38: #{tpu_custom_call.1} parent=11 // pred_check_branch
          %482 = sbr.rel (%p480) target = $region40
        $region39: #{tpu_custom_call.1} parent=11 // pred_region
          _
        $region40: #{tpu_custom_call.1} parent=11 // pred_fallthru
          _
        // Predicated region
        $region41: #{tpu_custom_call.1} parent=11 // pred_check
          %p483 = pneg %p333
        $region42: #{tpu_custom_call.1} parent=11 // pred_check_branch
          %485 = sbr.rel (%p483) target = $region44
        $region43: #{tpu_custom_call.1} parent=11 // pred_region
          _
        $region44: #{tpu_custom_call.1} parent=11 // pred_fallthru
          _
        // Predicated region
        $region45: #{tpu_custom_call.1} parent=11 // pred_check
          %p486 = pneg %p354
        $region46: #{tpu_custom_call.1} parent=11 // pred_check_branch
          %488 = sbr.rel (%p486) target = $region48
        $region47: #{tpu_custom_call.1} parent=11 // pred_region
          _
        $region48: #{tpu_custom_call.1} parent=11 // pred_fallthru
          _
        // Predicated region
        $region49: #{tpu_custom_call.1} parent=11 // pred_check
          %p489 = pneg %p375
        $region50: #{tpu_custom_call.1} parent=11 // pred_check_branch
          %491 = sbr.rel (%p489) target = $region52
        $region51: #{tpu_custom_call.1} parent=11 // pred_region
          _
        $region52: #{tpu_custom_call.1} parent=11 // pred_fallthru
          _
      $region12: #{tpu_custom_call.1} parent=5 // pred_fallthru
        _
      %p492 = scmp.lt.s32.totalorder %s34, 8
      // Predicated region
      $region53: #{tpu_custom_call.1} parent=5 // pred_check
        %p493 = pneg %p492
      $region54: #{tpu_custom_call.1} parent=5 // pred_check_branch
        %495 = sbr.rel (%p493) target = $region56
      $region55: #{tpu_custom_call.1} parent=5 // pred_region
        // Predicated region
        $region57: #{tpu_custom_call.1} parent=55 // pred_check
          %p496 = pneg %p75
        $region58: #{tpu_custom_call.1} parent=55 // pred_check_branch
          %498 = sbr.rel (%p496) target = $region60
        $region59: #{tpu_custom_call.1} parent=55 // pred_region
          %s499 = sand.u32 %s65, 1
          %s500 = scalar_lea.sflag [#allocation7], %s499
          %s501 = sand.u32 %s65, 1
          %s502 = smul.addr %s501, 16
          %s503 = scalar_lea.vmem [#allocation6], %s502
          %s504 = smul.u32 2, %s42
          %506 = vsyncadd %s500, 0
          %s507 = smul.addr %s41, 2
          %s508 = sadd.s32 %s504, %s507
          %s509 = smul.addr %s508, 8
          %s510 = scalar_lea.hbm %s0, %s509
          %s511 = sshll.u32 %s510, 4
          %s512 = int_to_ptr.hbm [resolvable:$true] %s511
          %s513 = sshll.u32 %s503, 4
          %s514 = int_to_ptr.vmem [resolvable:$true] %s513
          %519 = dma.hbm_to_vmem [thread:$0]  %s512, 256, %s514, %s500, 128, 128, 8
        $region60: #{tpu_custom_call.1} parent=55 // pred_fallthru
          _
        // Predicated region
        $region61: #{tpu_custom_call.1} parent=55 // pred_check
          %p520 = pneg %p103
        $region62: #{tpu_custom_call.1} parent=55 // pred_check_branch
          %522 = sbr.rel (%p520) target = $region64
        $region63: #{tpu_custom_call.1} parent=55 // pred_region
          %s523 = sand.u32 %s34, 1
          %s524 = scalar_lea.sflag [#allocation10], %s523
          %s525 = sand.u32 %s93, 1
          %s526 = smul.addr %s525, 16
          %s527 = scalar_lea.vmem [#allocation9], %s526
          %s528 = smul.u32 2, %s42
          %530 = vsyncadd %s524, 0
          %s531 = smul.addr %s41, 2
          %s532 = sadd.s32 %s528, %s531
          %s533 = smul.addr %s532, 8
          %s534 = scalar_lea.hbm %s1, %s533
          %s535 = sshll.u32 %s534, 4
          %s536 = int_to_ptr.hbm [resolvable:$true] %s535
          %s537 = sshll.u32 %s527, 4
          %s538 = int_to_ptr.vmem [resolvable:$true] %s537
          %543 = dma.hbm_to_vmem [thread:$0]  %s536, 256, %s538, %s524, 128, 128, 8
        $region64: #{tpu_custom_call.1} parent=55 // pred_fallthru
          _
        // Predicated region
        $region65: #{tpu_custom_call.1} parent=55 // pred_check
          %p544 = pneg %p131
        $region66: #{tpu_custom_call.1} parent=55 // pred_check_branch
          %546 = sbr.rel (%p544) target = $region68
        $region67: #{tpu_custom_call.1} parent=55 // pred_region
          %s547 = sand.u32 %s34, 1
          %s548 = scalar_lea.sflag [#allocation10], %s547
          %s549 = sand.u32 %s121, 1
          %s550 = smul.addr %s549, 8
          %s551 = scalar_lea.vmem [#allocation11], %s550
          %s552 = smul.u32 2, %s43
          %554 = vsyncadd %s548, 0
          %s555 = smul.addr %s41, 8
          %s556 = sadd.s32 %s552, %s555
          %s557 = smul.addr %s556, 4
          %s558 = scalar_lea.hbm %s2, %s557
          %s559 = sshll.u32 %s558, 4
          %s560 = int_to_ptr.hbm [resolvable:$true] %s559
          %s561 = sshll.u32 %s551, 4
          %s562 = int_to_ptr.vmem [resolvable:$true] %s561
          %567 = dma.hbm_to_vmem [thread:$0]  %s560, 128, %s562, %s548, 64, 64, 4
        $region68: #{tpu_custom_call.1} parent=55 // pred_fallthru
          _
        // Predicated region
        $region69: #{tpu_custom_call.1} parent=55 // pred_check
          %p568 = pneg %p159
        $region70: #{tpu_custom_call.1} parent=55 // pred_check_branch
          %570 = sbr.rel (%p568) target = $region72
        $region71: #{tpu_custom_call.1} parent=55 // pred_region
          %s571 = sand.u32 %s34, 1
          %s572 = scalar_lea.sflag [#allocation13], %s571
          %s573 = sand.u32 %s149, 1
          %s574 = smul.addr %s573, 8
          %s575 = scalar_lea.vmem [#allocation12], %s574
          %s576 = smul.u32 2, %s43
          %578 = vsyncadd %s572, 0
          %s579 = smul.addr %s41, 8
          %s580 = sadd.s32 %s576, %s579
          %s581 = smul.addr %s580, 4
          %s582 = scalar_lea.hbm %s3, %s581
          %s583 = sshll.u32 %s582, 4
          %s584 = int_to_ptr.hbm [resolvable:$true] %s583
          %s585 = sshll.u32 %s575, 4
          %s586 = int_to_ptr.vmem [resolvable:$true] %s585
          %591 = dma.hbm_to_vmem [thread:$0]  %s584, 128, %s586, %s572, 64, 64, 4
        $region72: #{tpu_custom_call.1} parent=55 // pred_fallthru
          _
      $region56: #{tpu_custom_call.1} parent=5 // pred_fallthru
        _
      %p592 = scmp.le.s32.totalorder 1, %s34
      %p593 = scmp.lt.s32.totalorder %s34, 9
      %p594 = pnand %p592, %p593
      %p595 = pneg %p594
      // Predicated region
      $region73: #{tpu_custom_call.1} parent=5 // pred_check
        _
      $region74: #{tpu_custom_call.1} parent=5 // pred_check_branch
        %597 = sbr.rel (%p594) target = $region76
      $region75: #{tpu_custom_call.1} parent=5 // pred_region
        %s598 = ssub.s32 %s34, 1
        %s599 = sand.u32 %s68, 1
        %s600 = scalar_lea.sflag [#allocation7], %s599
        %s601 = sand.u32 %s68, 1
        %s602 = smul.addr %s601, 16
        %s603 = scalar_lea.vmem [#allocation6], %s602
        // Predicated region
        $region77: #{tpu_custom_call.1} parent=75 // pred_check
          %p604 = pneg %p81
        $region78: #{tpu_custom_call.1} parent=75 // pred_check_branch
          %606 = sbr.rel (%p604) target = $region80
        $region79: #{tpu_custom_call.1} parent=75 // pred_region
          %608 = dma.done %s600, 256
        $region80: #{tpu_custom_call.1} parent=75 // pred_fallthru
          _
        %s609 = sand.u32 %s39, 1
        %s610 = scalar_lea.sflag [#allocation10], %s609
        %s611 = sand.u32 %s96, 1
        %s612 = smul.addr %s611, 16
        %s613 = scalar_lea.vmem [#allocation9], %s612
        // Predicated region
        $region81: #{tpu_custom_call.1} parent=75 // pred_check
          %p614 = pneg %p109
        $region82: #{tpu_custom_call.1} parent=75 // pred_check_branch
          %616 = sbr.rel (%p614) target = $region84
        $region83: #{tpu_custom_call.1} parent=75 // pred_region
          %618 = dma.done %s610, 256
        $region84: #{tpu_custom_call.1} parent=75 // pred_fallthru
          _
        %s619 = sand.u32 %s39, 1
        %s620 = scalar_lea.sflag [#allocation10], %s619
        %s621 = sand.u32 %s124, 1
        %s622 = smul.addr %s621, 8
        %s623 = scalar_lea.vmem [#allocation11], %s622
        // Predicated region
        $region85: #{tpu_custom_call.1} parent=75 // pred_check
          %p624 = pneg %p137
        $region86: #{tpu_custom_call.1} parent=75 // pred_check_branch
          %626 = sbr.rel (%p624) target = $region88
        $region87: #{tpu_custom_call.1} parent=75 // pred_region
          %628 = dma.done %s620, 128
        $region88: #{tpu_custom_call.1} parent=75 // pred_fallthru
          _
        %s629 = sand.u32 %s39, 1
        %s630 = scalar_lea.sflag [#allocation13], %s629
        %s631 = sand.u32 %s152, 1
        %s632 = smul.addr %s631, 8
        %s633 = scalar_lea.vmem [#allocation12], %s632
        // Predicated region
        $region89: #{tpu_custom_call.1} parent=75 // pred_check
          %p634 = pneg %p165
        $region90: #{tpu_custom_call.1} parent=75 // pred_check_branch
          %636 = sbr.rel (%p634) target = $region92
        $region91: #{tpu_custom_call.1} parent=75 // pred_region
          %638 = dma.done %s630, 128
        $region92: #{tpu_custom_call.1} parent=75 // pred_fallthru
          _
        // Predicated region
        $region93: #{tpu_custom_call.1} parent=75 // pred_check
          %p639 = pneg %p186
        $region94: #{tpu_custom_call.1} parent=75 // pred_check_branch
          %641 = sbr.rel (%p639) target = $region96
        $region95: #{tpu_custom_call.1} parent=75 // pred_region
          %643 = dma.done [#allocation13], 1024
        $region96: #{tpu_custom_call.1} parent=75 // pred_fallthru
          _
        // Predicated region
        $region97: #{tpu_custom_call.1} parent=75 // pred_check
          %p644 = pneg %p207
        $region98: #{tpu_custom_call.1} parent=75 // pred_check_branch
          %646 = sbr.rel (%p644) target = $region100
        $region99: #{tpu_custom_call.1} parent=75 // pred_region
          %648 = dma.done [#allocation16], 1024
        $region100: #{tpu_custom_call.1} parent=75 // pred_fallthru
          _
        // Predicated region
        $region101: #{tpu_custom_call.1} parent=75 // pred_check
          %p649 = pneg %p228
        $region102: #{tpu_custom_call.1} parent=75 // pred_check_branch
          %651 = sbr.rel (%p649) target = $region104
        $region103: #{tpu_custom_call.1} parent=75 // pred_region
          %653 = dma.done [#allocation16], 1024
        $region104: #{tpu_custom_call.1} parent=75 // pred_fallthru
          _
        // Predicated region
        $region105: #{tpu_custom_call.1} parent=75 // pred_check
          %p654 = pneg %p249
        $region106: #{tpu_custom_call.1} parent=75 // pred_check_branch
          %656 = sbr.rel (%p654) target = $region108
        $region107: #{tpu_custom_call.1} parent=75 // pred_region
          %658 = dma.done [#allocation19], 1024
        $region108: #{tpu_custom_call.1} parent=75 // pred_fallthru
          _
        %s659 = sand.u32 %s68, 1
        %s660 = scalar_lea.sflag [#allocation7], %s659
        %s661 = sand.u32 %s68, 1
        %s662 = smul.addr %s661, 16
        %s663 = scalar_lea.vmem [#allocation6], %s662
        %p664 = pneg %p81
        %p665 = pneg %p78
        %s666 = sand.u32 %s39, 1
        %s667 = scalar_lea.sflag [#allocation10], %s666
        %s668 = sand.u32 %s96, 1
        %s669 = smul.addr %s668, 16
        %s670 = scalar_lea.vmem [#allocation9], %s669
        %p671 = pneg %p109
        %p672 = pneg %p106
        %s673 = sand.u32 %s39, 1
        %s674 = scalar_lea.sflag [#allocation10], %s673
        %s675 = sand.u32 %s124, 1
        %s676 = smul.addr %s675, 8
        %s677 = scalar_lea.vmem [#allocation11], %s676
        %p678 = pneg %p137
        %p679 = pneg %p134
        %s680 = sand.u32 %s39, 1
        %s681 = scalar_lea.sflag [#allocation13], %s680
        %s682 = sand.u32 %s152, 1
        %s683 = smul.addr %s682, 8
        %s684 = scalar_lea.vmem [#allocation12], %s683
        %p685 = pneg %p165
        %p686 = pneg %p162
        %p687 = pneg %p186
        %p688 = pneg %p183
        %p689 = pneg %p207
        %p690 = pneg %p204
        %p691 = pneg %p228
        %p692 = pneg %p225
        %p693 = pneg %p249
        %p694 = pneg %p246
        %p695 = pneg %p270
        %p696 = pneg %p267
        %p697 = pneg %p291
        %p698 = pneg %p288
        %p699 = pneg %p312
        %p700 = pneg %p309
        %p701 = pneg %p333
        %p702 = pneg %p330
        %p703 = pneg %p354
        %p704 = pneg %p351
        %p705 = pneg %p375
        %p706 = pneg %p372
        %p707 = pneg %p403
        %p708 = pneg %p400
        %s709 = sand.u32 %s390, 1
        %s710 = scalar_lea.sflag [#allocation8], %s709
        %s711 = sand.u32 %s390, 1
        %s712 = smul.addr %s711, 16
        %s713 = scalar_lea.vmem [#allocation20], %s712
        %s714 = smul.u32 2, %s45
        %s715 = smul.u32 2, %s45
        %s716 = smul.u32 2, %s46
        %s717 = smul.u32 2, %s46
        %s718 = smul.u32 2, %s45
        %p720 = scmp.eq.s32.totalorder %s46, 0
        // Predicated region
        $region109: #{tpu_custom_call.1} parent=75 // pred_check
          %p721 = pneg %p720
        $region110: #{tpu_custom_call.1} parent=75 // pred_check_branch
          %723 = sbr.rel (%p721) target = $region112
        $region111: #{tpu_custom_call.1} parent=75 // pred_region
          %v724 = vld [vmem:[%s603] sm:$0xff]
          %v725 = vld [vmem:[%s603 + $0x8] sm:$0xff]
          %v726 = vld [vmem:[%s613] sm:$0xff]
          %v727 = vld [vmem:[%s613 + $0x8] sm:$0xff]
          %v728 = vadd.f32 %v724, %v726
          %v729 = vadd.f32 %v725, %v727
          %v730 = vpack.c.bf16 %v729, %v728
          %v731 = vld [vmem:[#allocation14] sm:$0xf]
          %v732 = vld [vmem:[#allocation14 + $0x4] sm:$0xf]
          %v733 = vld [vmem:[#allocation14 + $0x8] sm:$0xf]
          %v734 = vld [vmem:[#allocation14 + $0xc] sm:$0xf]
          %v735 = vld [vmem:[#allocation14 + $0x10] sm:$0xf]
          %v736 = vld [vmem:[#allocation14 + $0x14] sm:$0xf]
          %v737 = vld [vmem:[#allocation14 + $0x18] sm:$0xf]
          %v738 = vld [vmem:[#allocation14 + $0x1c] sm:$0xf]
          %v739 = vld [vmem:[#allocation14 + $0x20] sm:$0xf]
          %v740 = vld [vmem:[#allocation14 + $0x24] sm:$0xf]
          %v741 = vld [vmem:[#allocation14 + $0x28] sm:$0xf]
          %v742 = vld [vmem:[#allocation14 + $0x2c] sm:$0xf]
          %v743 = vld [vmem:[#allocation14 + $0x30] sm:$0xf]
          %v744 = vld [vmem:[#allocation14 + $0x34] sm:$0xf]
          %v745 = vld [vmem:[#allocation14 + $0x38] sm:$0xf]
          %v746 = vld [vmem:[#allocation14 + $0x3c] sm:$0xf]
          %v747 = vld [vmem:[%s8] sm:$0x1]
          %v749 = vperm.slane %v747, 0
          %v767 = vunpack.c.l.b16 %v731
          %v768 = vunpack.c.l.b16 %v732
          %v769 = vunpack.c.l.b16 %v733
          %v770 = vunpack.c.l.b16 %v734
          %v771 = vunpack.c.l.b16 %v735
          %v772 = vunpack.c.l.b16 %v736
          %v773 = vunpack.c.l.b16 %v737
          %v774 = vunpack.c.l.b16 %v738
          %v775 = vunpack.c.l.b16 %v739
          %v776 = vunpack.c.l.b16 %v740
          %v777 = vunpack.c.l.b16 %v741
          %v778 = vunpack.c.l.b16 %v742
          %v779 = vunpack.c.l.b16 %v743
          %v780 = vunpack.c.l.b16 %v744
          %v781 = vunpack.c.l.b16 %v745
          %v782 = vunpack.c.l.b16 %v746
          %v783 = vpack.c.b16 %v768, %v767
          %v784 = vpack.c.b16 %v770, %v769
          %v785 = vpack.c.b16 %v772, %v771
          %v786 = vpack.c.b16 %v774, %v773
          %v787 = vpack.c.b16 %v776, %v775
          %v788 = vpack.c.b16 %v778, %v777
          %v789 = vpack.c.b16 %v780, %v779
          %v790 = vpack.c.b16 %v782, %v781
          %799 = vmatpush.bf16.msra.mxu0 %v790
          %800 = vmatpush.bf16.msra.mxu0 %v789
          %801 = vmatpush.bf16.msra.mxu0 %v788
          %802 = vmatpush.bf16.msra.mxu0 %v787
          %803 = vmatpush.bf16.msra.mxu0 %v786
          %804 = vmatpush.bf16.msra.mxu0 %v785
          %805 = vmatpush.bf16.msra.mxu0 %v784
          %806 = vmatpush.bf16.msra.mxu0 %v783
          %807 = vmatmul.bf16.gmra.mxu0 %v730
          %v808 = vpop.f32.mrf.mxu0
          %v809 = vadd.f32 %v749, %v808
          %v810 = vpop.f32.mrf.mxu0
          %v811 = vadd.f32 %v749, %v810
          %812 = vdwg.mxu0
          %815 = vrot.lane.b32.xlu0 %v809, 96
          %v816 = vpop.permute.xlu0 %815
          %817 = vrot.lane.b32.xlu0 %v811, 96
          %v818 = vpop.permute.xlu0 %817
          %821 = vrot.lane.b32.xlu0 %v809, 64
          %v822 = vpop.permute.xlu0 %821
          %823 = vrot.lane.b32.xlu0 %v811, 64
          %v824 = vpop.permute.xlu0 %823
          %827 = vrot.lane.b32.xlu0 %v809, 32
          %v828 = vpop.permute.xlu0 %827
          %829 = vrot.lane.b32.xlu0 %v811, 32
          %v830 = vpop.permute.xlu0 %829
          %v833 = vrot.slane %v822, 4
          %vm834 = vcmask 1047556
          %v835 = vsel %vm834, %v833, %v809
          %v836 = vrot.slane %v809, 4
          %v837 = vsel %vm834, %v822, %v836
          %v839 = vunpack.c.l.s4 1983009808
          %v840 = vunpack.c.0.s8 %v839
          %v841 = vperm.slane %v835, %v840
          %v843 = vunpack.c.l.s4 1983009808
          %v844 = vunpack.c.0.s8 %v843
          %v845 = vperm.slane %v837, %v844
          %v846 = vrot.slane %v828, 4
          %v847 = vsel %vm834, %v846, %v816
          %v848 = vrot.slane %v816, 4
          %v849 = vsel %vm834, %v828, %v848
          %v851 = vunpack.c.l.s4 1983009808
          %v852 = vunpack.c.0.s8 %v851
          %v853 = vperm.slane %v847, %v852
          %v855 = vunpack.c.l.s4 1983009808
          %v856 = vunpack.c.0.s8 %v855
          %v857 = vperm.slane %v849, %v856
          %v858 = vrot.slane %v853, 4
          %v859 = vsel %vm834, %v858, %v841
          %v860 = vrot.slane %v841, 4
          %v861 = vsel %vm834, %v853, %v860
          %v863 = vunpack.c.l.s4 1934713408
          %v864 = vunpack.c.0.s8 %v863
          %v865 = vperm.slane %v859, %v864
          %v867 = vunpack.c.l.s4 1934713408
          %v868 = vunpack.c.0.s8 %v867
          %v869 = vperm.slane %v861, %v868
          %v870 = vrot.slane %v857, 4
          %v871 = vsel %vm834, %v870, %v845
          %v872 = vrot.slane %v845, 4
          %v873 = vsel %vm834, %v857, %v872
          %v875 = vunpack.c.l.s4 1934713408
          %v876 = vunpack.c.0.s8 %v875
          %v877 = vperm.slane %v871, %v876
          %v879 = vunpack.c.l.s4 1934713408
          %v880 = vunpack.c.0.s8 %v879
          %v881 = vperm.slane %v873, %v880
          %v882 = vrot.slane %v865, 4
          %v883 = vsel %vm834, 0.0, %v882
          %v884 = vrot.slane %v869, 4
          %v885 = vsel %vm834, 0.0, %v884
          %v886 = vrot.slane %v877, 4
          %v887 = vsel %vm834, 0.0, %v886
          %v888 = vrot.slane %v881, 4
          %v889 = vsel %vm834, 0.0, %v888
          %v890 = vrot.slane %v824, 4
          %v891 = vsel %vm834, %v890, %v811
          %v892 = vrot.slane %v811, 4
          %v893 = vsel %vm834, %v824, %v892
          %v895 = vunpack.c.l.s4 1983009808
          %v896 = vunpack.c.0.s8 %v895
          %v897 = vperm.slane %v891, %v896
          %v899 = vunpack.c.l.s4 1983009808
          %v900 = vunpack.c.0.s8 %v899
          %v901 = vperm.slane %v893, %v900
          %v902 = vrot.slane %v830, 4
          %v903 = vsel %vm834, %v902, %v818
          %v904 = vrot.slane %v818, 4
          %v905 = vsel %vm834, %v830, %v904
          %v907 = vunpack.c.l.s4 1983009808
          %v908 = vunpack.c.0.s8 %v907
          %v909 = vperm.slane %v903, %v908
          %v911 = vunpack.c.l.s4 1983009808
          %v912 = vunpack.c.0.s8 %v911
          %v913 = vperm.slane %v905, %v912
          %v914 = vrot.slane %v909, 4
          %v915 = vsel %vm834, %v914, %v897
          %v916 = vrot.slane %v897, 4
          %v917 = vsel %vm834, %v909, %v916
          %v919 = vunpack.c.l.s4 1934713408
          %v920 = vunpack.c.0.s8 %v919
          %v921 = vperm.slane %v915, %v920
          %v923 = vunpack.c.l.s4 1934713408
          %v924 = vunpack.c.0.s8 %v923
          %v925 = vperm.slane %v917, %v924
          %v926 = vrot.slane %v913, 4
          %v927 = vsel %vm834, %v926, %v901
          %v928 = vrot.slane %v901, 4
          %v929 = vsel %vm834, %v913, %v928
          %v931 = vunpack.c.l.s4 1934713408
          %v932 = vunpack.c.0.s8 %v931
          %v933 = vperm.slane %v927, %v932
          %v935 = vunpack.c.l.s4 1934713408
          %v936 = vunpack.c.0.s8 %v935
          %v937 = vperm.slane %v929, %v936
          %v938 = vrot.slane %v921, 4
          %v939 = vsel %vm834, 0.0, %v938
          %v940 = vrot.slane %v925, 4
          %v941 = vsel %vm834, 0.0, %v940
          %v942 = vrot.slane %v933, 4
          %v943 = vsel %vm834, 0.0, %v942
          %v944 = vrot.slane %v937, 4
          %v945 = vsel %vm834, 0.0, %v944
          %v946 = vsel %vm834, %v884, %v865
          %v948 = vunpack.c.l.s4 1983009808
          %v949 = vunpack.c.0.s8 %v948
          %v950 = vperm.slane %v946, %v949
          %v951 = vrot.slane %v885, 4
          %v952 = vsel %vm834, %v951, %v883
          %v954 = vunpack.c.l.s4 1983009808
          %v955 = vunpack.c.0.s8 %v954
          %v956 = vperm.slane %v952, %v955
          %v957 = vsel %vm834, %v888, %v877
          %v959 = vunpack.c.l.s4 1983009808
          %v960 = vunpack.c.0.s8 %v959
          %v961 = vperm.slane %v957, %v960
          %v962 = vrot.slane %v889, 4
          %v963 = vsel %vm834, %v962, %v887
          %v965 = vunpack.c.l.s4 1983009808
          %v966 = vunpack.c.0.s8 %v965
          %v967 = vperm.slane %v963, %v966
          %v968 = vrot.slane %v956, 4
          %v969 = vsel %vm834, %v968, %v950
          %v970 = vrot.slane %v950, 4
          %v971 = vsel %vm834, %v956, %v970
          %v973 = vunpack.c.l.s4 1934713408
          %v974 = vunpack.c.0.s8 %v973
          %v975 = vperm.slane %v969, %v974
          %v977 = vunpack.c.l.s4 1934713408
          %v978 = vunpack.c.0.s8 %v977
          %v979 = vperm.slane %v971, %v978
          %v980 = vrot.slane %v967, 4
          %v981 = vsel %vm834, %v980, %v961
          %v982 = vrot.slane %v961, 4
          %v983 = vsel %vm834, %v967, %v982
          %v985 = vunpack.c.l.s4 1934713408
          %v986 = vunpack.c.0.s8 %v985
          %v987 = vperm.slane %v981, %v986
          %v989 = vunpack.c.l.s4 1934713408
          %v990 = vunpack.c.0.s8 %v989
          %v991 = vperm.slane %v983, %v990
          %v992 = vrot.slane %v987, 4
          %v993 = vsel %vm834, %v992, %v975
          %v994 = vrot.slane %v975, 4
          %v995 = vsel %vm834, %v987, %v994
          %v996 = vrot.slane %v991, 4
          %v997 = vsel %vm834, %v996, %v979
          %v998 = vrot.slane %v979, 4
          %v999 = vsel %vm834, %v991, %v998
          %v1000 = vsel %vm834, %v940, %v921
          %v1002 = vunpack.c.l.s4 1983009808
          %v1003 = vunpack.c.0.s8 %v1002
          %v1004 = vperm.slane %v1000, %v1003
          %v1005 = vrot.slane %v941, 4
          %v1006 = vsel %vm834, %v1005, %v939
          %v1008 = vunpack.c.l.s4 1983009808
          %v1009 = vunpack.c.0.s8 %v1008
          %v1010 = vperm.slane %v1006, %v1009
          %v1011 = vsel %vm834, %v944, %v933
          %v1013 = vunpack.c.l.s4 1983009808
          %v1014 = vunpack.c.0.s8 %v1013
          %v1015 = vperm.slane %v1011, %v1014
          %v1016 = vrot.slane %v945, 4
          %v1017 = vsel %vm834, %v1016, %v943
          %v1019 = vunpack.c.l.s4 1983009808
          %v1020 = vunpack.c.0.s8 %v1019
          %v1021 = vperm.slane %v1017, %v1020
          %v1022 = vrot.slane %v1010, 4
          %v1023 = vsel %vm834, %v1022, %v1004
          %v1024 = vrot.slane %v1004, 4
          %v1025 = vsel %vm834, %v1010, %v1024
          %v1027 = vunpack.c.l.s4 1934713408
          %v1028 = vunpack.c.0.s8 %v1027
          %v1029 = vperm.slane %v1023, %v1028
          %v1031 = vunpack.c.l.s4 1934713408
          %v1032 = vunpack.c.0.s8 %v1031
          %v1033 = vperm.slane %v1025, %v1032
          %v1034 = vrot.slane %v1021, 4
          %v1035 = vsel %vm834, %v1034, %v1015
          %v1036 = vrot.slane %v1015, 4
          %v1037 = vsel %vm834, %v1021, %v1036
          %v1039 = vunpack.c.l.s4 1934713408
          %v1040 = vunpack.c.0.s8 %v1039
          %v1041 = vperm.slane %v1035, %v1040
          %v1043 = vunpack.c.l.s4 1934713408
          %v1044 = vunpack.c.0.s8 %v1043
          %v1045 = vperm.slane %v1037, %v1044
          %v1046 = vrot.slane %v1041, 4
          %v1047 = vsel %vm834, %v1046, %v1029
          %v1048 = vrot.slane %v1029, 4
          %v1049 = vsel %vm834, %v1041, %v1048
          %v1050 = vrot.slane %v1045, 4
          %v1051 = vsel %vm834, %v1050, %v1033
          %v1052 = vrot.slane %v1033, 4
          %v1053 = vsel %vm834, %v1045, %v1052
          %v1054 = vpack.c.bf16 %v993, %v993
          %v1055 = vpack.c.bf16 %v1047, %v1047
          %v1056 = vpack.c.bf16 %v995, %v995
          %v1057 = vpack.c.bf16 %v1049, %v1049
          %v1058 = vpack.c.bf16 %v997, %v997
          %v1059 = vpack.c.bf16 %v1051, %v1051
          %v1060 = vpack.c.bf16 %v999, %v999
          %v1061 = vpack.c.bf16 %v1053, %v1053
          %vm1062 = vcmask 257024
          %1063 = vst.msk [vmem:[#allocation2] sm:$0xf] %vm1062, %v1054
          %1064 = vst.msk [vmem:[#allocation2 + $0x4] sm:$0xf] %vm1062, %v1055
          %1065 = vst.msk [vmem:[#allocation2 + $0x8] sm:$0xf] %vm1062, %v1056
          %1066 = vst.msk [vmem:[#allocation2 + $0xc] sm:$0xf] %vm1062, %v1057
          %1067 = vst.msk [vmem:[#allocation2 + $0x10] sm:$0xf] %vm1062, %v1058
          %1068 = vst.msk [vmem:[#allocation2 + $0x14] sm:$0xf] %vm1062, %v1059
          %1069 = vst.msk [vmem:[#allocation2 + $0x18] sm:$0xf] %vm1062, %v1060
          %1070 = vst.msk [vmem:[#allocation2 + $0x1c] sm:$0xf] %vm1062, %v1061
          %vm1071 = vcmask 7168
          %1072 = vst.msk [vmem:[#allocation3] sm:$0xff] %vm1071, -inf
          %1073 = vst.msk [vmem:[#allocation3 + $0x8] sm:$0xff] %vm1071, -inf
          %1074 = vst.msk [vmem:[#allocation3 + $0x10] sm:$0xff] %vm1071, -inf
          %1075 = vst.msk [vmem:[#allocation3 + $0x18] sm:$0xff] %vm1071, -inf
          %1076 = vst.msk [vmem:[#allocation3 + $0x20] sm:$0xff] %vm1071, -inf
          %1077 = vst.msk [vmem:[#allocation3 + $0x28] sm:$0xff] %vm1071, -inf
          %1078 = vst.msk [vmem:[#allocation3 + $0x30] sm:$0xff] %vm1071, -inf
          %1079 = vst.msk [vmem:[#allocation3 + $0x38] sm:$0xff] %vm1071, -inf
          %1080 = vst.msk [vmem:[#allocation4] sm:$0xff] %vm1071, 0.0
          %1081 = vst.msk [vmem:[#allocation4 + $0x8] sm:$0xff] %vm1071, 0.0
          %1082 = vst.msk [vmem:[#allocation4 + $0x10] sm:$0xff] %vm1071, 0.0
          %1083 = vst.msk [vmem:[#allocation4 + $0x18] sm:$0xff] %vm1071, 0.0
          %1084 = vst.msk [vmem:[#allocation4 + $0x20] sm:$0xff] %vm1071, 0.0
          %1085 = vst.msk [vmem:[#allocation4 + $0x28] sm:$0xff] %vm1071, 0.0
          %1086 = vst.msk [vmem:[#allocation4 + $0x30] sm:$0xff] %vm1071, 0.0
          %1087 = vst.msk [vmem:[#allocation4 + $0x38] sm:$0xff] %vm1071, 0.0
          %vm1088 = vcmask 261120
          %1089 = vst.msk [vmem:[#allocation5] sm:$0xff] %vm1088, 0.0
          %1090 = vst.msk [vmem:[#allocation5 + $0x8] sm:$0xff] %vm1088, 0.0
          %1091 = vst.msk [vmem:[#allocation5 + $0x10] sm:$0xff] %vm1088, 0.0
          %1092 = vst.msk [vmem:[#allocation5 + $0x18] sm:$0xff] %vm1088, 0.0
          %1093 = vst.msk [vmem:[#allocation5 + $0x20] sm:$0xff] %vm1088, 0.0
          %1094 = vst.msk [vmem:[#allocation5 + $0x28] sm:$0xff] %vm1088, 0.0
          %1095 = vst.msk [vmem:[#allocation5 + $0x30] sm:$0xff] %vm1088, 0.0
          %1096 = vst.msk [vmem:[#allocation5 + $0x38] sm:$0xff] %vm1088, 0.0
        $region112: #{tpu_custom_call.1} parent=75 // pred_fallthru
          _
        %v1097 = vld [vmem:[%s623] sm:$0xf]
        %v1098 = vld [vmem:[%s623 + $0x4] sm:$0xf]
        %v1099 = vld [vmem:[%s633] sm:$0xf]
        %v1100 = vld [vmem:[%s633 + $0x4] sm:$0xf]
        %v1101 = vunpack.c.l.bf16 %v1097
        %v1102 = vunpack.c.l.bf16 %v1098
        %v1103 = vunpack.c.l.bf16 %v1099
        %v1104 = vunpack.c.l.bf16 %v1100
        %v1105 = vadd.f32 %v1101, %v1103
        %v1106 = vadd.f32 %v1102, %v1104
        %v1107 = vpack.c.bf16 %v1106, %v1105
        %v1108 = vld [vmem:[#allocation15] sm:$0xf]
        %v1109 = vld [vmem:[#allocation15 + $0x4] sm:$0xf]
        %v1110 = vld [vmem:[#allocation15 + $0x8] sm:$0xf]
        %v1111 = vld [vmem:[#allocation15 + $0xc] sm:$0xf]
        %v1112 = vld [vmem:[#allocation15 + $0x10] sm:$0xf]
        %v1113 = vld [vmem:[#allocation15 + $0x14] sm:$0xf]
        %v1114 = vld [vmem:[#allocation15 + $0x18] sm:$0xf]
        %v1115 = vld [vmem:[#allocation15 + $0x1c] sm:$0xf]
        %v1116 = vld [vmem:[#allocation15 + $0x20] sm:$0xf]
        %v1117 = vld [vmem:[#allocation15 + $0x24] sm:$0xf]
        %v1118 = vld [vmem:[#allocation15 + $0x28] sm:$0xf]
        %v1119 = vld [vmem:[#allocation15 + $0x2c] sm:$0xf]
        %v1120 = vld [vmem:[#allocation15 + $0x30] sm:$0xf]
        %v1121 = vld [vmem:[#allocation15 + $0x34] sm:$0xf]
        %v1122 = vld [vmem:[#allocation15 + $0x38] sm:$0xf]
        %v1123 = vld [vmem:[#allocation15 + $0x3c] sm:$0xf]
        %v1124 = vld [vmem:[%s9] sm:$0x1]
        %v1126 = vperm.slane %v1124, 0
        %v1144 = vunpack.c.l.b16 %v1108
        %v1145 = vunpack.c.l.b16 %v1109
        %v1146 = vunpack.c.l.b16 %v1110
        %v1147 = vunpack.c.l.b16 %v1111
        %v1148 = vunpack.c.l.b16 %v1112
        %v1149 = vunpack.c.l.b16 %v1113
        %v1150 = vunpack.c.l.b16 %v1114
        %v1151 = vunpack.c.l.b16 %v1115
        %v1152 = vunpack.c.l.b16 %v1116
        %v1153 = vunpack.c.l.b16 %v1117
        %v1154 = vunpack.c.l.b16 %v1118
        %v1155 = vunpack.c.l.b16 %v1119
        %v1156 = vunpack.c.l.b16 %v1120
        %v1157 = vunpack.c.l.b16 %v1121
        %v1158 = vunpack.c.l.b16 %v1122
        %v1159 = vunpack.c.l.b16 %v1123
        %v1160 = vpack.c.b16 %v1145, %v1144
        %v1161 = vpack.c.b16 %v1147, %v1146
        %v1162 = vpack.c.b16 %v1149, %v1148
        %v1163 = vpack.c.b16 %v1151, %v1150
        %v1164 = vpack.c.b16 %v1153, %v1152
        %v1165 = vpack.c.b16 %v1155, %v1154
        %v1166 = vpack.c.b16 %v1157, %v1156
        %v1167 = vpack.c.b16 %v1159, %v1158
        %1176 = vmatpush.bf16.msra.mxu0 %v1167
        %1177 = vmatpush.bf16.msra.mxu0 %v1166
        %1178 = vmatpush.bf16.msra.mxu0 %v1165
        %1179 = vmatpush.bf16.msra.mxu0 %v1164
        %1180 = vmatpush.bf16.msra.mxu0 %v1163
        %1181 = vmatpush.bf16.msra.mxu0 %v1162
        %1182 = vmatpush.bf16.msra.mxu0 %v1161
        %1183 = vmatpush.bf16.msra.mxu0 %v1160
        %1184 = vmatmul.bf16.gmra.mxu0 %v1107
        %v1185 = vpop.f32.mrf.mxu0
        %v1186 = vadd.f32 %v1126, %v1185
        %v1187 = vpop.f32.mrf.mxu0
        %v1188 = vadd.f32 %v1126, %v1187
        %1189 = vdwg.mxu0
        %v1190 = vld [vmem:[#allocation17] sm:$0xf]
        %v1191 = vld [vmem:[#allocation17 + $0x4] sm:$0xf]
        %v1192 = vld [vmem:[#allocation17 + $0x8] sm:$0xf]
        %v1193 = vld [vmem:[#allocation17 + $0xc] sm:$0xf]
        %v1194 = vld [vmem:[#allocation17 + $0x10] sm:$0xf]
        %v1195 = vld [vmem:[#allocation17 + $0x14] sm:$0xf]
        %v1196 = vld [vmem:[#allocation17 + $0x18] sm:$0xf]
        %v1197 = vld [vmem:[#allocation17 + $0x1c] sm:$0xf]
        %v1198 = vld [vmem:[#allocation17 + $0x20] sm:$0xf]
        %v1199 = vld [vmem:[#allocation17 + $0x24] sm:$0xf]
        %v1200 = vld [vmem:[#allocation17 + $0x28] sm:$0xf]
        %v1201 = vld [vmem:[#allocation17 + $0x2c] sm:$0xf]
        %v1202 = vld [vmem:[#allocation17 + $0x30] sm:$0xf]
        %v1203 = vld [vmem:[#allocation17 + $0x34] sm:$0xf]
        %v1204 = vld [vmem:[#allocation17 + $0x38] sm:$0xf]
        %v1205 = vld [vmem:[#allocation17 + $0x3c] sm:$0xf]
        %v1206 = vld [vmem:[%s10] sm:$0x1]
        %v1208 = vperm.slane %v1206, 0
        %v1212 = vunpack.c.l.b16 %v1097
        %v1213 = vunpack.c.l.b16 %v1098
        %v1214 = vpack.c.b16 %v1213, %v1212
        %v1232 = vunpack.c.l.b16 %v1190
        %v1233 = vunpack.c.l.b16 %v1191
        %v1234 = vunpack.c.l.b16 %v1192
        %v1235 = vunpack.c.l.b16 %v1193
        %v1236 = vunpack.c.l.b16 %v1194
        %v1237 = vunpack.c.l.b16 %v1195
        %v1238 = vunpack.c.l.b16 %v1196
        %v1239 = vunpack.c.l.b16 %v1197
        %v1240 = vunpack.c.l.b16 %v1198
        %v1241 = vunpack.c.l.b16 %v1199
        %v1242 = vunpack.c.l.b16 %v1200
        %v1243 = vunpack.c.l.b16 %v1201
        %v1244 = vunpack.c.l.b16 %v1202
        %v1245 = vunpack.c.l.b16 %v1203
        %v1246 = vunpack.c.l.b16 %v1204
        %v1247 = vunpack.c.l.b16 %v1205
        %v1248 = vpack.c.b16 %v1233, %v1232
        %v1249 = vpack.c.b16 %v1235, %v1234
        %v1250 = vpack.c.b16 %v1237, %v1236
        %v1251 = vpack.c.b16 %v1239, %v1238
        %v1252 = vpack.c.b16 %v1241, %v1240
        %v1253 = vpack.c.b16 %v1243, %v1242
        %v1254 = vpack.c.b16 %v1245, %v1244
        %v1255 = vpack.c.b16 %v1247, %v1246
        %1264 = vmatpush.bf16.msra.mxu0 %v1255
        %1265 = vmatpush.bf16.msra.mxu0 %v1254
        %1266 = vmatpush.bf16.msra.mxu0 %v1253
        %1267 = vmatpush.bf16.msra.mxu0 %v1252
        %1268 = vmatpush.bf16.msra.mxu0 %v1251
        %1269 = vmatpush.bf16.msra.mxu0 %v1250
        %1270 = vmatpush.bf16.msra.mxu0 %v1249
        %1271 = vmatpush.bf16.msra.mxu0 %v1248
        %1272 = vmatmul.bf16.gmra.mxu0 %v1214
        %v1273 = vpop.f32.mrf.mxu0
        %v1274 = vadd.f32 %v1208, %v1273
        %v1275 = vpop.f32.mrf.mxu0
        %v1276 = vadd.f32 %v1208, %v1275
        %1277 = vdwg.mxu0
        %1280 = vrot.lane.b32.xlu0 %v1186, 96
        %v1281 = vpop.permute.xlu0 %1280
        %1282 = vrot.lane.b32.xlu0 %v1188, 96
        %v1283 = vpop.permute.xlu0 %1282
        %1286 = vrot.lane.b32.xlu0 %v1186, 64
        %v1287 = vpop.permute.xlu0 %1286
        %1288 = vrot.lane.b32.xlu0 %v1188, 64
        %v1289 = vpop.permute.xlu0 %1288
        %1292 = vrot.lane.b32.xlu0 %v1186, 32
        %v1293 = vpop.permute.xlu0 %1292
        %1294 = vrot.lane.b32.xlu0 %v1188, 32
        %v1295 = vpop.permute.xlu0 %1294
        %v1298 = vrot.slane %v1287, 4
        %vm1299 = vcmask 1047556
        %v1300 = vsel %vm1299, %v1298, %v1186
        %v1301 = vrot.slane %v1186, 4
        %v1302 = vsel %vm1299, %v1287, %v1301
        %v1304 = vunpack.c.l.s4 1983009808
        %v1305 = vunpack.c.0.s8 %v1304
        %v1306 = vperm.slane %v1300, %v1305
        %v1308 = vunpack.c.l.s4 1983009808
        %v1309 = vunpack.c.0.s8 %v1308
        %v1310 = vperm.slane %v1302, %v1309
        %v1311 = vrot.slane %v1293, 4
        %v1312 = vsel %vm1299, %v1311, %v1281
        %v1313 = vrot.slane %v1281, 4
        %v1314 = vsel %vm1299, %v1293, %v1313
        %v1316 = vunpack.c.l.s4 1983009808
        %v1317 = vunpack.c.0.s8 %v1316
        %v1318 = vperm.slane %v1312, %v1317
        %v1320 = vunpack.c.l.s4 1983009808
        %v1321 = vunpack.c.0.s8 %v1320
        %v1322 = vperm.slane %v1314, %v1321
        %v1323 = vrot.slane %v1318, 4
        %v1324 = vsel %vm1299, %v1323, %v1306
        %v1325 = vrot.slane %v1306, 4
        %v1326 = vsel %vm1299, %v1318, %v1325
        %v1328 = vunpack.c.l.s4 1934713408
        %v1329 = vunpack.c.0.s8 %v1328
        %v1330 = vperm.slane %v1324, %v1329
        %v1332 = vunpack.c.l.s4 1934713408
        %v1333 = vunpack.c.0.s8 %v1332
        %v1334 = vperm.slane %v1326, %v1333
        %v1335 = vrot.slane %v1322, 4
        %v1336 = vsel %vm1299, %v1335, %v1310
        %v1337 = vrot.slane %v1310, 4
        %v1338 = vsel %vm1299, %v1322, %v1337
        %v1340 = vunpack.c.l.s4 1934713408
        %v1341 = vunpack.c.0.s8 %v1340
        %v1342 = vperm.slane %v1336, %v1341
        %v1344 = vunpack.c.l.s4 1934713408
        %v1345 = vunpack.c.0.s8 %v1344
        %v1346 = vperm.slane %v1338, %v1345
        %v1347 = vrot.slane %v1330, 4
        %v1348 = vsel %vm1299, 0.0, %v1347
        %v1349 = vrot.slane %v1334, 4
        %v1350 = vsel %vm1299, 0.0, %v1349
        %v1351 = vrot.slane %v1342, 4
        %v1352 = vsel %vm1299, 0.0, %v1351
        %v1353 = vrot.slane %v1346, 4
        %v1354 = vsel %vm1299, 0.0, %v1353
        %v1355 = vrot.slane %v1289, 4
        %v1356 = vsel %vm1299, %v1355, %v1188
        %v1357 = vrot.slane %v1188, 4
        %v1358 = vsel %vm1299, %v1289, %v1357
        %v1360 = vunpack.c.l.s4 1983009808
        %v1361 = vunpack.c.0.s8 %v1360
        %v1362 = vperm.slane %v1356, %v1361
        %v1364 = vunpack.c.l.s4 1983009808
        %v1365 = vunpack.c.0.s8 %v1364
        %v1366 = vperm.slane %v1358, %v1365
        %v1367 = vrot.slane %v1295, 4
        %v1368 = vsel %vm1299, %v1367, %v1283
        %v1369 = vrot.slane %v1283, 4
        %v1370 = vsel %vm1299, %v1295, %v1369
        %v1372 = vunpack.c.l.s4 1983009808
        %v1373 = vunpack.c.0.s8 %v1372
        %v1374 = vperm.slane %v1368, %v1373
        %v1376 = vunpack.c.l.s4 1983009808
        %v1377 = vunpack.c.0.s8 %v1376
        %v1378 = vperm.slane %v1370, %v1377
        %v1379 = vrot.slane %v1374, 4
        %v1380 = vsel %vm1299, %v1379, %v1362
        %v1381 = vrot.slane %v1362, 4
        %v1382 = vsel %vm1299, %v1374, %v1381
        %v1384 = vunpack.c.l.s4 1934713408
        %v1385 = vunpack.c.0.s8 %v1384
        %v1386 = vperm.slane %v1380, %v1385
        %v1388 = vunpack.c.l.s4 1934713408
        %v1389 = vunpack.c.0.s8 %v1388
        %v1390 = vperm.slane %v1382, %v1389
        %v1391 = vrot.slane %v1378, 4
        %v1392 = vsel %vm1299, %v1391, %v1366
        %v1393 = vrot.slane %v1366, 4
        %v1394 = vsel %vm1299, %v1378, %v1393
        %v1396 = vunpack.c.l.s4 1934713408
        %v1397 = vunpack.c.0.s8 %v1396
        %v1398 = vperm.slane %v1392, %v1397
        %v1400 = vunpack.c.l.s4 1934713408
        %v1401 = vunpack.c.0.s8 %v1400
        %v1402 = vperm.slane %v1394, %v1401
        %v1403 = vrot.slane %v1386, 4
        %v1404 = vsel %vm1299, 0.0, %v1403
        %v1405 = vrot.slane %v1390, 4
        %v1406 = vsel %vm1299, 0.0, %v1405
        %v1407 = vrot.slane %v1398, 4
        %v1408 = vsel %vm1299, 0.0, %v1407
        %v1409 = vrot.slane %v1402, 4
        %v1410 = vsel %vm1299, 0.0, %v1409
        %v1411 = vsel %vm1299, %v1349, %v1330
        %v1413 = vunpack.c.l.s4 1983009808
        %v1414 = vunpack.c.0.s8 %v1413
        %v1415 = vperm.slane %v1411, %v1414
        %v1416 = vrot.slane %v1350, 4
        %v1417 = vsel %vm1299, %v1416, %v1348
        %v1419 = vunpack.c.l.s4 1983009808
        %v1420 = vunpack.c.0.s8 %v1419
        %v1421 = vperm.slane %v1417, %v1420
        %v1422 = vsel %vm1299, %v1353, %v1342
        %v1424 = vunpack.c.l.s4 1983009808
        %v1425 = vunpack.c.0.s8 %v1424
        %v1426 = vperm.slane %v1422, %v1425
        %v1427 = vrot.slane %v1354, 4
        %v1428 = vsel %vm1299, %v1427, %v1352
        %v1430 = vunpack.c.l.s4 1983009808
        %v1431 = vunpack.c.0.s8 %v1430
        %v1432 = vperm.slane %v1428, %v1431
        %v1433 = vrot.slane %v1421, 4
        %v1434 = vsel %vm1299, %v1433, %v1415
        %v1435 = vrot.slane %v1415, 4
        %v1436 = vsel %vm1299, %v1421, %v1435
        %v1438 = vunpack.c.l.s4 1934713408
        %v1439 = vunpack.c.0.s8 %v1438
        %v1440 = vperm.slane %v1434, %v1439
        %v1442 = vunpack.c.l.s4 1934713408
        %v1443 = vunpack.c.0.s8 %v1442
        %v1444 = vperm.slane %v1436, %v1443
        %v1445 = vrot.slane %v1432, 4
        %v1446 = vsel %vm1299, %v1445, %v1426
        %v1447 = vrot.slane %v1426, 4
        %v1448 = vsel %vm1299, %v1432, %v1447
        %v1450 = vunpack.c.l.s4 1934713408
        %v1451 = vunpack.c.0.s8 %v1450
        %v1452 = vperm.slane %v1446, %v1451
        %v1454 = vunpack.c.l.s4 1934713408
        %v1455 = vunpack.c.0.s8 %v1454
        %v1456 = vperm.slane %v1448, %v1455
        %v1457 = vrot.slane %v1452, 4
        %v1458 = vsel %vm1299, %v1457, %v1440
        %v1459 = vrot.slane %v1440, 4
        %v1460 = vsel %vm1299, %v1452, %v1459
        %v1461 = vrot.slane %v1456, 4
        %v1462 = vsel %vm1299, %v1461, %v1444
        %v1463 = vrot.slane %v1444, 4
        %v1464 = vsel %vm1299, %v1456, %v1463
        %v1465 = vsel %vm1299, %v1405, %v1386
        %v1467 = vunpack.c.l.s4 1983009808
        %v1468 = vunpack.c.0.s8 %v1467
        %v1469 = vperm.slane %v1465, %v1468
        %v1470 = vrot.slane %v1406, 4
        %v1471 = vsel %vm1299, %v1470, %v1404
        %v1473 = vunpack.c.l.s4 1983009808
        %v1474 = vunpack.c.0.s8 %v1473
        %v1475 = vperm.slane %v1471, %v1474
        %v1476 = vsel %vm1299, %v1409, %v1398
        %v1478 = vunpack.c.l.s4 1983009808
        %v1479 = vunpack.c.0.s8 %v1478
        %v1480 = vperm.slane %v1476, %v1479
        %v1481 = vrot.slane %v1410, 4
        %v1482 = vsel %vm1299, %v1481, %v1408
        %v1484 = vunpack.c.l.s4 1983009808
        %v1485 = vunpack.c.0.s8 %v1484
        %v1486 = vperm.slane %v1482, %v1485
        %v1487 = vrot.slane %v1475, 4
        %v1488 = vsel %vm1299, %v1487, %v1469
        %v1489 = vrot.slane %v1469, 4
        %v1490 = vsel %vm1299, %v1475, %v1489
        %v1492 = vunpack.c.l.s4 1934713408
        %v1493 = vunpack.c.0.s8 %v1492
        %v1494 = vperm.slane %v1488, %v1493
        %v1496 = vunpack.c.l.s4 1934713408
        %v1497 = vunpack.c.0.s8 %v1496
        %v1498 = vperm.slane %v1490, %v1497
        %v1499 = vrot.slane %v1486, 4
        %v1500 = vsel %vm1299, %v1499, %v1480
        %v1501 = vrot.slane %v1480, 4
        %v1502 = vsel %vm1299, %v1486, %v1501
        %v1504 = vunpack.c.l.s4 1934713408
        %v1505 = vunpack.c.0.s8 %v1504
        %v1506 = vperm.slane %v1500, %v1505
        %v1508 = vunpack.c.l.s4 1934713408
        %v1509 = vunpack.c.0.s8 %v1508
        %v1510 = vperm.slane %v1502, %v1509
        %v1511 = vrot.slane %v1506, 4
        %v1512 = vsel %vm1299, %v1511, %v1494
        %v1513 = vrot.slane %v1494, 4
        %v1514 = vsel %vm1299, %v1506, %v1513
        %v1515 = vrot.slane %v1510, 4
        %v1516 = vsel %vm1299, %v1515, %v1498
        %v1517 = vrot.slane %v1498, 4
        %v1518 = vsel %vm1299, %v1510, %v1517
        %v1519 = vpack.c.bf16 %v1458, %v1458
        %v1520 = vpack.c.bf16 %v1512, %v1512
        %v1521 = vpack.c.bf16 %v1460, %v1460
        %v1522 = vpack.c.bf16 %v1514, %v1514
        %v1523 = vpack.c.bf16 %v1462, %v1462
        %v1524 = vpack.c.bf16 %v1516, %v1516
        %v1525 = vpack.c.bf16 %v1464, %v1464
        %v1526 = vpack.c.bf16 %v1518, %v1518
        %1529 = vrot.lane.b32.xlu0 %v1274, 96
        %v1530 = vpop.permute.xlu0 %1529
        %1531 = vrot.lane.b32.xlu0 %v1276, 96
        %v1532 = vpop.permute.xlu0 %1531
        %1535 = vrot.lane.b32.xlu0 %v1274, 64
        %v1536 = vpop.permute.xlu0 %1535
        %1537 = vrot.lane.b32.xlu0 %v1276, 64
        %v1538 = vpop.permute.xlu0 %1537
        %1541 = vrot.lane.b32.xlu0 %v1274, 32
        %v1542 = vpop.permute.xlu0 %1541
        %1543 = vrot.lane.b32.xlu0 %v1276, 32
        %v1544 = vpop.permute.xlu0 %1543
        %v1547 = vrot.slane %v1536, 4
        %v1548 = vsel %vm1299, %v1547, %v1274
        %v1549 = vrot.slane %v1274, 4
        %v1550 = vsel %vm1299, %v1536, %v1549
        %v1552 = vunpack.c.l.s4 1983009808
        %v1553 = vunpack.c.0.s8 %v1552
        %v1554 = vperm.slane %v1548, %v1553
        %v1556 = vunpack.c.l.s4 1983009808
        %v1557 = vunpack.c.0.s8 %v1556
        %v1558 = vperm.slane %v1550, %v1557
        %v1559 = vrot.slane %v1542, 4
        %v1560 = vsel %vm1299, %v1559, %v1530
        %v1561 = vrot.slane %v1530, 4
        %v1562 = vsel %vm1299, %v1542, %v1561
        %v1564 = vunpack.c.l.s4 1983009808
        %v1565 = vunpack.c.0.s8 %v1564
        %v1566 = vperm.slane %v1560, %v1565
        %v1568 = vunpack.c.l.s4 1983009808
        %v1569 = vunpack.c.0.s8 %v1568
        %v1570 = vperm.slane %v1562, %v1569
        %v1571 = vrot.slane %v1566, 4
        %v1572 = vsel %vm1299, %v1571, %v1554
        %v1573 = vrot.slane %v1554, 4
        %v1574 = vsel %vm1299, %v1566, %v1573
        %v1576 = vunpack.c.l.s4 1934713408
        %v1577 = vunpack.c.0.s8 %v1576
        %v1578 = vperm.slane %v1572, %v1577
        %v1580 = vunpack.c.l.s4 1934713408
        %v1581 = vunpack.c.0.s8 %v1580
        %v1582 = vperm.slane %v1574, %v1581
        %v1583 = vrot.slane %v1570, 4
        %v1584 = vsel %vm1299, %v1583, %v1558
        %v1585 = vrot.slane %v1558, 4
        %v1586 = vsel %vm1299, %v1570, %v1585
        %v1588 = vunpack.c.l.s4 1934713408
        %v1589 = vunpack.c.0.s8 %v1588
        %v1590 = vperm.slane %v1584, %v1589
        %v1592 = vunpack.c.l.s4 1934713408
        %v1593 = vunpack.c.0.s8 %v1592
        %v1594 = vperm.slane %v1586, %v1593
        %v1595 = vrot.slane %v1578, 4
        %v1596 = vsel %vm1299, 0.0, %v1595
        %v1597 = vrot.slane %v1582, 4
        %v1598 = vsel %vm1299, 0.0, %v1597
        %v1599 = vrot.slane %v1590, 4
        %v1600 = vsel %vm1299, 0.0, %v1599
        %v1601 = vrot.slane %v1594, 4
        %v1602 = vsel %vm1299, 0.0, %v1601
        %v1603 = vrot.slane %v1538, 4
        %v1604 = vsel %vm1299, %v1603, %v1276
        %v1605 = vrot.slane %v1276, 4
        %v1606 = vsel %vm1299, %v1538, %v1605
        %v1608 = vunpack.c.l.s4 1983009808
        %v1609 = vunpack.c.0.s8 %v1608
        %v1610 = vperm.slane %v1604, %v1609
        %v1612 = vunpack.c.l.s4 1983009808
        %v1613 = vunpack.c.0.s8 %v1612
        %v1614 = vperm.slane %v1606, %v1613
        %v1615 = vrot.slane %v1544, 4
        %v1616 = vsel %vm1299, %v1615, %v1532
        %v1617 = vrot.slane %v1532, 4
        %v1618 = vsel %vm1299, %v1544, %v1617
        %v1620 = vunpack.c.l.s4 1983009808
        %v1621 = vunpack.c.0.s8 %v1620
        %v1622 = vperm.slane %v1616, %v1621
        %v1624 = vunpack.c.l.s4 1983009808
        %v1625 = vunpack.c.0.s8 %v1624
        %v1626 = vperm.slane %v1618, %v1625
        %v1627 = vrot.slane %v1622, 4
        %v1628 = vsel %vm1299, %v1627, %v1610
        %v1629 = vrot.slane %v1610, 4
        %v1630 = vsel %vm1299, %v1622, %v1629
        %v1632 = vunpack.c.l.s4 1934713408
        %v1633 = vunpack.c.0.s8 %v1632
        %v1634 = vperm.slane %v1628, %v1633
        %v1636 = vunpack.c.l.s4 1934713408
        %v1637 = vunpack.c.0.s8 %v1636
        %v1638 = vperm.slane %v1630, %v1637
        %v1639 = vrot.slane %v1626, 4
        %v1640 = vsel %vm1299, %v1639, %v1614
        %v1641 = vrot.slane %v1614, 4
        %v1642 = vsel %vm1299, %v1626, %v1641
        %v1644 = vunpack.c.l.s4 1934713408
        %v1645 = vunpack.c.0.s8 %v1644
        %v1646 = vperm.slane %v1640, %v1645
        %v1648 = vunpack.c.l.s4 1934713408
        %v1649 = vunpack.c.0.s8 %v1648
        %v1650 = vperm.slane %v1642, %v1649
        %v1651 = vrot.slane %v1634, 4
        %v1652 = vsel %vm1299, 0.0, %v1651
        %v1653 = vrot.slane %v1638, 4
        %v1654 = vsel %vm1299, 0.0, %v1653
        %v1655 = vrot.slane %v1646, 4
        %v1656 = vsel %vm1299, 0.0, %v1655
        %v1657 = vrot.slane %v1650, 4
        %v1658 = vsel %vm1299, 0.0, %v1657
        %v1659 = vsel %vm1299, %v1597, %v1578
        %v1661 = vunpack.c.l.s4 1983009808
        %v1662 = vunpack.c.0.s8 %v1661
        %v1663 = vperm.slane %v1659, %v1662
        %v1664 = vrot.slane %v1598, 4
        %v1665 = vsel %vm1299, %v1664, %v1596
        %v1667 = vunpack.c.l.s4 1983009808
        %v1668 = vunpack.c.0.s8 %v1667
        %v1669 = vperm.slane %v1665, %v1668
        %v1670 = vsel %vm1299, %v1601, %v1590
        %v1672 = vunpack.c.l.s4 1983009808
        %v1673 = vunpack.c.0.s8 %v1672
        %v1674 = vperm.slane %v1670, %v1673
        %v1675 = vrot.slane %v1602, 4
        %v1676 = vsel %vm1299, %v1675, %v1600
        %v1678 = vunpack.c.l.s4 1983009808
        %v1679 = vunpack.c.0.s8 %v1678
        %v1680 = vperm.slane %v1676, %v1679
        %v1681 = vrot.slane %v1669, 4
        %v1682 = vsel %vm1299, %v1681, %v1663
        %v1683 = vrot.slane %v1663, 4
        %v1684 = vsel %vm1299, %v1669, %v1683
        %v1686 = vunpack.c.l.s4 1934713408
        %v1687 = vunpack.c.0.s8 %v1686
        %v1688 = vperm.slane %v1682, %v1687
        %v1690 = vunpack.c.l.s4 1934713408
        %v1691 = vunpack.c.0.s8 %v1690
        %v1692 = vperm.slane %v1684, %v1691
        %v1693 = vrot.slane %v1680, 4
        %v1694 = vsel %vm1299, %v1693, %v1674
        %v1695 = vrot.slane %v1674, 4
        %v1696 = vsel %vm1299, %v1680, %v1695
        %v1698 = vunpack.c.l.s4 1934713408
        %v1699 = vunpack.c.0.s8 %v1698
        %v1700 = vperm.slane %v1694, %v1699
        %v1702 = vunpack.c.l.s4 1934713408
        %v1703 = vunpack.c.0.s8 %v1702
        %v1704 = vperm.slane %v1696, %v1703
        %v1705 = vrot.slane %v1700, 4
        %v1706 = vsel %vm1299, %v1705, %v1688
        %v1707 = vrot.slane %v1688, 4
        %v1708 = vsel %vm1299, %v1700, %v1707
        %v1709 = vrot.slane %v1704, 4
        %v1710 = vsel %vm1299, %v1709, %v1692
        %v1711 = vrot.slane %v1692, 4
        %v1712 = vsel %vm1299, %v1704, %v1711
        %v1713 = vsel %vm1299, %v1653, %v1634
        %v1715 = vunpack.c.l.s4 1983009808
        %v1716 = vunpack.c.0.s8 %v1715
        %v1717 = vperm.slane %v1713, %v1716
        %v1718 = vrot.slane %v1654, 4
        %v1719 = vsel %vm1299, %v1718, %v1652
        %v1721 = vunpack.c.l.s4 1983009808
        %v1722 = vunpack.c.0.s8 %v1721
        %v1723 = vperm.slane %v1719, %v1722
        %v1724 = vsel %vm1299, %v1657, %v1646
        %v1726 = vunpack.c.l.s4 1983009808
        %v1727 = vunpack.c.0.s8 %v1726
        %v1728 = vperm.slane %v1724, %v1727
        %v1729 = vrot.slane %v1658, 4
        %v1730 = vsel %vm1299, %v1729, %v1656
        %v1732 = vunpack.c.l.s4 1983009808
        %v1733 = vunpack.c.0.s8 %v1732
        %v1734 = vperm.slane %v1730, %v1733
        %v1735 = vrot.slane %v1723, 4
        %v1736 = vsel %vm1299, %v1735, %v1717
        %v1737 = vrot.slane %v1717, 4
        %v1738 = vsel %vm1299, %v1723, %v1737
        %v1740 = vunpack.c.l.s4 1934713408
        %v1741 = vunpack.c.0.s8 %v1740
        %v1742 = vperm.slane %v1736, %v1741
        %v1744 = vunpack.c.l.s4 1934713408
        %v1745 = vunpack.c.0.s8 %v1744
        %v1746 = vperm.slane %v1738, %v1745
        %v1747 = vrot.slane %v1734, 4
        %v1748 = vsel %vm1299, %v1747, %v1728
        %v1749 = vrot.slane %v1728, 4
        %v1750 = vsel %vm1299, %v1734, %v1749
        %v1752 = vunpack.c.l.s4 1934713408
        %v1753 = vunpack.c.0.s8 %v1752
        %v1754 = vperm.slane %v1748, %v1753
        %v1756 = vunpack.c.l.s4 1934713408
        %v1757 = vunpack.c.0.s8 %v1756
        %v1758 = vperm.slane %v1750, %v1757
        %v1759 = vrot.slane %v1754, 4
        %v1760 = vsel %vm1299, %v1759, %v1742
        %v1761 = vrot.slane %v1742, 4
        %v1762 = vsel %vm1299, %v1754, %v1761
        %v1763 = vrot.slane %v1758, 4
        %v1764 = vsel %vm1299, %v1763, %v1746
        %v1765 = vrot.slane %v1746, 4
        %v1766 = vsel %vm1299, %v1758, %v1765
        %v1767 = vpack.c.bf16 %v1706, %v1706
        %v1768 = vpack.c.bf16 %v1760, %v1760
        %v1769 = vpack.c.bf16 %v1708, %v1708
        %v1770 = vpack.c.bf16 %v1762, %v1762
        %v1771 = vpack.c.bf16 %v1710, %v1710
        %v1772 = vpack.c.bf16 %v1764, %v1764
        %v1773 = vpack.c.bf16 %v1712, %v1712
        %v1774 = vpack.c.bf16 %v1766, %v1766
        %v1775 = vld [vmem:[#allocation2] sm:$0xf]
        %v1776 = vld [vmem:[#allocation2 + $0x4] sm:$0xf]
        %v1777 = vld [vmem:[#allocation2 + $0x8] sm:$0xf]
        %v1778 = vld [vmem:[#allocation2 + $0xc] sm:$0xf]
        %v1779 = vld [vmem:[#allocation2 + $0x10] sm:$0xf]
        %v1780 = vld [vmem:[#allocation2 + $0x14] sm:$0xf]
        %v1781 = vld [vmem:[#allocation2 + $0x18] sm:$0xf]
        %v1782 = vld [vmem:[#allocation2 + $0x1c] sm:$0xf]
        %v1785 = vunpack.c.l.b16 %v1775
        %v1786 = vunpack.c.l.b16 %v1776
        %v1787 = vpack.c.b16 %v1786, %v1785
        %v1790 = vunpack.c.l.b16 %v1519
        %v1791 = vunpack.c.l.b16 %v1520
        %v1792 = vpack.c.b16 %v1791, %v1790
        %vm1793 = vcmask 261120
        %v1795 = vsel %vm1793, %v1787, 0
        %v1798 = vsel %vm1793, %v1792, 0
        %1800 = vmatpush.bf16.xpose.msra.mxu0 0
        %1801 = vmatpush.bf16.xpose.msra.mxu0 0
        %1802 = vmatpush.bf16.xpose.msra.mxu0 0
        %1803 = vmatpush.bf16.xpose.msra.mxu0 0
        %1804 = vmatpush.bf16.xpose.msra.mxu0 0
        %1805 = vmatpush.bf16.xpose.msra.mxu0 0
        %1806 = vmatpush.bf16.xpose.msra.mxu0 0
        %1807 = vmatpush.bf16.xpose.msra.mxu0 %v1798
        %1808 = vmatmul.bf16.gmra.mxu0 %v1795
        %v1809 = vpop.f32.mrf.mxu0
        %v1810 = vadd.f32 0.0, %v1809
        %v1811 = vpop.f32.mrf.mxu0
        %v1812 = vadd.f32 0.0, %v1811
        %1813 = vdwg.mxu0
        %v1816 = vunpack.c.l.b16 %v1777
        %v1817 = vunpack.c.l.b16 %v1778
        %v1818 = vpack.c.b16 %v1817, %v1816
        %v1821 = vunpack.c.l.b16 %v1521
        %v1822 = vunpack.c.l.b16 %v1522
        %v1823 = vpack.c.b16 %v1822, %v1821
        %v1825 = vsel %vm1793, %v1818, 0
        %v1828 = vsel %vm1793, %v1823, 0
        %1830 = vmatpush.bf16.xpose.msra.mxu0 0
        %1831 = vmatpush.bf16.xpose.msra.mxu0 0
        %1832 = vmatpush.bf16.xpose.msra.mxu0 0
        %1833 = vmatpush.bf16.xpose.msra.mxu0 0
        %1834 = vmatpush.bf16.xpose.msra.mxu0 0
        %1835 = vmatpush.bf16.xpose.msra.mxu0 0
        %1836 = vmatpush.bf16.xpose.msra.mxu0 0
        %1837 = vmatpush.bf16.xpose.msra.mxu0 %v1828
        %1838 = vmatmul.bf16.gmra.mxu0 %v1825
        %v1839 = vpop.f32.mrf.mxu0
        %v1840 = vadd.f32 0.0, %v1839
        %v1841 = vpop.f32.mrf.mxu0
        %v1842 = vadd.f32 0.0, %v1841
        %1843 = vdwg.mxu0
        %v1846 = vunpack.c.l.b16 %v1779
        %v1847 = vunpack.c.l.b16 %v1780
        %v1848 = vpack.c.b16 %v1847, %v1846
        %v1851 = vunpack.c.l.b16 %v1523
        %v1852 = vunpack.c.l.b16 %v1524
        %v1853 = vpack.c.b16 %v1852, %v1851
        %v1855 = vsel %vm1793, %v1848, 0
        %v1858 = vsel %vm1793, %v1853, 0
        %1860 = vmatpush.bf16.xpose.msra.mxu0 0
        %1861 = vmatpush.bf16.xpose.msra.mxu0 0
        %1862 = vmatpush.bf16.xpose.msra.mxu0 0
        %1863 = vmatpush.bf16.xpose.msra.mxu0 0
        %1864 = vmatpush.bf16.xpose.msra.mxu0 0
        %1865 = vmatpush.bf16.xpose.msra.mxu0 0
        %1866 = vmatpush.bf16.xpose.msra.mxu0 0
        %1867 = vmatpush.bf16.xpose.msra.mxu0 %v1858
        %1868 = vmatmul.bf16.gmra.mxu0 %v1855
        %v1869 = vpop.f32.mrf.mxu0
        %v1870 = vadd.f32 0.0, %v1869
        %v1871 = vpop.f32.mrf.mxu0
        %v1872 = vadd.f32 0.0, %v1871
        %1873 = vdwg.mxu0
        %v1876 = vunpack.c.l.b16 %v1781
        %v1877 = vunpack.c.l.b16 %v1782
        %v1878 = vpack.c.b16 %v1877, %v1876
        %v1881 = vunpack.c.l.b16 %v1525
        %v1882 = vunpack.c.l.b16 %v1526
        %v1883 = vpack.c.b16 %v1882, %v1881
        %v1885 = vsel %vm1793, %v1878, 0
        %v1888 = vsel %vm1793, %v1883, 0
        %1890 = vmatpush.bf16.xpose.msra.mxu0 0
        %1891 = vmatpush.bf16.xpose.msra.mxu0 0
        %1892 = vmatpush.bf16.xpose.msra.mxu0 0
        %1893 = vmatpush.bf16.xpose.msra.mxu0 0
        %1894 = vmatpush.bf16.xpose.msra.mxu0 0
        %1895 = vmatpush.bf16.xpose.msra.mxu0 0
        %1896 = vmatpush.bf16.xpose.msra.mxu0 0
        %1897 = vmatpush.bf16.xpose.msra.mxu0 %v1888
        %1898 = vmatmul.bf16.gmra.mxu0 %v1885
        %v1899 = vpop.f32.mrf.mxu0
        %v1900 = vadd.f32 0.0, %v1899
        %v1901 = vpop.f32.mrf.mxu0
        %v1902 = vadd.f32 0.0, %v1901
        %1903 = vdwg.mxu0
        %s1904 = smul.u32 %s46, 16
        %v1905 = vlaneseq
        %v1906 = vand.u32 %v1905, 127
        %v1907 = vstv %s1904
        %v1908 = vadd.s32 %v1907, %v1906
        %vm1909 = vcmp.lt.s32.totalorder %v1908, 60
        %v1910 = vsel %vm1909, %v1810, -1e+30
        %v1911 = vsel %vm1909, %v1812, -1e+30
        %v1912 = vsel %vm1909, %v1840, -1e+30
        %v1913 = vsel %vm1909, %v1842, -1e+30
        %v1914 = vsel %vm1909, %v1870, -1e+30
        %v1915 = vsel %vm1909, %v1872, -1e+30
        %v1916 = vsel %vm1909, %v1900, -1e+30
        %v1917 = vsel %vm1909, %v1902, -1e+30
        %v1918 = vld [vmem:[#allocation3] sm:$0xff]
        %v1919 = vld [vmem:[#allocation3 + $0x8] sm:$0xff]
        %v1920 = vld [vmem:[#allocation3 + $0x10] sm:$0xff]
        %v1921 = vld [vmem:[#allocation3 + $0x18] sm:$0xff]
        %v1922 = vld [vmem:[#allocation3 + $0x20] sm:$0xff]
        %v1923 = vld [vmem:[#allocation3 + $0x28] sm:$0xff]
        %v1924 = vld [vmem:[#allocation3 + $0x30] sm:$0xff]
        %v1925 = vld [vmem:[#allocation3 + $0x38] sm:$0xff]
        %vm1926 = vcmask 130048
        %v1927 = vsel %vm1926, %v1910, -inf
        %1928 = vmax.xlane.f32.xlu0 %v1927
        %v1929 = vpop.xlane.xlu0 %1928
        %v1930 = vsel %vm1926, %v1911, -inf
        %1931 = vmax.xlane.f32.xlu0 %v1930
        %v1932 = vpop.xlane.xlu0 %1931
        %v1933 = vsel %vm1926, %v1912, -inf
        %1934 = vmax.xlane.f32.xlu0 %v1933
        %v1935 = vpop.xlane.xlu0 %1934
        %v1936 = vsel %vm1926, %v1913, -inf
        %1937 = vmax.xlane.f32.xlu0 %v1936
        %v1938 = vpop.xlane.xlu0 %1937
        %v1939 = vsel %vm1926, %v1914, -inf
        %1940 = vmax.xlane.f32.xlu0 %v1939
        %v1941 = vpop.xlane.xlu0 %1940
        %v1942 = vsel %vm1926, %v1915, -inf
        %1943 = vmax.xlane.f32.xlu0 %v1942
        %v1944 = vpop.xlane.xlu0 %1943
        %v1945 = vsel %vm1926, %v1916, -inf
        %1946 = vmax.xlane.f32.xlu0 %v1945
        %v1947 = vpop.xlane.xlu0 %1946
        %v1948 = vsel %vm1926, %v1917, -inf
        %1949 = vmax.xlane.f32.xlu0 %v1948
        %v1950 = vpop.xlane.xlu0 %1949
        %v1951 = vmax.f32 %v1918, %v1929
        %v1952 = vmax.f32 %v1919, %v1932
        %v1953 = vmax.f32 %v1920, %v1935
        %v1954 = vmax.f32 %v1921, %v1938
        %v1955 = vmax.f32 %v1922, %v1941
        %v1956 = vmax.f32 %v1923, %v1944
        %v1957 = vmax.f32 %v1924, %v1947
        %v1958 = vmax.f32 %v1925, %v1950
        %v1959 = vsub.f32 %v1918, %v1951
        %v1960 = vsub.f32 %v1919, %v1952
        %v1961 = vsub.f32 %v1920, %v1953
        %v1962 = vsub.f32 %v1921, %v1954
        %v1963 = vsub.f32 %v1922, %v1955
        %v1964 = vsub.f32 %v1923, %v1956
        %v1965 = vsub.f32 %v1924, %v1957
        %v1966 = vsub.f32 %v1925, %v1958
        %v1967 = vmul.f32 %v1959, 1.442695
        %v1968 = vpow.pop %v1967
        %v1969 = vmul.f32 %v1960, 1.442695
        %v1970 = vpow.pop %v1969
        %v1971 = vmul.f32 %v1961, 1.442695
        %v1972 = vpow.pop %v1971
        %v1973 = vmul.f32 %v1962, 1.442695
        %v1974 = vpow.pop %v1973
        %v1975 = vmul.f32 %v1963, 1.442695
        %v1976 = vpow.pop %v1975
        %v1977 = vmul.f32 %v1964, 1.442695
        %v1978 = vpow.pop %v1977
        %v1979 = vmul.f32 %v1965, 1.442695
        %v1980 = vpow.pop %v1979
        %v1981 = vmul.f32 %v1966, 1.442695
        %v1982 = vpow.pop %v1981
        %1984 = vset.pattern.permute.xlu0 0
        %1985 = vperm.xlu0 %1984, %v1951
        %v1986 = vpop.permute.xlu0 %1985
        %1989 = vset.pattern.permute.xlu0 0
        %1990 = vperm.xlu0 %1989, %v1952
        %v1991 = vpop.permute.xlu0 %1990
        %1994 = vset.pattern.permute.xlu0 0
        %1995 = vperm.xlu0 %1994, %v1953
        %v1996 = vpop.permute.xlu0 %1995
        %1999 = vset.pattern.permute.xlu0 0
        %2000 = vperm.xlu0 %1999, %v1954
        %v2001 = vpop.permute.xlu0 %2000
        %2004 = vset.pattern.permute.xlu0 0
        %2005 = vperm.xlu0 %2004, %v1955
        %v2006 = vpop.permute.xlu0 %2005
        %2009 = vset.pattern.permute.xlu0 0
        %2010 = vperm.xlu0 %2009, %v1956
        %v2011 = vpop.permute.xlu0 %2010
        %2014 = vset.pattern.permute.xlu0 0
        %2015 = vperm.xlu0 %2014, %v1957
        %v2016 = vpop.permute.xlu0 %2015
        %2019 = vset.pattern.permute.xlu0 0
        %2020 = vperm.xlu0 %2019, %v1958
        %v2021 = vpop.permute.xlu0 %2020
        %v2023 = vsub.f32 %v1910, %v1986
        %v2024 = vsub.f32 %v1911, %v1991
        %v2025 = vsub.f32 %v1912, %v1996
        %v2026 = vsub.f32 %v1913, %v2001
        %v2027 = vsub.f32 %v1914, %v2006
        %v2028 = vsub.f32 %v1915, %v2011
        %v2029 = vsub.f32 %v1916, %v2016
        %v2030 = vsub.f32 %v1917, %v2021
        %v2031 = vmul.f32 %v2023, 1.442695
        %v2032 = vpow.pop %v2031
        %v2033 = vmul.f32 %v2024, 1.442695
        %v2034 = vpow.pop %v2033
        %v2035 = vmul.f32 %v2025, 1.442695
        %v2036 = vpow.pop %v2035
        %v2037 = vmul.f32 %v2026, 1.442695
        %v2038 = vpow.pop %v2037
        %v2039 = vmul.f32 %v2027, 1.442695
        %v2040 = vpow.pop %v2039
        %v2041 = vmul.f32 %v2028, 1.442695
        %v2042 = vpow.pop %v2041
        %v2043 = vmul.f32 %v2029, 1.442695
        %v2044 = vpow.pop %v2043
        %v2045 = vmul.f32 %v2030, 1.442695
        %v2046 = vpow.pop %v2045
        %v2047 = vld [vmem:[#allocation4] sm:$0xff]
        %v2048 = vld [vmem:[#allocation4 + $0x8] sm:$0xff]
        %v2049 = vld [vmem:[#allocation4 + $0x10] sm:$0xff]
        %v2050 = vld [vmem:[#allocation4 + $0x18] sm:$0xff]
        %v2051 = vld [vmem:[#allocation4 + $0x20] sm:$0xff]
        %v2052 = vld [vmem:[#allocation4 + $0x28] sm:$0xff]
        %v2053 = vld [vmem:[#allocation4 + $0x30] sm:$0xff]
        %v2054 = vld [vmem:[#allocation4 + $0x38] sm:$0xff]
        %v2055 = vmul.f32 %v1968, %v2047
        %v2056 = vmul.f32 %v1970, %v2048
        %v2057 = vmul.f32 %v1972, %v2049
        %v2058 = vmul.f32 %v1974, %v2050
        %v2059 = vmul.f32 %v1976, %v2051
        %v2060 = vmul.f32 %v1978, %v2052
        %v2061 = vmul.f32 %v1980, %v2053
        %v2062 = vmul.f32 %v1982, %v2054
        %v2063 = vsel %vm1926, %v2032, 0.0
        %2064 = vadd.xlane.f32.xlu0 %v2063
        %v2065 = vpop.xlane.xlu0 %2064
        %v2066 = vsel %vm1926, %v2034, 0.0
        %2067 = vadd.xlane.f32.xlu0 %v2066
        %v2068 = vpop.xlane.xlu0 %2067
        %v2069 = vsel %vm1926, %v2036, 0.0
        %2070 = vadd.xlane.f32.xlu0 %v2069
        %v2071 = vpop.xlane.xlu0 %2070
        %v2072 = vsel %vm1926, %v2038, 0.0
        %2073 = vadd.xlane.f32.xlu0 %v2072
        %v2074 = vpop.xlane.xlu0 %2073
        %v2075 = vsel %vm1926, %v2040, 0.0
        %2076 = vadd.xlane.f32.xlu0 %v2075
        %v2077 = vpop.xlane.xlu0 %2076
        %v2078 = vsel %vm1926, %v2042, 0.0
        %2079 = vadd.xlane.f32.xlu0 %v2078
        %v2080 = vpop.xlane.xlu0 %2079
        %v2081 = vsel %vm1926, %v2044, 0.0
        %2082 = vadd.xlane.f32.xlu0 %v2081
        %v2083 = vpop.xlane.xlu0 %2082
        %v2084 = vsel %vm1926, %v2046, 0.0
        %2085 = vadd.xlane.f32.xlu0 %v2084
        %v2086 = vpop.xlane.xlu0 %2085
        %v2087 = vadd.f32 %v2055, %v2065
        %v2088 = vadd.f32 %v2056, %v2068
        %v2089 = vadd.f32 %v2057, %v2071
        %v2090 = vadd.f32 %v2058, %v2074
        %v2091 = vadd.f32 %v2059, %v2077
        %v2092 = vadd.f32 %v2060, %v2080
        %v2093 = vadd.f32 %v2061, %v2083
        %v2094 = vadd.f32 %v2062, %v2086
        %vm2095 = vcmask 7168
        %2096 = vst.msk [vmem:[#allocation4] sm:$0xff] %vm2095, %v2087
        %2097 = vst.msk [vmem:[#allocation4 + $0x8] sm:$0xff] %vm2095, %v2088
        %2098 = vst.msk [vmem:[#allocation4 + $0x10] sm:$0xff] %vm2095, %v2089
        %2099 = vst.msk [vmem:[#allocation4 + $0x18] sm:$0xff] %vm2095, %v2090
        %2100 = vst.msk [vmem:[#allocation4 + $0x20] sm:$0xff] %vm2095, %v2091
        %2101 = vst.msk [vmem:[#allocation4 + $0x28] sm:$0xff] %vm2095, %v2092
        %2102 = vst.msk [vmem:[#allocation4 + $0x30] sm:$0xff] %vm2095, %v2093
        %2103 = vst.msk [vmem:[#allocation4 + $0x38] sm:$0xff] %vm2095, %v2094
        %v2104 = vld [vmem:[#allocation5] sm:$0xff]
        %v2105 = vld [vmem:[#allocation5 + $0x8] sm:$0xff]
        %v2106 = vld [vmem:[#allocation5 + $0x10] sm:$0xff]
        %v2107 = vld [vmem:[#allocation5 + $0x18] sm:$0xff]
        %v2108 = vld [vmem:[#allocation5 + $0x20] sm:$0xff]
        %v2109 = vld [vmem:[#allocation5 + $0x28] sm:$0xff]
        %v2110 = vld [vmem:[#allocation5 + $0x30] sm:$0xff]
        %v2111 = vld [vmem:[#allocation5 + $0x38] sm:$0xff]
        %2113 = vset.pattern.permute.xlu0 0
        %2114 = vperm.xlu0 %2113, %v1968
        %v2115 = vpop.permute.xlu0 %2114
        %2118 = vset.pattern.permute.xlu0 0
        %2119 = vperm.xlu0 %2118, %v1970
        %v2120 = vpop.permute.xlu0 %2119
        %2123 = vset.pattern.permute.xlu0 0
        %2124 = vperm.xlu0 %2123, %v1972
        %v2125 = vpop.permute.xlu0 %2124
        %2128 = vset.pattern.permute.xlu0 0
        %2129 = vperm.xlu0 %2128, %v1974
        %v2130 = vpop.permute.xlu0 %2129
        %2133 = vset.pattern.permute.xlu0 0
        %2134 = vperm.xlu0 %2133, %v1976
        %v2135 = vpop.permute.xlu0 %2134
        %2138 = vset.pattern.permute.xlu0 0
        %2139 = vperm.xlu0 %2138, %v1978
        %v2140 = vpop.permute.xlu0 %2139
        %2143 = vset.pattern.permute.xlu0 0
        %2144 = vperm.xlu0 %2143, %v1980
        %v2145 = vpop.permute.xlu0 %2144
        %2148 = vset.pattern.permute.xlu0 0
        %2149 = vperm.xlu0 %2148, %v1982
        %v2150 = vpop.permute.xlu0 %2149
        %v2152 = vmul.f32 %v2115, %v2104
        %v2153 = vmul.f32 %v2120, %v2105
        %v2154 = vmul.f32 %v2125, %v2106
        %v2155 = vmul.f32 %v2130, %v2107
        %v2156 = vmul.f32 %v2135, %v2108
        %v2157 = vmul.f32 %v2140, %v2109
        %v2158 = vmul.f32 %v2145, %v2110
        %v2159 = vmul.f32 %v2150, %v2111
        %v2160 = vpack.c.bf16 %v2032, %v2032
        %v2161 = vpack.c.bf16 %v2034, %v2034
        %v2162 = vpack.c.bf16 %v2036, %v2036
        %v2163 = vpack.c.bf16 %v2038, %v2038
        %v2164 = vpack.c.bf16 %v2040, %v2040
        %v2165 = vpack.c.bf16 %v2042, %v2042
        %v2166 = vpack.c.bf16 %v2044, %v2044
        %v2167 = vpack.c.bf16 %v2046, %v2046
        %v2170 = vunpack.c.l.b16 %v2160
        %v2171 = vunpack.c.l.b16 %v2161
        %v2172 = vpack.c.b16 %v2171, %v2170
        %v2175 = vunpack.c.l.b16 %v1767
        %v2176 = vunpack.c.l.b16 %v1768
        %v2177 = vpack.c.b16 %v2176, %v2175
        %v2180 = vsel %vm1926, %v2172, 0
        %2182 = vmatpush.bf16.msra.mxu0 0
        %2183 = vmatpush.bf16.msra.mxu0 0
        %2184 = vmatpush.bf16.msra.mxu0 0
        %2185 = vmatpush.bf16.msra.mxu0 0
        %2186 = vmatpush.bf16.msra.mxu0 0
        %2187 = vmatpush.bf16.msra.mxu0 0
        %2188 = vmatpush.bf16.msra.mxu0 0
        %2189 = vmatpush.bf16.msra.mxu0 %v2177
        %2190 = vmatmul.bf16.gmra.mxu0 %v2180
        %v2191 = vpop.f32.mrf.mxu0
        %v2192 = vadd.f32 0.0, %v2191
        %v2193 = vpop.f32.mrf.mxu0
        %v2194 = vadd.f32 0.0, %v2193
        %2195 = vdwg.mxu0
        %v2198 = vunpack.c.l.b16 %v2162
        %v2199 = vunpack.c.l.b16 %v2163
        %v2200 = vpack.c.b16 %v2199, %v2198
        %v2203 = vunpack.c.l.b16 %v1769
        %v2204 = vunpack.c.l.b16 %v1770
        %v2205 = vpack.c.b16 %v2204, %v2203
        %v2208 = vsel %vm1926, %v2200, 0
        %2210 = vmatpush.bf16.msra.mxu0 0
        %2211 = vmatpush.bf16.msra.mxu0 0
        %2212 = vmatpush.bf16.msra.mxu0 0
        %2213 = vmatpush.bf16.msra.mxu0 0
        %2214 = vmatpush.bf16.msra.mxu0 0
        %2215 = vmatpush.bf16.msra.mxu0 0
        %2216 = vmatpush.bf16.msra.mxu0 0
        %2217 = vmatpush.bf16.msra.mxu0 %v2205
        %2218 = vmatmul.bf16.gmra.mxu0 %v2208
        %v2219 = vpop.f32.mrf.mxu0
        %v2220 = vadd.f32 0.0, %v2219
        %v2221 = vpop.f32.mrf.mxu0
        %v2222 = vadd.f32 0.0, %v2221
        %2223 = vdwg.mxu0
        %v2226 = vunpack.c.l.b16 %v2164
        %v2227 = vunpack.c.l.b16 %v2165
        %v2228 = vpack.c.b16 %v2227, %v2226
        %v2231 = vunpack.c.l.b16 %v1771
        %v2232 = vunpack.c.l.b16 %v1772
        %v2233 = vpack.c.b16 %v2232, %v2231
        %v2236 = vsel %vm1926, %v2228, 0
        %2238 = vmatpush.bf16.msra.mxu0 0
        %2239 = vmatpush.bf16.msra.mxu0 0
        %2240 = vmatpush.bf16.msra.mxu0 0
        %2241 = vmatpush.bf16.msra.mxu0 0
        %2242 = vmatpush.bf16.msra.mxu0 0
        %2243 = vmatpush.bf16.msra.mxu0 0
        %2244 = vmatpush.bf16.msra.mxu0 0
        %2245 = vmatpush.bf16.msra.mxu0 %v2233
        %2246 = vmatmul.bf16.gmra.mxu0 %v2236
        %v2247 = vpop.f32.mrf.mxu0
        %v2248 = vadd.f32 0.0, %v2247
        %v2249 = vpop.f32.mrf.mxu0
        %v2250 = vadd.f32 0.0, %v2249
        %2251 = vdwg.mxu0
        %v2254 = vunpack.c.l.b16 %v2166
        %v2255 = vunpack.c.l.b16 %v2167
        %v2256 = vpack.c.b16 %v2255, %v2254
        %v2259 = vunpack.c.l.b16 %v1773
        %v2260 = vunpack.c.l.b16 %v1774
        %v2261 = vpack.c.b16 %v2260, %v2259
        %v2264 = vsel %vm1926, %v2256, 0
        %2266 = vmatpush.bf16.msra.mxu0 0
        %2267 = vmatpush.bf16.msra.mxu0 0
        %2268 = vmatpush.bf16.msra.mxu0 0
        %2269 = vmatpush.bf16.msra.mxu0 0
        %2270 = vmatpush.bf16.msra.mxu0 0
        %2271 = vmatpush.bf16.msra.mxu0 0
        %2272 = vmatpush.bf16.msra.mxu0 0
        %2273 = vmatpush.bf16.msra.mxu0 %v2261
        %2274 = vmatmul.bf16.gmra.mxu0 %v2264
        %v2275 = vpop.f32.mrf.mxu0
        %v2276 = vadd.f32 0.0, %v2275
        %v2277 = vpop.f32.mrf.mxu0
        %v2278 = vadd.f32 0.0, %v2277
        %2279 = vdwg.mxu0
        %v2280 = vadd.f32 %v2152, %v2192
        %v2281 = vadd.f32 %v2153, %v2194
        %v2282 = vadd.f32 %v2154, %v2220
        %v2283 = vadd.f32 %v2155, %v2222
        %v2284 = vadd.f32 %v2156, %v2248
        %v2285 = vadd.f32 %v2157, %v2250
        %v2286 = vadd.f32 %v2158, %v2276
        %v2287 = vadd.f32 %v2159, %v2278
        %2288 = vst.msk [vmem:[#allocation5] sm:$0xff] %vm1793, %v2280
        %2289 = vst.msk [vmem:[#allocation5 + $0x8] sm:$0xff] %vm1793, %v2281
        %2290 = vst.msk [vmem:[#allocation5 + $0x10] sm:$0xff] %vm1793, %v2282
        %2291 = vst.msk [vmem:[#allocation5 + $0x18] sm:$0xff] %vm1793, %v2283
        %2292 = vst.msk [vmem:[#allocation5 + $0x20] sm:$0xff] %vm1793, %v2284
        %2293 = vst.msk [vmem:[#allocation5 + $0x28] sm:$0xff] %vm1793, %v2285
        %2294 = vst.msk [vmem:[#allocation5 + $0x30] sm:$0xff] %vm1793, %v2286
        %2295 = vst.msk [vmem:[#allocation5 + $0x38] sm:$0xff] %vm1793, %v2287
        %2296 = vst.msk [vmem:[#allocation3] sm:$0xff] %vm2095, %v1951
        %2297 = vst.msk [vmem:[#allocation3 + $0x8] sm:$0xff] %vm2095, %v1952
        %2298 = vst.msk [vmem:[#allocation3 + $0x10] sm:$0xff] %vm2095, %v1953
        %2299 = vst.msk [vmem:[#allocation3 + $0x18] sm:$0xff] %vm2095, %v1954
        %2300 = vst.msk [vmem:[#allocation3 + $0x20] sm:$0xff] %vm2095, %v1955
        %2301 = vst.msk [vmem:[#allocation3 + $0x28] sm:$0xff] %vm2095, %v1956
        %2302 = vst.msk [vmem:[#allocation3 + $0x30] sm:$0xff] %vm2095, %v1957
        %2303 = vst.msk [vmem:[#allocation3 + $0x38] sm:$0xff] %vm2095, %v1958
        %p2304 = scmp.eq.s32.totalorder %s46, 3
        // Predicated region
        $region113: #{tpu_custom_call.1} parent=75 // pred_check
          %p2305 = pneg %p2304
        $region114: #{tpu_custom_call.1} parent=75 // pred_check_branch
          %2307 = sbr.rel (%p2305) target = $region116
        $region115: #{tpu_custom_call.1} parent=75 // pred_region
          %v2308 = vld [vmem:[#allocation5] sm:$0xff]
          %v2309 = vld [vmem:[#allocation5 + $0x8] sm:$0xff]
          %v2310 = vld [vmem:[#allocation5 + $0x10] sm:$0xff]
          %v2311 = vld [vmem:[#allocation5 + $0x18] sm:$0xff]
          %v2312 = vld [vmem:[#allocation5 + $0x20] sm:$0xff]
          %v2313 = vld [vmem:[#allocation5 + $0x28] sm:$0xff]
          %v2314 = vld [vmem:[#allocation5 + $0x30] sm:$0xff]
          %v2315 = vld [vmem:[#allocation5 + $0x38] sm:$0xff]
          %v2316 = vld [vmem:[#allocation4] sm:$0xff]
          %v2317 = vld [vmem:[#allocation4 + $0x8] sm:$0xff]
          %v2318 = vld [vmem:[#allocation4 + $0x10] sm:$0xff]
          %v2319 = vld [vmem:[#allocation4 + $0x18] sm:$0xff]
          %v2320 = vld [vmem:[#allocation4 + $0x20] sm:$0xff]
          %v2321 = vld [vmem:[#allocation4 + $0x28] sm:$0xff]
          %v2322 = vld [vmem:[#allocation4 + $0x30] sm:$0xff]
          %v2323 = vld [vmem:[#allocation4 + $0x38] sm:$0xff]
          %2325 = vset.pattern.permute.xlu0 0
          %2326 = vperm.xlu0 %2325, %v2316
          %v2327 = vpop.permute.xlu0 %2326
          %2330 = vset.pattern.permute.xlu0 0
          %2331 = vperm.xlu0 %2330, %v2317
          %v2332 = vpop.permute.xlu0 %2331
          %2335 = vset.pattern.permute.xlu0 0
          %2336 = vperm.xlu0 %2335, %v2318
          %v2337 = vpop.permute.xlu0 %2336
          %2340 = vset.pattern.permute.xlu0 0
          %2341 = vperm.xlu0 %2340, %v2319
          %v2342 = vpop.permute.xlu0 %2341
          %2345 = vset.pattern.permute.xlu0 0
          %2346 = vperm.xlu0 %2345, %v2320
          %v2347 = vpop.permute.xlu0 %2346
          %2350 = vset.pattern.permute.xlu0 0
          %2351 = vperm.xlu0 %2350, %v2321
          %v2352 = vpop.permute.xlu0 %2351
          %2355 = vset.pattern.permute.xlu0 0
          %2356 = vperm.xlu0 %2355, %v2322
          %v2357 = vpop.permute.xlu0 %2356
          %2360 = vset.pattern.permute.xlu0 0
          %2361 = vperm.xlu0 %2360, %v2323
          %v2362 = vpop.permute.xlu0 %2361
          %v2364 = vrcp.pop %v2327
          %v2365 = vmul.f32 %v2327, %v2364
          %v2366 = vsub.f32 1.0, %v2365
          %v2367 = vmul.f32 %v2364, %v2366
          %v2368 = vadd.f32 %v2364, %v2367
          %vm2369 = vweird.f32 %v2327
          %vm2370 = vweird.f32 %v2364
          %vm2371 = vmor %vm2369, %vm2370
          %v2372 = vsel %vm2371, %v2364, %v2368
          %v2373 = vand.u32 2147483647, %v2327
          %vm2374 = vcmp.eq.f32.partialorder %v2373, 8.507059e+37
          %v2375 = vand.u32 %v2327, 2147483648
          %v2376 = vor.u32 1.1754944e-38, %v2375
          %v2377 = vsel %vm2374, %v2376, %v2372
          %v2378 = vmul.f32 %v2308, %v2377
          %v2379 = vrcp.pop %v2332
          %v2380 = vmul.f32 %v2332, %v2379
          %v2381 = vsub.f32 1.0, %v2380
          %v2382 = vmul.f32 %v2379, %v2381
          %v2383 = vadd.f32 %v2379, %v2382
          %vm2384 = vweird.f32 %v2332
          %vm2385 = vweird.f32 %v2379
          %vm2386 = vmor %vm2384, %vm2385
          %v2387 = vsel %vm2386, %v2379, %v2383
          %v2388 = vand.u32 2147483647, %v2332
          %vm2389 = vcmp.eq.f32.partialorder %v2388, 8.507059e+37
          %v2390 = vand.u32 %v2332, 2147483648
          %v2391 = vor.u32 1.1754944e-38, %v2390
          %v2392 = vsel %vm2389, %v2391, %v2387
          %v2393 = vmul.f32 %v2309, %v2392
          %v2394 = vrcp.pop %v2337
          %v2395 = vmul.f32 %v2337, %v2394
          %v2396 = vsub.f32 1.0, %v2395
          %v2397 = vmul.f32 %v2394, %v2396
          %v2398 = vadd.f32 %v2394, %v2397
          %vm2399 = vweird.f32 %v2337
          %vm2400 = vweird.f32 %v2394
          %vm2401 = vmor %vm2399, %vm2400
          %v2402 = vsel %vm2401, %v2394, %v2398
          %v2403 = vand.u32 2147483647, %v2337
          %vm2404 = vcmp.eq.f32.partialorder %v2403, 8.507059e+37
          %v2405 = vand.u32 %v2337, 2147483648
          %v2406 = vor.u32 1.1754944e-38, %v2405
          %v2407 = vsel %vm2404, %v2406, %v2402
          %v2408 = vmul.f32 %v2310, %v2407
          %v2409 = vrcp.pop %v2342
          %v2410 = vmul.f32 %v2342, %v2409
          %v2411 = vsub.f32 1.0, %v2410
          %v2412 = vmul.f32 %v2409, %v2411
          %v2413 = vadd.f32 %v2409, %v2412
          %vm2414 = vweird.f32 %v2342
          %vm2415 = vweird.f32 %v2409
          %vm2416 = vmor %vm2414, %vm2415
          %v2417 = vsel %vm2416, %v2409, %v2413
          %v2418 = vand.u32 2147483647, %v2342
          %vm2419 = vcmp.eq.f32.partialorder %v2418, 8.507059e+37
          %v2420 = vand.u32 %v2342, 2147483648
          %v2421 = vor.u32 1.1754944e-38, %v2420
          %v2422 = vsel %vm2419, %v2421, %v2417
          %v2423 = vmul.f32 %v2311, %v2422
          %v2424 = vrcp.pop %v2347
          %v2425 = vmul.f32 %v2347, %v2424
          %v2426 = vsub.f32 1.0, %v2425
          %v2427 = vmul.f32 %v2424, %v2426
          %v2428 = vadd.f32 %v2424, %v2427
          %vm2429 = vweird.f32 %v2347
          %vm2430 = vweird.f32 %v2424
          %vm2431 = vmor %vm2429, %vm2430
          %v2432 = vsel %vm2431, %v2424, %v2428
          %v2433 = vand.u32 2147483647, %v2347
          %vm2434 = vcmp.eq.f32.partialorder %v2433, 8.507059e+37
          %v2435 = vand.u32 %v2347, 2147483648
          %v2436 = vor.u32 1.1754944e-38, %v2435
          %v2437 = vsel %vm2434, %v2436, %v2432
          %v2438 = vmul.f32 %v2312, %v2437
          %v2439 = vrcp.pop %v2352
          %v2440 = vmul.f32 %v2352, %v2439
          %v2441 = vsub.f32 1.0, %v2440
          %v2442 = vmul.f32 %v2439, %v2441
          %v2443 = vadd.f32 %v2439, %v2442
          %vm2444 = vweird.f32 %v2352
          %vm2445 = vweird.f32 %v2439
          %vm2446 = vmor %vm2444, %vm2445
          %v2447 = vsel %vm2446, %v2439, %v2443
          %v2448 = vand.u32 2147483647, %v2352
          %vm2449 = vcmp.eq.f32.partialorder %v2448, 8.507059e+37
          %v2450 = vand.u32 %v2352, 2147483648
          %v2451 = vor.u32 1.1754944e-38, %v2450
          %v2452 = vsel %vm2449, %v2451, %v2447
          %v2453 = vmul.f32 %v2313, %v2452
          %v2454 = vrcp.pop %v2357
          %v2455 = vmul.f32 %v2357, %v2454
          %v2456 = vsub.f32 1.0, %v2455
          %v2457 = vmul.f32 %v2454, %v2456
          %v2458 = vadd.f32 %v2454, %v2457
          %vm2459 = vweird.f32 %v2357
          %vm2460 = vweird.f32 %v2454
          %vm2461 = vmor %vm2459, %vm2460
          %v2462 = vsel %vm2461, %v2454, %v2458
          %v2463 = vand.u32 2147483647, %v2357
          %vm2464 = vcmp.eq.f32.partialorder %v2463, 8.507059e+37
          %v2465 = vand.u32 %v2357, 2147483648
          %v2466 = vor.u32 1.1754944e-38, %v2465
          %v2467 = vsel %vm2464, %v2466, %v2462
          %v2468 = vmul.f32 %v2314, %v2467
          %v2469 = vrcp.pop %v2362
          %v2470 = vmul.f32 %v2362, %v2469
          %v2471 = vsub.f32 1.0, %v2470
          %v2472 = vmul.f32 %v2469, %v2471
          %v2473 = vadd.f32 %v2469, %v2472
          %vm2474 = vweird.f32 %v2362
          %vm2475 = vweird.f32 %v2469
          %vm2476 = vmor %vm2474, %vm2475
          %v2477 = vsel %vm2476, %v2469, %v2473
          %v2478 = vand.u32 2147483647, %v2362
          %vm2479 = vcmp.eq.f32.partialorder %v2478, 8.507059e+37
          %v2480 = vand.u32 %v2362, 2147483648
          %v2481 = vor.u32 1.1754944e-38, %v2480
          %v2482 = vsel %vm2479, %v2481, %v2477
          %v2483 = vmul.f32 %v2315, %v2482
          %v2484 = vrot.slane %v2438, 4
          %v2485 = vsel %vm1299, %v2484, %v2378
          %v2486 = vrot.slane %v2378, 4
          %v2487 = vsel %vm1299, %v2438, %v2486
          %v2489 = vunpack.c.l.s4 1983009808
          %v2490 = vunpack.c.0.s8 %v2489
          %v2491 = vperm.slane %v2485, %v2490
          %v2493 = vunpack.c.l.s4 1983009808
          %v2494 = vunpack.c.0.s8 %v2493
          %v2495 = vperm.slane %v2487, %v2494
          %v2496 = vrot.slane %v2468, 4
          %v2497 = vsel %vm1299, %v2496, %v2408
          %v2498 = vrot.slane %v2408, 4
          %v2499 = vsel %vm1299, %v2468, %v2498
          %v2501 = vunpack.c.l.s4 1983009808
          %v2502 = vunpack.c.0.s8 %v2501
          %v2503 = vperm.slane %v2497, %v2502
          %v2505 = vunpack.c.l.s4 1983009808
          %v2506 = vunpack.c.0.s8 %v2505
          %v2507 = vperm.slane %v2499, %v2506
          %v2508 = vrot.slane %v2503, 4
          %v2509 = vsel %vm1299, %v2508, %v2491
          %v2510 = vrot.slane %v2491, 4
          %v2511 = vsel %vm1299, %v2503, %v2510
          %v2513 = vunpack.c.l.s4 1934713408
          %v2514 = vunpack.c.0.s8 %v2513
          %v2515 = vperm.slane %v2509, %v2514
          %v2517 = vunpack.c.l.s4 1934713408
          %v2518 = vunpack.c.0.s8 %v2517
          %v2519 = vperm.slane %v2511, %v2518
          %v2520 = vrot.slane %v2507, 4
          %v2521 = vsel %vm1299, %v2520, %v2495
          %v2522 = vrot.slane %v2495, 4
          %v2523 = vsel %vm1299, %v2507, %v2522
          %v2525 = vunpack.c.l.s4 1934713408
          %v2526 = vunpack.c.0.s8 %v2525
          %v2527 = vperm.slane %v2521, %v2526
          %v2529 = vunpack.c.l.s4 1934713408
          %v2530 = vunpack.c.0.s8 %v2529
          %v2531 = vperm.slane %v2523, %v2530
          %v2532 = vrot.slane %v2515, 4
          %v2533 = vsel %vm1299, 0.0, %v2532
          %v2534 = vrot.slane %v2519, 4
          %v2535 = vsel %vm1299, 0.0, %v2534
          %v2536 = vrot.slane %v2527, 4
          %v2537 = vsel %vm1299, 0.0, %v2536
          %v2538 = vrot.slane %v2531, 4
          %v2539 = vsel %vm1299, 0.0, %v2538
          %v2540 = vrot.slane %v2453, 4
          %v2541 = vsel %vm1299, %v2540, %v2393
          %v2542 = vrot.slane %v2393, 4
          %v2543 = vsel %vm1299, %v2453, %v2542
          %v2545 = vunpack.c.l.s4 1983009808
          %v2546 = vunpack.c.0.s8 %v2545
          %v2547 = vperm.slane %v2541, %v2546
          %v2549 = vunpack.c.l.s4 1983009808
          %v2550 = vunpack.c.0.s8 %v2549
          %v2551 = vperm.slane %v2543, %v2550
          %v2552 = vrot.slane %v2483, 4
          %v2553 = vsel %vm1299, %v2552, %v2423
          %v2554 = vrot.slane %v2423, 4
          %v2555 = vsel %vm1299, %v2483, %v2554
          %v2557 = vunpack.c.l.s4 1983009808
          %v2558 = vunpack.c.0.s8 %v2557
          %v2559 = vperm.slane %v2553, %v2558
          %v2561 = vunpack.c.l.s4 1983009808
          %v2562 = vunpack.c.0.s8 %v2561
          %v2563 = vperm.slane %v2555, %v2562
          %v2564 = vrot.slane %v2559, 4
          %v2565 = vsel %vm1299, %v2564, %v2547
          %v2566 = vrot.slane %v2547, 4
          %v2567 = vsel %vm1299, %v2559, %v2566
          %v2569 = vunpack.c.l.s4 1934713408
          %v2570 = vunpack.c.0.s8 %v2569
          %v2571 = vperm.slane %v2565, %v2570
          %v2573 = vunpack.c.l.s4 1934713408
          %v2574 = vunpack.c.0.s8 %v2573
          %v2575 = vperm.slane %v2567, %v2574
          %v2576 = vrot.slane %v2563, 4
          %v2577 = vsel %vm1299, %v2576, %v2551
          %v2578 = vrot.slane %v2551, 4
          %v2579 = vsel %vm1299, %v2563, %v2578
          %v2581 = vunpack.c.l.s4 1934713408
          %v2582 = vunpack.c.0.s8 %v2581
          %v2583 = vperm.slane %v2577, %v2582
          %v2585 = vunpack.c.l.s4 1934713408
          %v2586 = vunpack.c.0.s8 %v2585
          %v2587 = vperm.slane %v2579, %v2586
          %v2588 = vrot.slane %v2571, 4
          %v2589 = vsel %vm1299, 0.0, %v2588
          %v2590 = vrot.slane %v2575, 4
          %v2591 = vsel %vm1299, 0.0, %v2590
          %v2592 = vrot.slane %v2583, 4
          %v2593 = vsel %vm1299, 0.0, %v2592
          %v2594 = vrot.slane %v2587, 4
          %v2595 = vsel %vm1299, 0.0, %v2594
          %v2596 = vsel %vm1299, %v2534, %v2515
          %v2598 = vunpack.c.l.s4 1983009808
          %v2599 = vunpack.c.0.s8 %v2598
          %v2600 = vperm.slane %v2596, %v2599
          %v2601 = vrot.slane %v2535, 4
          %v2602 = vsel %vm1299, %v2601, %v2533
          %v2604 = vunpack.c.l.s4 1983009808
          %v2605 = vunpack.c.0.s8 %v2604
          %v2606 = vperm.slane %v2602, %v2605
          %v2607 = vsel %vm1299, %v2538, %v2527
          %v2609 = vunpack.c.l.s4 1983009808
          %v2610 = vunpack.c.0.s8 %v2609
          %v2611 = vperm.slane %v2607, %v2610
          %v2612 = vrot.slane %v2539, 4
          %v2613 = vsel %vm1299, %v2612, %v2537
          %v2615 = vunpack.c.l.s4 1983009808
          %v2616 = vunpack.c.0.s8 %v2615
          %v2617 = vperm.slane %v2613, %v2616
          %v2618 = vrot.slane %v2606, 4
          %v2619 = vsel %vm1299, %v2618, %v2600
          %v2620 = vrot.slane %v2600, 4
          %v2621 = vsel %vm1299, %v2606, %v2620
          %v2623 = vunpack.c.l.s4 1934713408
          %v2624 = vunpack.c.0.s8 %v2623
          %v2625 = vperm.slane %v2619, %v2624
          %v2627 = vunpack.c.l.s4 1934713408
          %v2628 = vunpack.c.0.s8 %v2627
          %v2629 = vperm.slane %v2621, %v2628
          %v2630 = vrot.slane %v2617, 4
          %v2631 = vsel %vm1299, %v2630, %v2611
          %v2632 = vrot.slane %v2611, 4
          %v2633 = vsel %vm1299, %v2617, %v2632
          %v2635 = vunpack.c.l.s4 1934713408
          %v2636 = vunpack.c.0.s8 %v2635
          %v2637 = vperm.slane %v2631, %v2636
          %v2639 = vunpack.c.l.s4 1934713408
          %v2640 = vunpack.c.0.s8 %v2639
          %v2641 = vperm.slane %v2633, %v2640
          %v2642 = vrot.slane %v2637, 4
          %v2643 = vsel %vm1299, %v2642, %v2625
          %v2644 = vrot.slane %v2625, 4
          %v2645 = vsel %vm1299, %v2637, %v2644
          %v2646 = vrot.slane %v2641, 4
          %v2647 = vsel %vm1299, %v2646, %v2629
          %v2648 = vrot.slane %v2629, 4
          %v2649 = vsel %vm1299, %v2641, %v2648
          %v2650 = vsel %vm1299, %v2590, %v2571
          %v2652 = vunpack.c.l.s4 1983009808
          %v2653 = vunpack.c.0.s8 %v2652
          %v2654 = vperm.slane %v2650, %v2653
          %v2655 = vrot.slane %v2591, 4
          %v2656 = vsel %vm1299, %v2655, %v2589
          %v2658 = vunpack.c.l.s4 1983009808
          %v2659 = vunpack.c.0.s8 %v2658
          %v2660 = vperm.slane %v2656, %v2659
          %v2661 = vsel %vm1299, %v2594, %v2583
          %v2663 = vunpack.c.l.s4 1983009808
          %v2664 = vunpack.c.0.s8 %v2663
          %v2665 = vperm.slane %v2661, %v2664
          %v2666 = vrot.slane %v2595, 4
          %v2667 = vsel %vm1299, %v2666, %v2593
          %v2669 = vunpack.c.l.s4 1983009808
          %v2670 = vunpack.c.0.s8 %v2669
          %v2671 = vperm.slane %v2667, %v2670
          %v2672 = vrot.slane %v2660, 4
          %v2673 = vsel %vm1299, %v2672, %v2654
          %v2674 = vrot.slane %v2654, 4
          %v2675 = vsel %vm1299, %v2660, %v2674
          %v2677 = vunpack.c.l.s4 1934713408
          %v2678 = vunpack.c.0.s8 %v2677
          %v2679 = vperm.slane %v2673, %v2678
          %v2681 = vunpack.c.l.s4 1934713408
          %v2682 = vunpack.c.0.s8 %v2681
          %v2683 = vperm.slane %v2675, %v2682
          %v2684 = vrot.slane %v2671, 4
          %v2685 = vsel %vm1299, %v2684, %v2665
          %v2686 = vrot.slane %v2665, 4
          %v2687 = vsel %vm1299, %v2671, %v2686
          %v2689 = vunpack.c.l.s4 1934713408
          %v2690 = vunpack.c.0.s8 %v2689
          %v2691 = vperm.slane %v2685, %v2690
          %v2693 = vunpack.c.l.s4 1934713408
          %v2694 = vunpack.c.0.s8 %v2693
          %v2695 = vperm.slane %v2687, %v2694
          %v2696 = vrot.slane %v2691, 4
          %v2697 = vsel %vm1299, %v2696, %v2679
          %v2698 = vrot.slane %v2679, 4
          %v2699 = vsel %vm1299, %v2691, %v2698
          %v2700 = vrot.slane %v2695, 4
          %v2701 = vsel %vm1299, %v2700, %v2683
          %v2702 = vrot.slane %v2683, 4
          %v2703 = vsel %vm1299, %v2695, %v2702
          %2706 = vrot.lane.b32.xlu0 %v2645, 32
          %v2707 = vpop.permute.xlu0 %2706
          %2708 = vrot.lane.b32.xlu0 %v2699, 32
          %v2709 = vpop.permute.xlu0 %2708
          %2714 = vrot.lane.b32.xlu0 %v2647, 64
          %v2715 = vpop.permute.xlu0 %2714
          %2716 = vrot.lane.b32.xlu0 %v2701, 64
          %v2717 = vpop.permute.xlu0 %2716
          %2722 = vrot.lane.b32.xlu0 %v2649, 96
          %v2723 = vpop.permute.xlu0 %2722
          %2724 = vrot.lane.b32.xlu0 %v2703, 96
          %v2725 = vpop.permute.xlu0 %2724
          %v2728 = vsel %vm1793, %v2643, %v2707
          %v2729 = vsel %vm1793, %v2697, %v2709
          %vm2730 = vcmask 523264
          %v2731 = vsel %vm2730, %v2728, %v2715
          %v2732 = vsel %vm2730, %v2729, %v2717
          %vm2733 = vcmask 785408
          %v2734 = vsel %vm2733, %v2731, %v2723
          %v2735 = vsel %vm2733, %v2732, %v2725
          %v2736 = vpack.c.bf16 %v2735, %v2734
          %v2737 = vld [vmem:[#allocation18] sm:$0xf]
          %v2738 = vld [vmem:[#allocation18 + $0x4] sm:$0xf]
          %v2739 = vld [vmem:[#allocation18 + $0x8] sm:$0xf]
          %v2740 = vld [vmem:[#allocation18 + $0xc] sm:$0xf]
          %v2741 = vld [vmem:[#allocation18 + $0x10] sm:$0xf]
          %v2742 = vld [vmem:[#allocation18 + $0x14] sm:$0xf]
          %v2743 = vld [vmem:[#allocation18 + $0x18] sm:$0xf]
          %v2744 = vld [vmem:[#allocation18 + $0x1c] sm:$0xf]
          %v2745 = vld [vmem:[#allocation18 + $0x20] sm:$0xf]
          %v2746 = vld [vmem:[#allocation18 + $0x24] sm:$0xf]
          %v2747 = vld [vmem:[#allocation18 + $0x28] sm:$0xf]
          %v2748 = vld [vmem:[#allocation18 + $0x2c] sm:$0xf]
          %v2749 = vld [vmem:[#allocation18 + $0x30] sm:$0xf]
          %v2750 = vld [vmem:[#allocation18 + $0x34] sm:$0xf]
          %v2751 = vld [vmem:[#allocation18 + $0x38] sm:$0xf]
          %v2752 = vld [vmem:[#allocation18 + $0x3c] sm:$0xf]
          %v2753 = vld [vmem:[%s11] sm:$0x1]
          %v2755 = vperm.slane %v2753, 0
          %v2773 = vunpack.c.l.b16 %v2737
          %v2774 = vunpack.c.l.b16 %v2738
          %v2775 = vunpack.c.l.b16 %v2739
          %v2776 = vunpack.c.l.b16 %v2740
          %v2777 = vunpack.c.l.b16 %v2741
          %v2778 = vunpack.c.l.b16 %v2742
          %v2779 = vunpack.c.l.b16 %v2743
          %v2780 = vunpack.c.l.b16 %v2744
          %v2781 = vunpack.c.l.b16 %v2745
          %v2782 = vunpack.c.l.b16 %v2746
          %v2783 = vunpack.c.l.b16 %v2747
          %v2784 = vunpack.c.l.b16 %v2748
          %v2785 = vunpack.c.l.b16 %v2749
          %v2786 = vunpack.c.l.b16 %v2750
          %v2787 = vunpack.c.l.b16 %v2751
          %v2788 = vunpack.c.l.b16 %v2752
          %v2789 = vpack.c.b16 %v2774, %v2773
          %v2790 = vpack.c.b16 %v2776, %v2775
          %v2791 = vpack.c.b16 %v2778, %v2777
          %v2792 = vpack.c.b16 %v2780, %v2779
          %v2793 = vpack.c.b16 %v2782, %v2781
          %v2794 = vpack.c.b16 %v2784, %v2783
          %v2795 = vpack.c.b16 %v2786, %v2785
          %v2796 = vpack.c.b16 %v2788, %v2787
          %2805 = vmatpush.bf16.msra.mxu0 %v2796
          %2806 = vmatpush.bf16.msra.mxu0 %v2795
          %2807 = vmatpush.bf16.msra.mxu0 %v2794
          %2808 = vmatpush.bf16.msra.mxu0 %v2793
          %2809 = vmatpush.bf16.msra.mxu0 %v2792
          %2810 = vmatpush.bf16.msra.mxu0 %v2791
          %2811 = vmatpush.bf16.msra.mxu0 %v2790
          %2812 = vmatpush.bf16.msra.mxu0 %v2789
          %2813 = vmatmul.bf16.gmra.mxu0 %v2736
          %v2814 = vpop.f32.mrf.mxu0
          %v2815 = vadd.f32 %v2755, %v2814
          %v2816 = vpop.f32.mrf.mxu0
          %v2817 = vadd.f32 %v2755, %v2816
          %2818 = vdwg.mxu0
          %v2819 = vld [vmem:[%s603] sm:$0xff]
          %v2820 = vld [vmem:[%s603 + $0x8] sm:$0xff]
          %v2821 = vadd.f32 %v2819, %v2815
          %v2822 = vadd.f32 %v2820, %v2817
          %2823 = vadd.xlane.f32.xlu0 %v2821
          %v2824 = vpop.xlane.xlu0 %2823
          %2825 = vadd.xlane.f32.xlu0 %v2822
          %v2826 = vpop.xlane.xlu0 %2825
          %v2827 = vmul.f32 %v2821, %v2821
          %v2828 = vmul.f32 %v2822, %v2822
          %2829 = vadd.xlane.f32.xlu0 %v2827
          %v2830 = vpop.xlane.xlu0 %2829
          %2831 = vadd.xlane.f32.xlu0 %v2828
          %v2832 = vpop.xlane.xlu0 %2831
          %v2833 = vrcp.pop 32.0
          %v2834 = vmul.f32 32.0, %v2833
          %v2835 = vsub.f32 1.0, %v2834
          %v2836 = vmul.f32 %v2833, %v2835
          %v2837 = vadd.f32 %v2833, %v2836
          %vm2838 = vweird.f32 %v2833
          %v2839 = vsel %vm2838, %v2833, %v2837
          %v2840 = vmul.f32 %v2824, %v2839
          %v2841 = vmul.f32 %v2826, %v2839
          %v2842 = vmul.f32 %v2830, %v2839
          %v2843 = vmul.f32 %v2832, %v2839
          %v2844 = vmul.f32 %v2840, %v2840
          %v2845 = vmul.f32 %v2841, %v2841
          %v2846 = vsub.f32 %v2842, %v2844
          %v2847 = vsub.f32 %v2843, %v2845
          %v2848 = vmax.f32 %v2846, 0.0
          %v2849 = vmax.f32 %v2847, 0.0
          %v2850 = vsub.f32 %v2821, %v2840
          %v2851 = vsub.f32 %v2822, %v2841
          %v2852 = vadd.f32 %v2848, 1e-05
          %v2853 = vadd.f32 %v2849, 1e-05
          %v2854 = vrsqrt.pop %v2852
          %v2855 = vmul.f32 %v2854, %v2852
          %v2856 = vmul.f32 %v2855, %v2854
          %v2857 = vmul.f32 0.5, %v2856
          %v2858 = vsub.f32 1.5, %v2857
          %v2859 = vmul.f32 %v2854, %v2858
          %vm2860 = vweird.f32 %v2852
          %vm2861 = vweird.f32 %v2854
          %vm2862 = vmor %vm2860, %vm2861
          %v2863 = vsel %vm2862, %v2854, %v2859
          %v2864 = vrsqrt.pop %v2853
          %v2865 = vmul.f32 %v2864, %v2853
          %v2866 = vmul.f32 %v2865, %v2864
          %v2867 = vmul.f32 0.5, %v2866
          %v2868 = vsub.f32 1.5, %v2867
          %v2869 = vmul.f32 %v2864, %v2868
          %vm2870 = vweird.f32 %v2853
          %vm2871 = vweird.f32 %v2864
          %vm2872 = vmor %vm2870, %vm2871
          %v2873 = vsel %vm2872, %v2864, %v2869
          %v2874 = vmul.f32 %v2850, %v2863
          %v2875 = vmul.f32 %v2851, %v2873
          %v2876 = vld [vmem:[%s12] sm:$0x1]
          %v2878 = vperm.slane %v2876, 0
          %v2880 = vmul.f32 %v2874, %v2878
          %v2881 = vmul.f32 %v2875, %v2878
          %v2882 = vld [vmem:[%s13] sm:$0x1]
          %v2884 = vperm.slane %v2882, 0
          %v2886 = vadd.f32 %v2880, %v2884
          %v2887 = vadd.f32 %v2881, %v2884
          %2888 = vst [vmem:[%s713] sm:$0xff] %v2886
          %2889 = vst [vmem:[%s713 + $0x8] sm:$0xff] %v2887
        $region116: #{tpu_custom_call.1} parent=75 // pred_fallthru
          _
        %s2890 = sand.u32 %s390, 1
        %s2891 = scalar_lea.sflag [#allocation8], %s2890
        %s2892 = sand.u32 %s390, 1
        %s2893 = smul.addr %s2892, 16
        %s2894 = scalar_lea.vmem [#allocation20], %s2893
        // Predicated region
        $region117: #{tpu_custom_call.1} parent=75 // pred_check
          %p2895 = pneg %p400
        $region118: #{tpu_custom_call.1} parent=75 // pred_check_branch
          %2897 = sbr.rel (%p2895) target = $region120
        $region119: #{tpu_custom_call.1} parent=75 // pred_region
          %s2898 = smul.u32 2, %s45
          %2900 = vsyncadd %s2891, 0
          %s2901 = smul.addr %s44, 2
          %s2902 = sadd.s32 %s2898, %s2901
          %s2903 = smul.addr %s2902, 8
          %s2904 = scalar_lea.hbm %s14, %s2903
          %s2905 = sshll.u32 %s2894, 4
          %s2906 = int_to_ptr.vmem [resolvable:$true] %s2905
          %s2907 = sshll.u32 %s2904, 4
          %s2908 = int_to_ptr.hbm [resolvable:$true] %s2907
          %2913 = dma.vmem_to_hbm [thread:$0]  %s2906, 256, %s2908, %s2891, 128, 128, 8
        $region120: #{tpu_custom_call.1} parent=75 // pred_fallthru
          _
      $region76: #{tpu_custom_call.1} parent=5 // pred_fallthru
        _
      %p2914 = scmp.le.s32.totalorder 2, %s34
      // Predicated region
      $region121: #{tpu_custom_call.1} parent=5 // pred_check
        %p2915 = pneg %p2914
      $region122: #{tpu_custom_call.1} parent=5 // pred_check_branch
        %2917 = sbr.rel (%p2915) target = $region124
      $region123: #{tpu_custom_call.1} parent=5 // pred_region
        %s2918 = ssub.s32 %s34, 2
        // Predicated region
        $region125: #{tpu_custom_call.1} parent=123 // pred_check
          %p2919 = pneg %p406
        $region126: #{tpu_custom_call.1} parent=123 // pred_check_branch
          %2921 = sbr.rel (%p2919) target = $region128
        $region127: #{tpu_custom_call.1} parent=123 // pred_region
          %s2922 = sand.u32 %s391, 1
          %s2923 = scalar_lea.sflag [#allocation8], %s2922
          %s2924 = sand.u32 %s391, 1
          %s2925 = smul.addr %s2924, 16
          %s2926 = scalar_lea.vmem [#allocation20], %s2925
          %2928 = dma.done %s2923, 256
        $region128: #{tpu_custom_call.1} parent=123 // pred_fallthru
          _
      $region124: #{tpu_custom_call.1} parent=5 // pred_fallthru
        _
    $region6: #{tpu_custom_call.1} parent=1 // loop_footer
      %s38 = sadd.s32 1, %s34
    $region7: #{tpu_custom_call.1} parent=1 // loop_footer_branch
      %33 = sbr.rel target = $region3
    $region8: #{tpu_custom_call.1} parent=1 // loop_exit
      _
    %2929 = vsyncpa [#allocation7], 1
    %s2930 = scalar_lea.sflag [#allocation7], 1
    %2931 = vsyncpa %s2930, 1
    %2932 = vsyncpa [#allocation10], 1
    %s2933 = scalar_lea.sflag [#allocation10], 1
    %2934 = vsyncpa %s2933, 1
    %2935 = vsyncpa [#allocation13], 1
    %s2936 = scalar_lea.sflag [#allocation13], 1
    %2937 = vsyncpa %s2936, 1
    %2938 = vsyncpa [#allocation16], 1
    %2939 = vsyncpa [#allocation19], 1
    %2940 = vsyncpa [#allocation8], 1
    %s2941 = scalar_lea.sflag [#allocation8], 1
    %2942 = vsyncpa %s2941, 1

</llo_original>
